<compile_context>
chip_gen: v7x
topology: tpu7x:2x2x1
jax: 0.10.0
libtpu: 0.0.40
codegen_flags: <defaults>
</compile_context>

<pallas_src>
import functools

import jax
import jax.numpy as jnp
from jax.experimental import pallas as pl
from jax.experimental.pallas import tpu as pltpu

D = 12      # input_size
H = 256     # hidden_size
NCLS = 5    # fc output features


def lstm_kernel(T, B, x_ref, wih_ref, whh_ref, b_ref, wfc_ref, bfc_ref, out_ref):
    # ---- One-shot input projection for all time steps (no recurrence) ----
    # (T*B, D) @ (D, 4H) + (1, 4H) -> (T*B, 4H), f32.
    xproj = (jnp.dot(x_ref[...], wih_ref[...],
                     preferred_element_type=jnp.float32)
             + b_ref[...])

    # Recurrent weights: loaded once, held resident across all steps (bf16).
    whh = whh_ref[...]                                   # (H, 4H) bf16

    h = jnp.zeros((B, H), jnp.float32)
    c = jnp.zeros((B, H), jnp.float32)

    # T is static and small -> fully unroll the recurrence so the scheduler
    # sees the whole dependency chain; every slice below is static.
    for t in range(T):
        gates = xproj[t * B:(t + 1) * B, :] + jnp.dot(
            h.astype(jnp.bfloat16), whh, preferred_element_type=jnp.float32)

        # Gates were permuted host-side to [i, f, o, g]:
        #   one fused sigmoid over the first 3H lanes, one tanh over the rest.
        s = jax.nn.sigmoid(gates[:, :3 * H])
        i_g = s[:, 0 * H:1 * H]
        f_g = s[:, 1 * H:2 * H]
        o_g = s[:, 2 * H:3 * H]
        g_g = jnp.tanh(gates[:, 3 * H:])

        c = f_g * c + i_g * g_g
        h = o_g * jnp.tanh(c)

    # fc(out[:, -1, :])
    out_ref[...] = (jnp.dot(h, wfc_ref[...],
                            preferred_element_type=jnp.float32)
                    + bfc_ref[...])


def _reorder_gates(w):
    """Permute PyTorch LSTM gate blocks [i, f, g, o] -> [i, f, o, g] (axis 0)."""
    i, f, g, o = jnp.split(w, 4, axis=0)
    return jnp.concatenate([i, f, o, g], axis=0)


@jax.jit
def lstm_forward(x, w_ih, w_hh, b_ih, b_hh, w_fc, b_fc):
    B, T, _ = x.shape

    # Time-major, flattened so the input projection is one lane-dense matmul.
    x_flat = jnp.transpose(x, (1, 0, 2)).reshape(T * B, D)      # (T*B, D)

    wih_t = _reorder_gates(w_ih).T                               # (D, 4H) f32
    whh_t = _reorder_gates(w_hh).T.astype(jnp.bfloat16)          # (H, 4H) bf16
    b = _reorder_gates(b_ih + b_hh)[None, :]                     # (1, 4H) f32
    wfc_t = w_fc.T                                               # (H, NCLS)
    bfc = b_fc[None, :]                                          # (1, NCLS)

    vmem_spec = lambda: pl.BlockSpec(memory_space=pltpu.MemorySpace.VMEM)

    # Single invocation (no grid): everything fits comfortably in VMEM
    # (W_hh bf16 = 512 KiB dominates; total resident < 1 MiB).
    return pl.pallas_call(
        functools.partial(lstm_kernel, T, B),
        out_shape=jax.ShapeDtypeStruct((B, NCLS), jnp.float32),
        in_specs=[vmem_spec() for _ in range(6)],
        out_specs=vmem_spec(),
    )(x_flat, wih_t, whh_t, b, wfc_t, bfc)


def reference_forward(x, w_ih, w_hh, b_ih, b_hh, w_fc, b_fc):
    """Pure-JAX f32 reference replicating PyTorch nn.LSTM + Linear semantics."""
    B = x.shape[0]
    h0 = jnp.zeros((B, H), jnp.float32)
    c0 = jnp.zeros((B, H), jnp.float32)

    def step(carry, x_t):
        h, c = carry
        gates = x_t @ w_ih.T + b_ih + h @ w_hh.T + b_hh
        i_g = jax.nn.sigmoid(gates[:, 0:H])
        f_g = jax.nn.sigmoid(gates[:, H:2 * H])
        g_g = jnp.tanh(gates[:, 2 * H:3 * H])
        o_g = jax.nn.sigmoid(gates[:, 3 * H:4 * H])
        c_new = f_g * c + i_g * g_g
        h_new = o_g * jnp.tanh(c_new)
        return (h_new, c_new), None

    (h_last, _), _ = jax.lax.scan(step, (h0, c0), jnp.transpose(x, (1, 0, 2)))
    return h_last @ w_fc.T + b_fc


if __name__ == "__main__":
    key = jax.random.PRNGKey(0)
    kx, k1, k2, k3, k4, k5, k6 = jax.random.split(key, 7)

    B, T = 2, 8
    x = jax.random.normal(kx, (B, T, D), dtype=jnp.float32)

    # PyTorch default init: uniform(-1/sqrt(H), 1/sqrt(H))
    bound = 1.0 / jnp.sqrt(jnp.float32(H))
    w_ih = jax.random.uniform(k1, (4 * H, D), jnp.float32, -bound, bound)
    w_hh = jax.random.uniform(k2, (4 * H, H), jnp.float32, -bound, bound)
    b_ih = jax.random.uniform(k3, (4 * H,), jnp.float32, -bound, bound)
    b_hh = jax.random.uniform(k4, (4 * H,), jnp.float32, -bound, bound)
    w_fc = jax.random.uniform(k5, (NCLS, H), jnp.float32, -bound, bound)
    b_fc = jax.random.uniform(k6, (NCLS,), jnp.float32, -bound, bound)

    out = lstm_forward(x, w_ih, w_hh, b_ih, b_hh, w_fc, b_fc)
    out = jax.block_until_ready(out)

    ref = reference_forward(x, w_ih, w_hh, b_ih, b_hh, w_fc, b_fc)
    assert out.shape == (B, NCLS), out.shape
    # Tolerance accounts for bf16 recurrent weights (f32 accumulation) vs the
    # all-f32 reference.
    assert jnp.allclose(out, ref, rtol=1e-2, atol=1e-2), (out, ref)

    print("KERNEL_OK")
</pallas_src>

<mosaic_0001>
module attributes {stable_mosaic.version = 11 : i64} {
  func.func @lstm_kernel(%arg0: memref<16x12xf32, #tpu.memory_space<vmem>>, %arg1: memref<12x1024xf32, #tpu.memory_space<vmem>>, %arg2: memref<256x1024xbf16, #tpu.memory_space<vmem>>, %arg3: memref<1x1024xf32, #tpu.memory_space<vmem>>, %arg4: memref<256x5xf32, #tpu.memory_space<vmem>>, %arg5: memref<1x5xf32, #tpu.memory_space<vmem>>, %arg6: memref<2x5xf32, #tpu.memory_space<vmem>>) attributes {dimension_semantics = [], scalar_prefetch = 0 : i64, scratch_operands = 0 : i64, tpu.core_type = #tpu.core_type<tc>} {
    %c0 = arith.constant 0 : index
    %c0_0 = arith.constant 0 : index
    %0 = vector.load %arg0[%c0, %c0_0] : memref<16x12xf32, #tpu.memory_space<vmem>>, vector<16x12xf32>
    %c0_1 = arith.constant 0 : index
    %c0_2 = arith.constant 0 : index
    %1 = vector.load %arg1[%c0_1, %c0_2] : memref<12x1024xf32, #tpu.memory_space<vmem>>, vector<12x1024xf32>
    %cst = arith.constant dense<0.000000e+00> : vector<16x1024xf32>
    %2 = tpu.matmul %0, %1, %cst {dimension_numbers = #tpu.dot_dimension_numbers<[1], [0], [0], [1], [0, 0, 1, 1], [], []>} : vector<16x12xf32>, vector<12x1024xf32>, vector<16x1024xf32> -> vector<16x1024xf32>
    %c0_3 = arith.constant 0 : index
    %c0_4 = arith.constant 0 : index
    %3 = vector.load %arg3[%c0_3, %c0_4] : memref<1x1024xf32, #tpu.memory_space<vmem>>, vector<1x1024xf32>
    %4 = vector.broadcast %3 : vector<1x1024xf32> to vector<16x1024xf32>
    %5 = arith.addf %2, %4 : vector<16x1024xf32>
    %c0_5 = arith.constant 0 : index
    %c0_6 = arith.constant 0 : index
    %6 = vector.load %arg2[%c0_5, %c0_6] : memref<256x1024xbf16, #tpu.memory_space<vmem>>, vector<256x1024xbf16>
    %cst_7 = arith.constant 0.000000e+00 : f32
    %7 = vector.broadcast %cst_7 : f32 to vector<2x256xf32>
    %cst_8 = arith.constant 0.000000e+00 : f32
    %8 = vector.broadcast %cst_8 : f32 to vector<2x256xf32>
    %9 = vector.extract_strided_slice %5 {offsets = [0, 0], sizes = [2, 1024], strides = [1, 1]} : vector<16x1024xf32> to vector<2x1024xf32>
    %10 = arith.truncf %7 : vector<2x256xf32> to vector<2x256xbf16>
    %cst_9 = arith.constant dense<0.000000e+00> : vector<2x1024xf32>
    %11 = tpu.matmul %10, %6, %cst_9 {dimension_numbers = #tpu.dot_dimension_numbers<[1], [0], [0], [1], [0, 0, 1, 1], [], []>} : vector<2x256xbf16>, vector<256x1024xbf16>, vector<2x1024xf32> -> vector<2x1024xf32>
    %12 = arith.addf %9, %11 : vector<2x1024xf32>
    %13 = vector.extract_strided_slice %12 {offsets = [0, 0], sizes = [2, 768], strides = [1, 1]} : vector<2x1024xf32> to vector<2x768xf32>
    %14 = arith.negf %13 : vector<2x768xf32>
    %15 = math.exp %14 : vector<2x768xf32>
    %cst_10 = arith.constant 1.000000e+00 : f32
    %16 = vector.broadcast %cst_10 : f32 to vector<2x768xf32>
    %17 = arith.addf %16, %15 : vector<2x768xf32>
    %18 = arith.divf %16, %17 : vector<2x768xf32>
    %19 = vector.extract_strided_slice %18 {offsets = [0, 0], sizes = [2, 256], strides = [1, 1]} : vector<2x768xf32> to vector<2x256xf32>
    %20 = vector.extract_strided_slice %18 {offsets = [0, 256], sizes = [2, 256], strides = [1, 1]} : vector<2x768xf32> to vector<2x256xf32>
    %21 = vector.extract_strided_slice %18 {offsets = [0, 512], sizes = [2, 256], strides = [1, 1]} : vector<2x768xf32> to vector<2x256xf32>
    %22 = vector.extract_strided_slice %12 {offsets = [0, 768], sizes = [2, 256], strides = [1, 1]} : vector<2x1024xf32> to vector<2x256xf32>
    %23 = math.tanh %22 : vector<2x256xf32>
    %24 = arith.mulf %20, %8 : vector<2x256xf32>
    %25 = arith.mulf %19, %23 : vector<2x256xf32>
    %26 = arith.addf %24, %25 : vector<2x256xf32>
    %27 = math.tanh %26 : vector<2x256xf32>
    %28 = arith.mulf %21, %27 : vector<2x256xf32>
    %29 = vector.extract_strided_slice %5 {offsets = [2, 0], sizes = [2, 1024], strides = [1, 1]} : vector<16x1024xf32> to vector<2x1024xf32>
    %30 = arith.truncf %28 : vector<2x256xf32> to vector<2x256xbf16>
    %cst_11 = arith.constant dense<0.000000e+00> : vector<2x1024xf32>
    %31 = tpu.matmul %30, %6, %cst_11 {dimension_numbers = #tpu.dot_dimension_numbers<[1], [0], [0], [1], [0, 0, 1, 1], [], []>} : vector<2x256xbf16>, vector<256x1024xbf16>, vector<2x1024xf32> -> vector<2x1024xf32>
    %32 = arith.addf %29, %31 : vector<2x1024xf32>
    %33 = vector.extract_strided_slice %32 {offsets = [0, 0], sizes = [2, 768], strides = [1, 1]} : vector<2x1024xf32> to vector<2x768xf32>
    %34 = arith.negf %33 : vector<2x768xf32>
    %35 = math.exp %34 : vector<2x768xf32>
    %cst_12 = arith.constant 1.000000e+00 : f32
    %36 = vector.broadcast %cst_12 : f32 to vector<2x768xf32>
    %37 = arith.addf %36, %35 : vector<2x768xf32>
    %38 = arith.divf %36, %37 : vector<2x768xf32>
    %39 = vector.extract_strided_slice %38 {offsets = [0, 0], sizes = [2, 256], strides = [1, 1]} : vector<2x768xf32> to vector<2x256xf32>
    %40 = vector.extract_strided_slice %38 {offsets = [0, 256], sizes = [2, 256], strides = [1, 1]} : vector<2x768xf32> to vector<2x256xf32>
    %41 = vector.extract_strided_slice %38 {offsets = [0, 512], sizes = [2, 256], strides = [1, 1]} : vector<2x768xf32> to vector<2x256xf32>
    %42 = vector.extract_strided_slice %32 {offsets = [0, 768], sizes = [2, 256], strides = [1, 1]} : vector<2x1024xf32> to vector<2x256xf32>
    %43 = math.tanh %42 : vector<2x256xf32>
    %44 = arith.mulf %40, %26 : vector<2x256xf32>
    %45 = arith.mulf %39, %43 : vector<2x256xf32>
    %46 = arith.addf %44, %45 : vector<2x256xf32>
    %47 = math.tanh %46 : vector<2x256xf32>
    %48 = arith.mulf %41, %47 : vector<2x256xf32>
    %49 = vector.extract_strided_slice %5 {offsets = [4, 0], sizes = [2, 1024], strides = [1, 1]} : vector<16x1024xf32> to vector<2x1024xf32>
    %50 = arith.truncf %48 : vector<2x256xf32> to vector<2x256xbf16>
    %cst_13 = arith.constant dense<0.000000e+00> : vector<2x1024xf32>
    %51 = tpu.matmul %50, %6, %cst_13 {dimension_numbers = #tpu.dot_dimension_numbers<[1], [0], [0], [1], [0, 0, 1, 1], [], []>} : vector<2x256xbf16>, vector<256x1024xbf16>, vector<2x1024xf32> -> vector<2x1024xf32>
    %52 = arith.addf %49, %51 : vector<2x1024xf32>
    %53 = vector.extract_strided_slice %52 {offsets = [0, 0], sizes = [2, 768], strides = [1, 1]} : vector<2x1024xf32> to vector<2x768xf32>
    %54 = arith.negf %53 : vector<2x768xf32>
    %55 = math.exp %54 : vector<2x768xf32>
    %cst_14 = arith.constant 1.000000e+00 : f32
    %56 = vector.broadcast %cst_14 : f32 to vector<2x768xf32>
    %57 = arith.addf %56, %55 : vector<2x768xf32>
    %58 = arith.divf %56, %57 : vector<2x768xf32>
    %59 = vector.extract_strided_slice %58 {offsets = [0, 0], sizes = [2, 256], strides = [1, 1]} : vector<2x768xf32> to vector<2x256xf32>
    %60 = vector.extract_strided_slice %58 {offsets = [0, 256], sizes = [2, 256], strides = [1, 1]} : vector<2x768xf32> to vector<2x256xf32>
    %61 = vector.extract_strided_slice %58 {offsets = [0, 512], sizes = [2, 256], strides = [1, 1]} : vector<2x768xf32> to vector<2x256xf32>
    %62 = vector.extract_strided_slice %52 {offsets = [0, 768], sizes = [2, 256], strides = [1, 1]} : vector<2x1024xf32> to vector<2x256xf32>
    %63 = math.tanh %62 : vector<2x256xf32>
    %64 = arith.mulf %60, %46 : vector<2x256xf32>
    %65 = arith.mulf %59, %63 : vector<2x256xf32>
    %66 = arith.addf %64, %65 : vector<2x256xf32>
    %67 = math.tanh %66 : vector<2x256xf32>
    %68 = arith.mulf %61, %67 : vector<2x256xf32>
    %69 = vector.extract_strided_slice %5 {offsets = [6, 0], sizes = [2, 1024], strides = [1, 1]} : vector<16x1024xf32> to vector<2x1024xf32>
    %70 = arith.truncf %68 : vector<2x256xf32> to vector<2x256xbf16>
    %cst_15 = arith.constant dense<0.000000e+00> : vector<2x1024xf32>
    %71 = tpu.matmul %70, %6, %cst_15 {dimension_numbers = #tpu.dot_dimension_numbers<[1], [0], [0], [1], [0, 0, 1, 1], [], []>} : vector<2x256xbf16>, vector<256x1024xbf16>, vector<2x1024xf32> -> vector<2x1024xf32>
    %72 = arith.addf %69, %71 : vector<2x1024xf32>
    %73 = vector.extract_strided_slice %72 {offsets = [0, 0], sizes = [2, 768], strides = [1, 1]} : vector<2x1024xf32> to vector<2x768xf32>
    %74 = arith.negf %73 : vector<2x768xf32>
    %75 = math.exp %74 : vector<2x768xf32>
    %cst_16 = arith.constant 1.000000e+00 : f32
    %76 = vector.broadcast %cst_16 : f32 to vector<2x768xf32>
    %77 = arith.addf %76, %75 : vector<2x768xf32>
    %78 = arith.divf %76, %77 : vector<2x768xf32>
    %79 = vector.extract_strided_slice %78 {offsets = [0, 0], sizes = [2, 256], strides = [1, 1]} : vector<2x768xf32> to vector<2x256xf32>
    %80 = vector.extract_strided_slice %78 {offsets = [0, 256], sizes = [2, 256], strides = [1, 1]} : vector<2x768xf32> to vector<2x256xf32>
    %81 = vector.extract_strided_slice %78 {offsets = [0, 512], sizes = [2, 256], strides = [1, 1]} : vector<2x768xf32> to vector<2x256xf32>
    %82 = vector.extract_strided_slice %72 {offsets = [0, 768], sizes = [2, 256], strides = [1, 1]} : vector<2x1024xf32> to vector<2x256xf32>
    %83 = math.tanh %82 : vector<2x256xf32>
    %84 = arith.mulf %80, %66 : vector<2x256xf32>
    %85 = arith.mulf %79, %83 : vector<2x256xf32>
    %86 = arith.addf %84, %85 : vector<2x256xf32>
    %87 = math.tanh %86 : vector<2x256xf32>
    %88 = arith.mulf %81, %87 : vector<2x256xf32>
    %89 = vector.extract_strided_slice %5 {offsets = [8, 0], sizes = [2, 1024], strides = [1, 1]} : vector<16x1024xf32> to vector<2x1024xf32>
    %90 = arith.truncf %88 : vector<2x256xf32> to vector<2x256xbf16>
    %cst_17 = arith.constant dense<0.000000e+00> : vector<2x1024xf32>
    %91 = tpu.matmul %90, %6, %cst_17 {dimension_numbers = #tpu.dot_dimension_numbers<[1], [0], [0], [1], [0, 0, 1, 1], [], []>} : vector<2x256xbf16>, vector<256x1024xbf16>, vector<2x1024xf32> -> vector<2x1024xf32>
    %92 = arith.addf %89, %91 : vector<2x1024xf32>
    %93 = vector.extract_strided_slice %92 {offsets = [0, 0], sizes = [2, 768], strides = [1, 1]} : vector<2x1024xf32> to vector<2x768xf32>
    %94 = arith.negf %93 : vector<2x768xf32>
    %95 = math.exp %94 : vector<2x768xf32>
    %cst_18 = arith.constant 1.000000e+00 : f32
    %96 = vector.broadcast %cst_18 : f32 to vector<2x768xf32>
    %97 = arith.addf %96, %95 : vector<2x768xf32>
    %98 = arith.divf %96, %97 : vector<2x768xf32>
    %99 = vector.extract_strided_slice %98 {offsets = [0, 0], sizes = [2, 256], strides = [1, 1]} : vector<2x768xf32> to vector<2x256xf32>
    %100 = vector.extract_strided_slice %98 {offsets = [0, 256], sizes = [2, 256], strides = [1, 1]} : vector<2x768xf32> to vector<2x256xf32>
    %101 = vector.extract_strided_slice %98 {offsets = [0, 512], sizes = [2, 256], strides = [1, 1]} : vector<2x768xf32> to vector<2x256xf32>
    %102 = vector.extract_strided_slice %92 {offsets = [0, 768], sizes = [2, 256], strides = [1, 1]} : vector<2x1024xf32> to vector<2x256xf32>
    %103 = math.tanh %102 : vector<2x256xf32>
    %104 = arith.mulf %100, %86 : vector<2x256xf32>
    %105 = arith.mulf %99, %103 : vector<2x256xf32>
    %106 = arith.addf %104, %105 : vector<2x256xf32>
    %107 = math.tanh %106 : vector<2x256xf32>
    %108 = arith.mulf %101, %107 : vector<2x256xf32>
    %109 = vector.extract_strided_slice %5 {offsets = [10, 0], sizes = [2, 1024], strides = [1, 1]} : vector<16x1024xf32> to vector<2x1024xf32>
    %110 = arith.truncf %108 : vector<2x256xf32> to vector<2x256xbf16>
    %cst_19 = arith.constant dense<0.000000e+00> : vector<2x1024xf32>
    %111 = tpu.matmul %110, %6, %cst_19 {dimension_numbers = #tpu.dot_dimension_numbers<[1], [0], [0], [1], [0, 0, 1, 1], [], []>} : vector<2x256xbf16>, vector<256x1024xbf16>, vector<2x1024xf32> -> vector<2x1024xf32>
    %112 = arith.addf %109, %111 : vector<2x1024xf32>
    %113 = vector.extract_strided_slice %112 {offsets = [0, 0], sizes = [2, 768], strides = [1, 1]} : vector<2x1024xf32> to vector<2x768xf32>
    %114 = arith.negf %113 : vector<2x768xf32>
    %115 = math.exp %114 : vector<2x768xf32>
    %cst_20 = arith.constant 1.000000e+00 : f32
    %116 = vector.broadcast %cst_20 : f32 to vector<2x768xf32>
    %117 = arith.addf %116, %115 : vector<2x768xf32>
    %118 = arith.divf %116, %117 : vector<2x768xf32>
    %119 = vector.extract_strided_slice %118 {offsets = [0, 0], sizes = [2, 256], strides = [1, 1]} : vector<2x768xf32> to vector<2x256xf32>
    %120 = vector.extract_strided_slice %118 {offsets = [0, 256], sizes = [2, 256], strides = [1, 1]} : vector<2x768xf32> to vector<2x256xf32>
    %121 = vector.extract_strided_slice %118 {offsets = [0, 512], sizes = [2, 256], strides = [1, 1]} : vector<2x768xf32> to vector<2x256xf32>
    %122 = vector.extract_strided_slice %112 {offsets = [0, 768], sizes = [2, 256], strides = [1, 1]} : vector<2x1024xf32> to vector<2x256xf32>
    %123 = math.tanh %122 : vector<2x256xf32>
    %124 = arith.mulf %120, %106 : vector<2x256xf32>
    %125 = arith.mulf %119, %123 : vector<2x256xf32>
    %126 = arith.addf %124, %125 : vector<2x256xf32>
    %127 = math.tanh %126 : vector<2x256xf32>
    %128 = arith.mulf %121, %127 : vector<2x256xf32>
    %129 = vector.extract_strided_slice %5 {offsets = [12, 0], sizes = [2, 1024], strides = [1, 1]} : vector<16x1024xf32> to vector<2x1024xf32>
    %130 = arith.truncf %128 : vector<2x256xf32> to vector<2x256xbf16>
    %cst_21 = arith.constant dense<0.000000e+00> : vector<2x1024xf32>
    %131 = tpu.matmul %130, %6, %cst_21 {dimension_numbers = #tpu.dot_dimension_numbers<[1], [0], [0], [1], [0, 0, 1, 1], [], []>} : vector<2x256xbf16>, vector<256x1024xbf16>, vector<2x1024xf32> -> vector<2x1024xf32>
    %132 = arith.addf %129, %131 : vector<2x1024xf32>
    %133 = vector.extract_strided_slice %132 {offsets = [0, 0], sizes = [2, 768], strides = [1, 1]} : vector<2x1024xf32> to vector<2x768xf32>
    %134 = arith.negf %133 : vector<2x768xf32>
    %135 = math.exp %134 : vector<2x768xf32>
    %cst_22 = arith.constant 1.000000e+00 : f32
    %136 = vector.broadcast %cst_22 : f32 to vector<2x768xf32>
    %137 = arith.addf %136, %135 : vector<2x768xf32>
    %138 = arith.divf %136, %137 : vector<2x768xf32>
    %139 = vector.extract_strided_slice %138 {offsets = [0, 0], sizes = [2, 256], strides = [1, 1]} : vector<2x768xf32> to vector<2x256xf32>
    %140 = vector.extract_strided_slice %138 {offsets = [0, 256], sizes = [2, 256], strides = [1, 1]} : vector<2x768xf32> to vector<2x256xf32>
    %141 = vector.extract_strided_slice %138 {offsets = [0, 512], sizes = [2, 256], strides = [1, 1]} : vector<2x768xf32> to vector<2x256xf32>
    %142 = vector.extract_strided_slice %132 {offsets = [0, 768], sizes = [2, 256], strides = [1, 1]} : vector<2x1024xf32> to vector<2x256xf32>
    %143 = math.tanh %142 : vector<2x256xf32>
    %144 = arith.mulf %140, %126 : vector<2x256xf32>
    %145 = arith.mulf %139, %143 : vector<2x256xf32>
    %146 = arith.addf %144, %145 : vector<2x256xf32>
    %147 = math.tanh %146 : vector<2x256xf32>
    %148 = arith.mulf %141, %147 : vector<2x256xf32>
    %149 = vector.extract_strided_slice %5 {offsets = [14, 0], sizes = [2, 1024], strides = [1, 1]} : vector<16x1024xf32> to vector<2x1024xf32>
    %150 = arith.truncf %148 : vector<2x256xf32> to vector<2x256xbf16>
    %cst_23 = arith.constant dense<0.000000e+00> : vector<2x1024xf32>
    %151 = tpu.matmul %150, %6, %cst_23 {dimension_numbers = #tpu.dot_dimension_numbers<[1], [0], [0], [1], [0, 0, 1, 1], [], []>} : vector<2x256xbf16>, vector<256x1024xbf16>, vector<2x1024xf32> -> vector<2x1024xf32>
    %152 = arith.addf %149, %151 : vector<2x1024xf32>
    %153 = vector.extract_strided_slice %152 {offsets = [0, 0], sizes = [2, 768], strides = [1, 1]} : vector<2x1024xf32> to vector<2x768xf32>
    %154 = arith.negf %153 : vector<2x768xf32>
    %155 = math.exp %154 : vector<2x768xf32>
    %cst_24 = arith.constant 1.000000e+00 : f32
    %156 = vector.broadcast %cst_24 : f32 to vector<2x768xf32>
    %157 = arith.addf %156, %155 : vector<2x768xf32>
    %158 = arith.divf %156, %157 : vector<2x768xf32>
    %159 = vector.extract_strided_slice %158 {offsets = [0, 0], sizes = [2, 256], strides = [1, 1]} : vector<2x768xf32> to vector<2x256xf32>
    %160 = vector.extract_strided_slice %158 {offsets = [0, 256], sizes = [2, 256], strides = [1, 1]} : vector<2x768xf32> to vector<2x256xf32>
    %161 = vector.extract_strided_slice %158 {offsets = [0, 512], sizes = [2, 256], strides = [1, 1]} : vector<2x768xf32> to vector<2x256xf32>
    %162 = vector.extract_strided_slice %152 {offsets = [0, 768], sizes = [2, 256], strides = [1, 1]} : vector<2x1024xf32> to vector<2x256xf32>
    %163 = math.tanh %162 : vector<2x256xf32>
    %164 = arith.mulf %160, %146 : vector<2x256xf32>
    %165 = arith.mulf %159, %163 : vector<2x256xf32>
    %166 = arith.addf %164, %165 : vector<2x256xf32>
    %167 = math.tanh %166 : vector<2x256xf32>
    %168 = arith.mulf %161, %167 : vector<2x256xf32>
    %c0_25 = arith.constant 0 : index
    %c0_26 = arith.constant 0 : index
    %169 = vector.load %arg4[%c0_25, %c0_26] : memref<256x5xf32, #tpu.memory_space<vmem>>, vector<256x5xf32>
    %cst_27 = arith.constant dense<0.000000e+00> : vector<2x5xf32>
    %170 = tpu.matmul %168, %169, %cst_27 {dimension_numbers = #tpu.dot_dimension_numbers<[1], [0], [0], [1], [0, 0, 1, 1], [], []>} : vector<2x256xf32>, vector<256x5xf32>, vector<2x5xf32> -> vector<2x5xf32>
    %c0_28 = arith.constant 0 : index
    %c0_29 = arith.constant 0 : index
    %171 = vector.load %arg5[%c0_28, %c0_29] : memref<1x5xf32, #tpu.memory_space<vmem>>, vector<1x5xf32>
    %172 = vector.broadcast %171 : vector<1x5xf32> to vector<2x5xf32>
    %173 = arith.addf %170, %172 : vector<2x5xf32>
    %c0_30 = arith.constant 0 : index
    %c0_31 = arith.constant 0 : index
    %174 = vector.load %arg6[%c0_30, %c0_31] : memref<2x5xf32, #tpu.memory_space<vmem>>, vector<2x5xf32>
    tpu.vector_store %arg6[%c0_30, %c0_31], %173 {strides = array<i32>} : memref<2x5xf32, #tpu.memory_space<vmem>>, vector<2x5xf32>,
    return
  }
}

</mosaic_0001>

<llo_original>
// kernel: lstm_forward.1
$region0: #{lstm_forward.1}
  #allocation0 [shape = 'u32[]', space=smem, size = 0x4, offset = 0x4, fixed_abs, tag = 'smem constant byte address 0x4 - core index']
  #allocation1 [shape = 'u32[144,128]{1,0:T(1,128)}', space=vmem, size = 0x12000, scoped, tag = 'internal scratch']
  %s0 = inlined_call_operand.vmem [shape: f32[16,12], index: 0, kind: input, shape index: {}]
  %s1 = inlined_call_operand.vmem [shape: f32[12,1024], index: 1, kind: input, shape index: {}]
  %s2 = inlined_call_operand.vmem [shape: bf16[256,1024], index: 2, kind: input, shape index: {}]
  %s3 = inlined_call_operand.vmem [shape: f32[1,1024], index: 3, kind: input, shape index: {}]
  %s4 = inlined_call_operand.vmem [shape: f32[256,5], index: 4, kind: input, shape index: {}]
  %s5 = inlined_call_operand.vmem [shape: f32[1,5], index: 5, kind: input, shape index: {}]
  %s6 = inlined_call_operand.hbm [shape: f32[2,5], index: 6, kind: output, shape index: {}]
  %s7 = sld [smem:[#allocation0]]
  $region34: #{lstm_forward.1} parent=0
    _
  %s9 = ssub.s32 1, %s7
  %s10 = scalar_select 0, %s9, %s7
  $region1: #{lstm_forward.1} parent=0
    #allocation2 [shape = 'u8[1024]{0}', space=vmem, size = 0x400, scoped, tag = 'output window, operand 0, single buffered']
    #allocation3 [shape = 's32[1]{0}', space=sflag, size = 0x4, scoped, tag = 'scoped memory for lstm_forward.1']
    %11 = vsyncpa [#allocation3], 0
    // Predicated region
    $region2: #{lstm_forward.1} parent=1 // pred_check
      _
    $region3: #{lstm_forward.1} parent=1 // pred_check_branch
      %13 = sbr.rel (0) target = $region5
    $region4: #{lstm_forward.1} parent=1 // pred_region
      _
    $region5: #{lstm_forward.1} parent=1 // pred_fallthru
      _
    // Predicated region
    $region6: #{lstm_forward.1} parent=1 // pred_check
      _
    $region7: #{lstm_forward.1} parent=1 // pred_check_branch
      %15 = sbr.rel (0) target = $region9
    $region8: #{lstm_forward.1} parent=1 // pred_region
      _
    $region9: #{lstm_forward.1} parent=1 // pred_fallthru
      _
    // Predicated region
    $region10: #{lstm_forward.1} parent=1 // pred_check
      _
    $region11: #{lstm_forward.1} parent=1 // pred_check_branch
      %17 = sbr.rel (0) target = $region13
    $region12: #{lstm_forward.1} parent=1 // pred_region
      _
    $region13: #{lstm_forward.1} parent=1 // pred_fallthru
      _
    // Predicated region
    $region14: #{lstm_forward.1} parent=1 // pred_check
      _
    $region15: #{lstm_forward.1} parent=1 // pred_check_branch
      %19 = sbr.rel (0) target = $region17
    $region16: #{lstm_forward.1} parent=1 // pred_region
      _
    $region17: #{lstm_forward.1} parent=1 // pred_fallthru
      _
    // Predicated region
    $region18: #{lstm_forward.1} parent=1 // pred_check
      _
    $region19: #{lstm_forward.1} parent=1 // pred_check_branch
      %21 = sbr.rel (0) target = $region21
    $region20: #{lstm_forward.1} parent=1 // pred_region
      _
    $region21: #{lstm_forward.1} parent=1 // pred_fallthru
      _
    // Predicated region
    $region22: #{lstm_forward.1} parent=1 // pred_check
      _
    $region23: #{lstm_forward.1} parent=1 // pred_check_branch
      %23 = sbr.rel (0) target = $region25
    $region24: #{lstm_forward.1} parent=1 // pred_region
      _
    $region25: #{lstm_forward.1} parent=1 // pred_fallthru
      _
    %v25 = vld [vmem:[%s0] sm:$0xff]
    %v26 = vld [vmem:[%s0 + $0x8] sm:$0xff]
    %v27 = vld [vmem:[%s1] sm:$0xff]
    %v28 = vld [vmem:[%s1 + $0x8] sm:$0xff]
    %v29 = vld [vmem:[%s1 + $0x10] sm:$0xff]
    %v30 = vld [vmem:[%s1 + $0x18] sm:$0xff]
    %v31 = vld [vmem:[%s1 + $0x20] sm:$0xff]
    %v32 = vld [vmem:[%s1 + $0x28] sm:$0xff]
    %v33 = vld [vmem:[%s1 + $0x30] sm:$0xff]
    %v34 = vld [vmem:[%s1 + $0x38] sm:$0xff]
    %v35 = vld [vmem:[%s1 + $0x40] sm:$0xf]
    %v36 = vld [vmem:[%s1 + $0x48] sm:$0xf]
    %v37 = vld [vmem:[%s1 + $0x50] sm:$0xf]
    %v38 = vld [vmem:[%s1 + $0x58] sm:$0xf]
    %v39 = vld [vmem:[%s1 + $0x60] sm:$0xf]
    %v40 = vld [vmem:[%s1 + $0x68] sm:$0xf]
    %v41 = vld [vmem:[%s1 + $0x70] sm:$0xf]
    %v42 = vld [vmem:[%s1 + $0x78] sm:$0xf]
    %v43 = vld [vmem:[%s3] sm:$0xff]
    %v45 = vlaneseq
    %v46 = vshrl.u32 %v45, 7
    %v47 = vsub.s32 0, %v46
    %v48 = vrot.slane %v43, %v47
    %v49 = vlaneseq
    %v50 = vshrl.u32 %v49, 7
    %v51 = vsub.s32 1, %v50
    %v52 = vrot.slane %v43, %v51
    %v53 = vlaneseq
    %v54 = vshrl.u32 %v53, 7
    %v55 = vsub.s32 2, %v54
    %v56 = vrot.slane %v43, %v55
    %v57 = vlaneseq
    %v58 = vshrl.u32 %v57, 7
    %v59 = vsub.s32 3, %v58
    %v60 = vrot.slane %v43, %v59
    %v61 = vlaneseq
    %v62 = vshrl.u32 %v61, 7
    %v63 = vsub.s32 4, %v62
    %v64 = vrot.slane %v43, %v63
    %v65 = vlaneseq
    %v66 = vshrl.u32 %v65, 7
    %v67 = vsub.s32 5, %v66
    %v68 = vrot.slane %v43, %v67
    %v69 = vlaneseq
    %v70 = vshrl.u32 %v69, 7
    %v71 = vsub.s32 6, %v70
    %v72 = vrot.slane %v43, %v71
    %v73 = vlaneseq
    %v74 = vshrl.u32 %v73, 7
    %v75 = vsub.s32 7, %v74
    %v76 = vrot.slane %v43, %v75
    %vm85 = vcmask 97280
    %v87 = vsel %vm85, %v25, 0
    %v90 = vsel %vm85, %v26, 0
    %vm92 = vcmask 1043456
    %v94 = vsel %vm92, %v35, 0
    %v97 = vsel %vm92, %v36, 0
    %v100 = vsel %vm92, %v37, 0
    %v103 = vsel %vm92, %v38, 0
    %v106 = vsel %vm92, %v39, 0
    %v109 = vsel %vm92, %v40, 0
    %v112 = vsel %vm92, %v41, 0
    %v115 = vsel %vm92, %v42, 0
    %117 = vmatprep.subr.mxu0 %v28
    %118 = vmatpush1.msra.mxu0 %v27
    %119 = vmatprep.subr.mxu0 %v97
    %120 = vmatpush1.msra.mxu0 %v94
    %121 = vmatprep.subr.mxu0 0.0
    %122 = vmatpush1.msra.mxu0 0.0
    %123 = vmatprep.subr.mxu0 0.0
    %124 = vmatpush1.msra.mxu0 0.0
    %125 = vmatprep.subr.mxu0 0.0
    %126 = vmatpush1.msra.mxu0 0.0
    %127 = vmatprep.subr.mxu0 0.0
    %128 = vmatpush1.msra.mxu0 0.0
    %129 = vmatprep.subr.mxu0 0.0
    %130 = vmatpush1.msra.mxu0 0.0
    %131 = vmatprep.subr.mxu0 0.0
    %132 = vmatpush1.msra.mxu0 0.0
    %133 = vmatprep.subr.mxu0 0.0
    %134 = vmatpush1.msra.mxu0 0.0
    %135 = vmatprep.subr.mxu0 0.0
    %136 = vmatpush1.msra.mxu0 0.0
    %137 = vmatprep.subr.mxu0 0.0
    %138 = vmatpush1.msra.mxu0 0.0
    %139 = vmatprep.subr.mxu0 0.0
    %140 = vmatpush1.msra.mxu0 0.0
    %141 = vmatprep.subr.mxu0 0.0
    %142 = vmatpush1.msra.mxu0 0.0
    %143 = vmatprep.subr.mxu0 0.0
    %144 = vmatpush1.msra.mxu0 0.0
    %145 = vmatprep.subr.mxu0 0.0
    %146 = vmatpush1.msra.mxu0 0.0
    %147 = vmatprep.subr.mxu0 0.0
    %148 = vmatpush1.msra.mxu0 0.0
    %149 = vmatprep.subr.mxu0 0.0
    %150 = vmatpush1.msra.mxu0 0.0
    %151 = vmatprep.subr.mxu0 0.0
    %152 = vmatpush1.msra.mxu0 0.0
    %153 = vmatprep.subr.mxu0 0.0
    %154 = vmatpush1.msra.mxu0 0.0
    %155 = vmatprep.subr.mxu0 0.0
    %156 = vmatpush1.msra.mxu0 0.0
    %157 = vmatprep.subr.mxu0 0.0
    %158 = vmatpush1.msra.mxu0 0.0
    %159 = vmatprep.subr.mxu0 0.0
    %160 = vmatpush1.msra.mxu0 0.0
    %161 = vmatprep.subr.mxu0 0.0
    %162 = vmatpush1.msra.mxu0 0.0
    %163 = vmatprep.subr.mxu0 0.0
    %164 = vmatpush1.msra.mxu0 0.0
    %165 = vmatprep.subr.mxu0 0.0
    %166 = vmatpush1.msra.mxu0 0.0
    %167 = vmatprep.subr.mxu0 0.0
    %168 = vmatpush1.msra.mxu0 0.0
    %169 = vmatprep.subr.mxu0 0.0
    %170 = vmatpush1.msra.mxu0 0.0
    %171 = vmatprep.subr.mxu0 0.0
    %172 = vmatpush1.msra.mxu0 0.0
    %173 = vmatprep.subr.mxu0 0.0
    %174 = vmatpush1.msra.mxu0 0.0
    %175 = vmatprep.subr.mxu0 0.0
    %176 = vmatpush1.msra.mxu0 0.0
    %177 = vmatprep.subr.mxu0 0.0
    %178 = vmatpush1.msra.mxu0 0.0
    %179 = vmatprep.subr.mxu0 0.0
    %180 = vmatpush1.msra.mxu0 0.0
    %181 = vmatprep.mubr.f32.mxu0 0.0
    %182 = vmatmul.mubr.f32.gmra.mrb[0].mxu0 %v87
    %v183 = vpop.f32.mrb[0].mxu0
    %v184 = vadd.f32 %v48, %v183
    %v185 = vpop.f32.mrb[0].mxu0
    %v186 = vadd.f32 %v52, %v185
    %187 = vmatprep.mubr.f32.mxu0 0.0
    %188 = vmatmul.mubr.f32.gmra.mrb[0].mxu0 %v90
    %v189 = vpop.f32.mrb[0].mxu0
    %v190 = vadd.f32 %v48, %v189
    %v191 = vpop.f32.mrb[0].mxu0
    %v192 = vadd.f32 %v52, %v191
    %193 = vdwg.mxu0
    %194 = vmatprep.subr.mxu0 %v30
    %195 = vmatpush1.msra.mxu0 %v29
    %196 = vmatprep.subr.mxu0 %v103
    %197 = vmatpush1.msra.mxu0 %v100
    %198 = vmatprep.subr.mxu0 0.0
    %199 = vmatpush1.msra.mxu0 0.0
    %200 = vmatprep.subr.mxu0 0.0
    %201 = vmatpush1.msra.mxu0 0.0
    %202 = vmatprep.subr.mxu0 0.0
    %203 = vmatpush1.msra.mxu0 0.0
    %204 = vmatprep.subr.mxu0 0.0
    %205 = vmatpush1.msra.mxu0 0.0
    %206 = vmatprep.subr.mxu0 0.0
    %207 = vmatpush1.msra.mxu0 0.0
    %208 = vmatprep.subr.mxu0 0.0
    %209 = vmatpush1.msra.mxu0 0.0
    %210 = vmatprep.subr.mxu0 0.0
    %211 = vmatpush1.msra.mxu0 0.0
    %212 = vmatprep.subr.mxu0 0.0
    %213 = vmatpush1.msra.mxu0 0.0
    %214 = vmatprep.subr.mxu0 0.0
    %215 = vmatpush1.msra.mxu0 0.0
    %216 = vmatprep.subr.mxu0 0.0
    %217 = vmatpush1.msra.mxu0 0.0
    %218 = vmatprep.subr.mxu0 0.0
    %219 = vmatpush1.msra.mxu0 0.0
    %220 = vmatprep.subr.mxu0 0.0
    %221 = vmatpush1.msra.mxu0 0.0
    %222 = vmatprep.subr.mxu0 0.0
    %223 = vmatpush1.msra.mxu0 0.0
    %224 = vmatprep.subr.mxu0 0.0
    %225 = vmatpush1.msra.mxu0 0.0
    %226 = vmatprep.subr.mxu0 0.0
    %227 = vmatpush1.msra.mxu0 0.0
    %228 = vmatprep.subr.mxu0 0.0
    %229 = vmatpush1.msra.mxu0 0.0
    %230 = vmatprep.subr.mxu0 0.0
    %231 = vmatpush1.msra.mxu0 0.0
    %232 = vmatprep.subr.mxu0 0.0
    %233 = vmatpush1.msra.mxu0 0.0
    %234 = vmatprep.subr.mxu0 0.0
    %235 = vmatpush1.msra.mxu0 0.0
    %236 = vmatprep.subr.mxu0 0.0
    %237 = vmatpush1.msra.mxu0 0.0
    %238 = vmatprep.subr.mxu0 0.0
    %239 = vmatpush1.msra.mxu0 0.0
    %240 = vmatprep.subr.mxu0 0.0
    %241 = vmatpush1.msra.mxu0 0.0
    %242 = vmatprep.subr.mxu0 0.0
    %243 = vmatpush1.msra.mxu0 0.0
    %244 = vmatprep.subr.mxu0 0.0
    %245 = vmatpush1.msra.mxu0 0.0
    %246 = vmatprep.subr.mxu0 0.0
    %247 = vmatpush1.msra.mxu0 0.0
    %248 = vmatprep.subr.mxu0 0.0
    %249 = vmatpush1.msra.mxu0 0.0
    %250 = vmatprep.subr.mxu0 0.0
    %251 = vmatpush1.msra.mxu0 0.0
    %252 = vmatprep.subr.mxu0 0.0
    %253 = vmatpush1.msra.mxu0 0.0
    %254 = vmatprep.subr.mxu0 0.0
    %255 = vmatpush1.msra.mxu0 0.0
    %256 = vmatprep.subr.mxu0 0.0
    %257 = vmatpush1.msra.mxu0 0.0
    %258 = vmatprep.mubr.f32.mxu0 0.0
    %259 = vmatmul.mubr.f32.gmra.mrb[0].mxu0 %v87
    %v260 = vpop.f32.mrb[0].mxu0
    %v261 = vadd.f32 %v56, %v260
    %v262 = vpop.f32.mrb[0].mxu0
    %v263 = vadd.f32 %v60, %v262
    %264 = vmatprep.mubr.f32.mxu0 0.0
    %265 = vmatmul.mubr.f32.gmra.mrb[0].mxu0 %v90
    %v266 = vpop.f32.mrb[0].mxu0
    %v267 = vadd.f32 %v56, %v266
    %v268 = vpop.f32.mrb[0].mxu0
    %v269 = vadd.f32 %v60, %v268
    %270 = vdwg.mxu0
    %271 = vmatprep.subr.mxu0 %v32
    %272 = vmatpush1.msra.mxu0 %v31
    %273 = vmatprep.subr.mxu0 %v109
    %274 = vmatpush1.msra.mxu0 %v106
    %275 = vmatprep.subr.mxu0 0.0
    %276 = vmatpush1.msra.mxu0 0.0
    %277 = vmatprep.subr.mxu0 0.0
    %278 = vmatpush1.msra.mxu0 0.0
    %279 = vmatprep.subr.mxu0 0.0
    %280 = vmatpush1.msra.mxu0 0.0
    %281 = vmatprep.subr.mxu0 0.0
    %282 = vmatpush1.msra.mxu0 0.0
    %283 = vmatprep.subr.mxu0 0.0
    %284 = vmatpush1.msra.mxu0 0.0
    %285 = vmatprep.subr.mxu0 0.0
    %286 = vmatpush1.msra.mxu0 0.0
    %287 = vmatprep.subr.mxu0 0.0
    %288 = vmatpush1.msra.mxu0 0.0
    %289 = vmatprep.subr.mxu0 0.0
    %290 = vmatpush1.msra.mxu0 0.0
    %291 = vmatprep.subr.mxu0 0.0
    %292 = vmatpush1.msra.mxu0 0.0
    %293 = vmatprep.subr.mxu0 0.0
    %294 = vmatpush1.msra.mxu0 0.0
    %295 = vmatprep.subr.mxu0 0.0
    %296 = vmatpush1.msra.mxu0 0.0
    %297 = vmatprep.subr.mxu0 0.0
    %298 = vmatpush1.msra.mxu0 0.0
    %299 = vmatprep.subr.mxu0 0.0
    %300 = vmatpush1.msra.mxu0 0.0
    %301 = vmatprep.subr.mxu0 0.0
    %302 = vmatpush1.msra.mxu0 0.0
    %303 = vmatprep.subr.mxu0 0.0
    %304 = vmatpush1.msra.mxu0 0.0
    %305 = vmatprep.subr.mxu0 0.0
    %306 = vmatpush1.msra.mxu0 0.0
    %307 = vmatprep.subr.mxu0 0.0
    %308 = vmatpush1.msra.mxu0 0.0
    %309 = vmatprep.subr.mxu0 0.0
    %310 = vmatpush1.msra.mxu0 0.0
    %311 = vmatprep.subr.mxu0 0.0
    %312 = vmatpush1.msra.mxu0 0.0
    %313 = vmatprep.subr.mxu0 0.0
    %314 = vmatpush1.msra.mxu0 0.0
    %315 = vmatprep.subr.mxu0 0.0
    %316 = vmatpush1.msra.mxu0 0.0
    %317 = vmatprep.subr.mxu0 0.0
    %318 = vmatpush1.msra.mxu0 0.0
    %319 = vmatprep.subr.mxu0 0.0
    %320 = vmatpush1.msra.mxu0 0.0
    %321 = vmatprep.subr.mxu0 0.0
    %322 = vmatpush1.msra.mxu0 0.0
    %323 = vmatprep.subr.mxu0 0.0
    %324 = vmatpush1.msra.mxu0 0.0
    %325 = vmatprep.subr.mxu0 0.0
    %326 = vmatpush1.msra.mxu0 0.0
    %327 = vmatprep.subr.mxu0 0.0
    %328 = vmatpush1.msra.mxu0 0.0
    %329 = vmatprep.subr.mxu0 0.0
    %330 = vmatpush1.msra.mxu0 0.0
    %331 = vmatprep.subr.mxu0 0.0
    %332 = vmatpush1.msra.mxu0 0.0
    %333 = vmatprep.subr.mxu0 0.0
    %334 = vmatpush1.msra.mxu0 0.0
    %335 = vmatprep.mubr.f32.mxu0 0.0
    %336 = vmatmul.mubr.f32.gmra.mrb[0].mxu0 %v87
    %v337 = vpop.f32.mrb[0].mxu0
    %v338 = vadd.f32 %v64, %v337
    %v339 = vpop.f32.mrb[0].mxu0
    %v340 = vadd.f32 %v68, %v339
    %341 = vmatprep.mubr.f32.mxu0 0.0
    %342 = vmatmul.mubr.f32.gmra.mrb[0].mxu0 %v90
    %v343 = vpop.f32.mrb[0].mxu0
    %v344 = vadd.f32 %v64, %v343
    %v345 = vpop.f32.mrb[0].mxu0
    %v346 = vadd.f32 %v68, %v345
    %347 = vdwg.mxu0
    %348 = vmatprep.subr.mxu0 %v34
    %349 = vmatpush1.msra.mxu0 %v33
    %350 = vmatprep.subr.mxu0 %v115
    %351 = vmatpush1.msra.mxu0 %v112
    %352 = vmatprep.subr.mxu0 0.0
    %353 = vmatpush1.msra.mxu0 0.0
    %354 = vmatprep.subr.mxu0 0.0
    %355 = vmatpush1.msra.mxu0 0.0
    %356 = vmatprep.subr.mxu0 0.0
    %357 = vmatpush1.msra.mxu0 0.0
    %358 = vmatprep.subr.mxu0 0.0
    %359 = vmatpush1.msra.mxu0 0.0
    %360 = vmatprep.subr.mxu0 0.0
    %361 = vmatpush1.msra.mxu0 0.0
    %362 = vmatprep.subr.mxu0 0.0
    %363 = vmatpush1.msra.mxu0 0.0
    %364 = vmatprep.subr.mxu0 0.0
    %365 = vmatpush1.msra.mxu0 0.0
    %366 = vmatprep.subr.mxu0 0.0
    %367 = vmatpush1.msra.mxu0 0.0
    %368 = vmatprep.subr.mxu0 0.0
    %369 = vmatpush1.msra.mxu0 0.0
    %370 = vmatprep.subr.mxu0 0.0
    %371 = vmatpush1.msra.mxu0 0.0
    %372 = vmatprep.subr.mxu0 0.0
    %373 = vmatpush1.msra.mxu0 0.0
    %374 = vmatprep.subr.mxu0 0.0
    %375 = vmatpush1.msra.mxu0 0.0
    %376 = vmatprep.subr.mxu0 0.0
    %377 = vmatpush1.msra.mxu0 0.0
    %378 = vmatprep.subr.mxu0 0.0
    %379 = vmatpush1.msra.mxu0 0.0
    %380 = vmatprep.subr.mxu0 0.0
    %381 = vmatpush1.msra.mxu0 0.0
    %382 = vmatprep.subr.mxu0 0.0
    %383 = vmatpush1.msra.mxu0 0.0
    %384 = vmatprep.subr.mxu0 0.0
    %385 = vmatpush1.msra.mxu0 0.0
    %386 = vmatprep.subr.mxu0 0.0
    %387 = vmatpush1.msra.mxu0 0.0
    %388 = vmatprep.subr.mxu0 0.0
    %389 = vmatpush1.msra.mxu0 0.0
    %390 = vmatprep.subr.mxu0 0.0
    %391 = vmatpush1.msra.mxu0 0.0
    %392 = vmatprep.subr.mxu0 0.0
    %393 = vmatpush1.msra.mxu0 0.0
    %394 = vmatprep.subr.mxu0 0.0
    %395 = vmatpush1.msra.mxu0 0.0
    %396 = vmatprep.subr.mxu0 0.0
    %397 = vmatpush1.msra.mxu0 0.0
    %398 = vmatprep.subr.mxu0 0.0
    %399 = vmatpush1.msra.mxu0 0.0
    %400 = vmatprep.subr.mxu0 0.0
    %401 = vmatpush1.msra.mxu0 0.0
    %402 = vmatprep.subr.mxu0 0.0
    %403 = vmatpush1.msra.mxu0 0.0
    %404 = vmatprep.subr.mxu0 0.0
    %405 = vmatpush1.msra.mxu0 0.0
    %406 = vmatprep.subr.mxu0 0.0
    %407 = vmatpush1.msra.mxu0 0.0
    %408 = vmatprep.subr.mxu0 0.0
    %409 = vmatpush1.msra.mxu0 0.0
    %410 = vmatprep.subr.mxu0 0.0
    %411 = vmatpush1.msra.mxu0 0.0
    %412 = vmatprep.mubr.f32.mxu0 0.0
    %413 = vmatmul.mubr.f32.gmra.mrb[0].mxu0 %v87
    %v414 = vpop.f32.mrb[0].mxu0
    %v415 = vadd.f32 %v72, %v414
    %v416 = vpop.f32.mrb[0].mxu0
    %v417 = vadd.f32 %v76, %v416
    %418 = vmatprep.mubr.f32.mxu0 0.0
    %419 = vmatmul.mubr.f32.gmra.mrb[0].mxu0 %v90
    %v420 = vpop.f32.mrb[0].mxu0
    %v421 = vadd.f32 %v72, %v420
    %v422 = vpop.f32.mrb[0].mxu0
    %v423 = vadd.f32 %v76, %v422
    %424 = vdwg.mxu0
    %v425 = vld [vmem:[%s2] sm:$0xff]
    %v426 = vld [vmem:[%s2 + $0x8] sm:$0xff]
    %v427 = vld [vmem:[%s2 + $0x10] sm:$0xff]
    %v428 = vld [vmem:[%s2 + $0x18] sm:$0xff]
    %v429 = vld [vmem:[%s2 + $0x20] sm:$0xff]
    %v430 = vld [vmem:[%s2 + $0x28] sm:$0xff]
    %v431 = vld [vmem:[%s2 + $0x30] sm:$0xff]
    %v432 = vld [vmem:[%s2 + $0x38] sm:$0xff]
    %v433 = vld [vmem:[%s2 + $0x40] sm:$0xff]
    %v434 = vld [vmem:[%s2 + $0x48] sm:$0xff]
    %v435 = vld [vmem:[%s2 + $0x50] sm:$0xff]
    %v436 = vld [vmem:[%s2 + $0x58] sm:$0xff]
    %v437 = vld [vmem:[%s2 + $0x60] sm:$0xff]
    %v438 = vld [vmem:[%s2 + $0x68] sm:$0xff]
    %v439 = vld [vmem:[%s2 + $0x70] sm:$0xff]
    %v440 = vld [vmem:[%s2 + $0x78] sm:$0xff]
    %v441 = vld [vmem:[%s2 + $0x80] sm:$0xff]
    %v442 = vld [vmem:[%s2 + $0x88] sm:$0xff]
    %v443 = vld [vmem:[%s2 + $0x90] sm:$0xff]
    %v444 = vld [vmem:[%s2 + $0x98] sm:$0xff]
    %v445 = vld [vmem:[%s2 + $0xa0] sm:$0xff]
    %v446 = vld [vmem:[%s2 + $0xa8] sm:$0xff]
    %v447 = vld [vmem:[%s2 + $0xb0] sm:$0xff]
    %v448 = vld [vmem:[%s2 + $0xb8] sm:$0xff]
    %v449 = vld [vmem:[%s2 + $0xc0] sm:$0xff]
    %v450 = vld [vmem:[%s2 + $0xc8] sm:$0xff]
    %v451 = vld [vmem:[%s2 + $0xd0] sm:$0xff]
    %v452 = vld [vmem:[%s2 + $0xd8] sm:$0xff]
    %v453 = vld [vmem:[%s2 + $0xe0] sm:$0xff]
    %v454 = vld [vmem:[%s2 + $0xe8] sm:$0xff]
    %v455 = vld [vmem:[%s2 + $0xf0] sm:$0xff]
    %v456 = vld [vmem:[%s2 + $0xf8] sm:$0xff]
    %v457 = vld [vmem:[%s2 + $0x100] sm:$0xff]
    %v458 = vld [vmem:[%s2 + $0x108] sm:$0xff]
    %v459 = vld [vmem:[%s2 + $0x110] sm:$0xff]
    %v460 = vld [vmem:[%s2 + $0x118] sm:$0xff]
    %v461 = vld [vmem:[%s2 + $0x120] sm:$0xff]
    %v462 = vld [vmem:[%s2 + $0x128] sm:$0xff]
    %v463 = vld [vmem:[%s2 + $0x130] sm:$0xff]
    %v464 = vld [vmem:[%s2 + $0x138] sm:$0xff]
    %v465 = vld [vmem:[%s2 + $0x140] sm:$0xff]
    %v466 = vld [vmem:[%s2 + $0x148] sm:$0xff]
    %v467 = vld [vmem:[%s2 + $0x150] sm:$0xff]
    %v468 = vld [vmem:[%s2 + $0x158] sm:$0xff]
    %v469 = vld [vmem:[%s2 + $0x160] sm:$0xff]
    %v470 = vld [vmem:[%s2 + $0x168] sm:$0xff]
    %v471 = vld [vmem:[%s2 + $0x170] sm:$0xff]
    %v472 = vld [vmem:[%s2 + $0x178] sm:$0xff]
    %v473 = vld [vmem:[%s2 + $0x180] sm:$0xff]
    %v474 = vld [vmem:[%s2 + $0x188] sm:$0xff]
    %v475 = vld [vmem:[%s2 + $0x190] sm:$0xff]
    %v476 = vld [vmem:[%s2 + $0x198] sm:$0xff]
    %v477 = vld [vmem:[%s2 + $0x1a0] sm:$0xff]
    %v478 = vld [vmem:[%s2 + $0x1a8] sm:$0xff]
    %v479 = vld [vmem:[%s2 + $0x1b0] sm:$0xff]
    %v480 = vld [vmem:[%s2 + $0x1b8] sm:$0xff]
    %v481 = vld [vmem:[%s2 + $0x1c0] sm:$0xff]
    %v482 = vld [vmem:[%s2 + $0x1c8] sm:$0xff]
    %v483 = vld [vmem:[%s2 + $0x1d0] sm:$0xff]
    %v484 = vld [vmem:[%s2 + $0x1d8] sm:$0xff]
    %v485 = vld [vmem:[%s2 + $0x1e0] sm:$0xff]
    %v486 = vld [vmem:[%s2 + $0x1e8] sm:$0xff]
    %v487 = vld [vmem:[%s2 + $0x1f0] sm:$0xff]
    %v488 = vld [vmem:[%s2 + $0x1f8] sm:$0xff]
    %v489 = vld [vmem:[%s2 + $0x200] sm:$0xff]
    %v490 = vld [vmem:[%s2 + $0x208] sm:$0xff]
    %v491 = vld [vmem:[%s2 + $0x210] sm:$0xff]
    %v492 = vld [vmem:[%s2 + $0x218] sm:$0xff]
    %v493 = vld [vmem:[%s2 + $0x220] sm:$0xff]
    %v494 = vld [vmem:[%s2 + $0x228] sm:$0xff]
    %v495 = vld [vmem:[%s2 + $0x230] sm:$0xff]
    %v496 = vld [vmem:[%s2 + $0x238] sm:$0xff]
    %v497 = vld [vmem:[%s2 + $0x240] sm:$0xff]
    %v498 = vld [vmem:[%s2 + $0x248] sm:$0xff]
    %v499 = vld [vmem:[%s2 + $0x250] sm:$0xff]
    %v500 = vld [vmem:[%s2 + $0x258] sm:$0xff]
    %v501 = vld [vmem:[%s2 + $0x260] sm:$0xff]
    %v502 = vld [vmem:[%s2 + $0x268] sm:$0xff]
    %v503 = vld [vmem:[%s2 + $0x270] sm:$0xff]
    %v504 = vld [vmem:[%s2 + $0x278] sm:$0xff]
    %v505 = vld [vmem:[%s2 + $0x280] sm:$0xff]
    %v506 = vld [vmem:[%s2 + $0x288] sm:$0xff]
    %v507 = vld [vmem:[%s2 + $0x290] sm:$0xff]
    %v508 = vld [vmem:[%s2 + $0x298] sm:$0xff]
    %v509 = vld [vmem:[%s2 + $0x2a0] sm:$0xff]
    %v510 = vld [vmem:[%s2 + $0x2a8] sm:$0xff]
    %v511 = vld [vmem:[%s2 + $0x2b0] sm:$0xff]
    %v512 = vld [vmem:[%s2 + $0x2b8] sm:$0xff]
    %v513 = vld [vmem:[%s2 + $0x2c0] sm:$0xff]
    %v514 = vld [vmem:[%s2 + $0x2c8] sm:$0xff]
    %v515 = vld [vmem:[%s2 + $0x2d0] sm:$0xff]
    %v516 = vld [vmem:[%s2 + $0x2d8] sm:$0xff]
    %v517 = vld [vmem:[%s2 + $0x2e0] sm:$0xff]
    %v518 = vld [vmem:[%s2 + $0x2e8] sm:$0xff]
    %v519 = vld [vmem:[%s2 + $0x2f0] sm:$0xff]
    %v520 = vld [vmem:[%s2 + $0x2f8] sm:$0xff]
    %v521 = vld [vmem:[%s2 + $0x300] sm:$0xff]
    %v522 = vld [vmem:[%s2 + $0x308] sm:$0xff]
    %v523 = vld [vmem:[%s2 + $0x310] sm:$0xff]
    %v524 = vld [vmem:[%s2 + $0x318] sm:$0xff]
    %v525 = vld [vmem:[%s2 + $0x320] sm:$0xff]
    %v526 = vld [vmem:[%s2 + $0x328] sm:$0xff]
    %v527 = vld [vmem:[%s2 + $0x330] sm:$0xff]
    %v528 = vld [vmem:[%s2 + $0x338] sm:$0xff]
    %v529 = vld [vmem:[%s2 + $0x340] sm:$0xff]
    %v530 = vld [vmem:[%s2 + $0x348] sm:$0xff]
    %v531 = vld [vmem:[%s2 + $0x350] sm:$0xff]
    %v532 = vld [vmem:[%s2 + $0x358] sm:$0xff]
    %v533 = vld [vmem:[%s2 + $0x360] sm:$0xff]
    %v534 = vld [vmem:[%s2 + $0x368] sm:$0xff]
    %v535 = vld [vmem:[%s2 + $0x370] sm:$0xff]
    %v536 = vld [vmem:[%s2 + $0x378] sm:$0xff]
    %v537 = vld [vmem:[%s2 + $0x380] sm:$0xff]
    %v538 = vld [vmem:[%s2 + $0x388] sm:$0xff]
    %v539 = vld [vmem:[%s2 + $0x390] sm:$0xff]
    %v540 = vld [vmem:[%s2 + $0x398] sm:$0xff]
    %v541 = vld [vmem:[%s2 + $0x3a0] sm:$0xff]
    %v542 = vld [vmem:[%s2 + $0x3a8] sm:$0xff]
    %v543 = vld [vmem:[%s2 + $0x3b0] sm:$0xff]
    %v544 = vld [vmem:[%s2 + $0x3b8] sm:$0xff]
    %v545 = vld [vmem:[%s2 + $0x3c0] sm:$0xff]
    %v546 = vld [vmem:[%s2 + $0x3c8] sm:$0xff]
    %v547 = vld [vmem:[%s2 + $0x3d0] sm:$0xff]
    %v548 = vld [vmem:[%s2 + $0x3d8] sm:$0xff]
    %v549 = vld [vmem:[%s2 + $0x3e0] sm:$0xff]
    %v550 = vld [vmem:[%s2 + $0x3e8] sm:$0xff]
    %v551 = vld [vmem:[%s2 + $0x3f0] sm:$0xff]
    %v552 = vld [vmem:[%s2 + $0x3f8] sm:$0xff]
    %v681 = vunpack.c.l.b16 %v425
    %v682 = vunpack.c.h.b16 %v425
    %v683 = vunpack.c.l.b16 %v426
    %v684 = vunpack.c.h.b16 %v426
    %v685 = vunpack.c.l.b16 %v427
    %v686 = vunpack.c.h.b16 %v427
    %v687 = vunpack.c.l.b16 %v428
    %v688 = vunpack.c.h.b16 %v428
    %v689 = vunpack.c.l.b16 %v429
    %v690 = vunpack.c.h.b16 %v429
    %v691 = vunpack.c.l.b16 %v430
    %v692 = vunpack.c.h.b16 %v430
    %v693 = vunpack.c.l.b16 %v431
    %v694 = vunpack.c.h.b16 %v431
    %v695 = vunpack.c.l.b16 %v432
    %v696 = vunpack.c.h.b16 %v432
    %v697 = vunpack.c.l.b16 %v433
    %v698 = vunpack.c.h.b16 %v433
    %v699 = vunpack.c.l.b16 %v434
    %v700 = vunpack.c.h.b16 %v434
    %v701 = vunpack.c.l.b16 %v435
    %v702 = vunpack.c.h.b16 %v435
    %v703 = vunpack.c.l.b16 %v436
    %v704 = vunpack.c.h.b16 %v436
    %v705 = vunpack.c.l.b16 %v437
    %v706 = vunpack.c.h.b16 %v437
    %v707 = vunpack.c.l.b16 %v438
    %v708 = vunpack.c.h.b16 %v438
    %v709 = vunpack.c.l.b16 %v439
    %v710 = vunpack.c.h.b16 %v439
    %v711 = vunpack.c.l.b16 %v440
    %v712 = vunpack.c.h.b16 %v440
    %v713 = vunpack.c.l.b16 %v441
    %v714 = vunpack.c.h.b16 %v441
    %v715 = vunpack.c.l.b16 %v442
    %v716 = vunpack.c.h.b16 %v442
    %v717 = vunpack.c.l.b16 %v443
    %v718 = vunpack.c.h.b16 %v443
    %v719 = vunpack.c.l.b16 %v444
    %v720 = vunpack.c.h.b16 %v444
    %v721 = vunpack.c.l.b16 %v445
    %v722 = vunpack.c.h.b16 %v445
    %v723 = vunpack.c.l.b16 %v446
    %v724 = vunpack.c.h.b16 %v446
    %v725 = vunpack.c.l.b16 %v447
    %v726 = vunpack.c.h.b16 %v447
    %v727 = vunpack.c.l.b16 %v448
    %v728 = vunpack.c.h.b16 %v448
    %v729 = vunpack.c.l.b16 %v449
    %v730 = vunpack.c.h.b16 %v449
    %v731 = vunpack.c.l.b16 %v450
    %v732 = vunpack.c.h.b16 %v450
    %v733 = vunpack.c.l.b16 %v451
    %v734 = vunpack.c.h.b16 %v451
    %v735 = vunpack.c.l.b16 %v452
    %v736 = vunpack.c.h.b16 %v452
    %v737 = vunpack.c.l.b16 %v453
    %v738 = vunpack.c.h.b16 %v453
    %v739 = vunpack.c.l.b16 %v454
    %v740 = vunpack.c.h.b16 %v454
    %v741 = vunpack.c.l.b16 %v455
    %v742 = vunpack.c.h.b16 %v455
    %v743 = vunpack.c.l.b16 %v456
    %v744 = vunpack.c.h.b16 %v456
    %v745 = vunpack.c.l.b16 %v457
    %v746 = vunpack.c.h.b16 %v457
    %v747 = vunpack.c.l.b16 %v458
    %v748 = vunpack.c.h.b16 %v458
    %v749 = vunpack.c.l.b16 %v459
    %v750 = vunpack.c.h.b16 %v459
    %v751 = vunpack.c.l.b16 %v460
    %v752 = vunpack.c.h.b16 %v460
    %v753 = vunpack.c.l.b16 %v461
    %v754 = vunpack.c.h.b16 %v461
    %v755 = vunpack.c.l.b16 %v462
    %v756 = vunpack.c.h.b16 %v462
    %v757 = vunpack.c.l.b16 %v463
    %v758 = vunpack.c.h.b16 %v463
    %v759 = vunpack.c.l.b16 %v464
    %v760 = vunpack.c.h.b16 %v464
    %v761 = vunpack.c.l.b16 %v465
    %v762 = vunpack.c.h.b16 %v465
    %v763 = vunpack.c.l.b16 %v466
    %v764 = vunpack.c.h.b16 %v466
    %v765 = vunpack.c.l.b16 %v467
    %v766 = vunpack.c.h.b16 %v467
    %v767 = vunpack.c.l.b16 %v468
    %v768 = vunpack.c.h.b16 %v468
    %v769 = vunpack.c.l.b16 %v469
    %v770 = vunpack.c.h.b16 %v469
    %v771 = vunpack.c.l.b16 %v470
    %v772 = vunpack.c.h.b16 %v470
    %v773 = vunpack.c.l.b16 %v471
    %v774 = vunpack.c.h.b16 %v471
    %v775 = vunpack.c.l.b16 %v472
    %v776 = vunpack.c.h.b16 %v472
    %v777 = vunpack.c.l.b16 %v473
    %v778 = vunpack.c.h.b16 %v473
    %v779 = vunpack.c.l.b16 %v474
    %v780 = vunpack.c.h.b16 %v474
    %v781 = vunpack.c.l.b16 %v475
    %v782 = vunpack.c.h.b16 %v475
    %v783 = vunpack.c.l.b16 %v476
    %v784 = vunpack.c.h.b16 %v476
    %v785 = vunpack.c.l.b16 %v477
    %v786 = vunpack.c.h.b16 %v477
    %v787 = vunpack.c.l.b16 %v478
    %v788 = vunpack.c.h.b16 %v478
    %v789 = vunpack.c.l.b16 %v479
    %v790 = vunpack.c.h.b16 %v479
    %v791 = vunpack.c.l.b16 %v480
    %v792 = vunpack.c.h.b16 %v480
    %v793 = vunpack.c.l.b16 %v481
    %v794 = vunpack.c.h.b16 %v481
    %v795 = vunpack.c.l.b16 %v482
    %v796 = vunpack.c.h.b16 %v482
    %v797 = vunpack.c.l.b16 %v483
    %v798 = vunpack.c.h.b16 %v483
    %v799 = vunpack.c.l.b16 %v484
    %v800 = vunpack.c.h.b16 %v484
    %v801 = vunpack.c.l.b16 %v485
    %v802 = vunpack.c.h.b16 %v485
    %v803 = vunpack.c.l.b16 %v486
    %v804 = vunpack.c.h.b16 %v486
    %v805 = vunpack.c.l.b16 %v487
    %v806 = vunpack.c.h.b16 %v487
    %v807 = vunpack.c.l.b16 %v488
    %v808 = vunpack.c.h.b16 %v488
    %v809 = vunpack.c.l.b16 %v489
    %v810 = vunpack.c.h.b16 %v489
    %v811 = vunpack.c.l.b16 %v490
    %v812 = vunpack.c.h.b16 %v490
    %v813 = vunpack.c.l.b16 %v491
    %v814 = vunpack.c.h.b16 %v491
    %v815 = vunpack.c.l.b16 %v492
    %v816 = vunpack.c.h.b16 %v492
    %v817 = vunpack.c.l.b16 %v493
    %v818 = vunpack.c.h.b16 %v493
    %v819 = vunpack.c.l.b16 %v494
    %v820 = vunpack.c.h.b16 %v494
    %v821 = vunpack.c.l.b16 %v495
    %v822 = vunpack.c.h.b16 %v495
    %v823 = vunpack.c.l.b16 %v496
    %v824 = vunpack.c.h.b16 %v496
    %v825 = vunpack.c.l.b16 %v497
    %v826 = vunpack.c.h.b16 %v497
    %v827 = vunpack.c.l.b16 %v498
    %v828 = vunpack.c.h.b16 %v498
    %v829 = vunpack.c.l.b16 %v499
    %v830 = vunpack.c.h.b16 %v499
    %v831 = vunpack.c.l.b16 %v500
    %v832 = vunpack.c.h.b16 %v500
    %v833 = vunpack.c.l.b16 %v501
    %v834 = vunpack.c.h.b16 %v501
    %v835 = vunpack.c.l.b16 %v502
    %v836 = vunpack.c.h.b16 %v502
    %v837 = vunpack.c.l.b16 %v503
    %v838 = vunpack.c.h.b16 %v503
    %v839 = vunpack.c.l.b16 %v504
    %v840 = vunpack.c.h.b16 %v504
    %v841 = vunpack.c.l.b16 %v505
    %v842 = vunpack.c.h.b16 %v505
    %v843 = vunpack.c.l.b16 %v506
    %v844 = vunpack.c.h.b16 %v506
    %v845 = vunpack.c.l.b16 %v507
    %v846 = vunpack.c.h.b16 %v507
    %v847 = vunpack.c.l.b16 %v508
    %v848 = vunpack.c.h.b16 %v508
    %v849 = vunpack.c.l.b16 %v509
    %v850 = vunpack.c.h.b16 %v509
    %v851 = vunpack.c.l.b16 %v510
    %v852 = vunpack.c.h.b16 %v510
    %v853 = vunpack.c.l.b16 %v511
    %v854 = vunpack.c.h.b16 %v511
    %v855 = vunpack.c.l.b16 %v512
    %v856 = vunpack.c.h.b16 %v512
    %v857 = vunpack.c.l.b16 %v513
    %v858 = vunpack.c.h.b16 %v513
    %v859 = vunpack.c.l.b16 %v514
    %v860 = vunpack.c.h.b16 %v514
    %v861 = vunpack.c.l.b16 %v515
    %v862 = vunpack.c.h.b16 %v515
    %v863 = vunpack.c.l.b16 %v516
    %v864 = vunpack.c.h.b16 %v516
    %v865 = vunpack.c.l.b16 %v517
    %v866 = vunpack.c.h.b16 %v517
    %v867 = vunpack.c.l.b16 %v518
    %v868 = vunpack.c.h.b16 %v518
    %v869 = vunpack.c.l.b16 %v519
    %v870 = vunpack.c.h.b16 %v519
    %v871 = vunpack.c.l.b16 %v520
    %v872 = vunpack.c.h.b16 %v520
    %v873 = vunpack.c.l.b16 %v521
    %v874 = vunpack.c.h.b16 %v521
    %v875 = vunpack.c.l.b16 %v522
    %v876 = vunpack.c.h.b16 %v522
    %v877 = vunpack.c.l.b16 %v523
    %v878 = vunpack.c.h.b16 %v523
    %v879 = vunpack.c.l.b16 %v524
    %v880 = vunpack.c.h.b16 %v524
    %v881 = vunpack.c.l.b16 %v525
    %v882 = vunpack.c.h.b16 %v525
    %v883 = vunpack.c.l.b16 %v526
    %v884 = vunpack.c.h.b16 %v526
    %v885 = vunpack.c.l.b16 %v527
    %v886 = vunpack.c.h.b16 %v527
    %v887 = vunpack.c.l.b16 %v528
    %v888 = vunpack.c.h.b16 %v528
    %v889 = vunpack.c.l.b16 %v529
    %v890 = vunpack.c.h.b16 %v529
    %v891 = vunpack.c.l.b16 %v530
    %v892 = vunpack.c.h.b16 %v530
    %v893 = vunpack.c.l.b16 %v531
    %v894 = vunpack.c.h.b16 %v531
    %v895 = vunpack.c.l.b16 %v532
    %v896 = vunpack.c.h.b16 %v532
    %v897 = vunpack.c.l.b16 %v533
    %v898 = vunpack.c.h.b16 %v533
    %v899 = vunpack.c.l.b16 %v534
    %v900 = vunpack.c.h.b16 %v534
    %v901 = vunpack.c.l.b16 %v535
    %v902 = vunpack.c.h.b16 %v535
    %v903 = vunpack.c.l.b16 %v536
    %v904 = vunpack.c.h.b16 %v536
    %v905 = vunpack.c.l.b16 %v537
    %v906 = vunpack.c.h.b16 %v537
    %v907 = vunpack.c.l.b16 %v538
    %v908 = vunpack.c.h.b16 %v538
    %v909 = vunpack.c.l.b16 %v539
    %v910 = vunpack.c.h.b16 %v539
    %v911 = vunpack.c.l.b16 %v540
    %v912 = vunpack.c.h.b16 %v540
    %v913 = vunpack.c.l.b16 %v541
    %v914 = vunpack.c.h.b16 %v541
    %v915 = vunpack.c.l.b16 %v542
    %v916 = vunpack.c.h.b16 %v542
    %v917 = vunpack.c.l.b16 %v543
    %v918 = vunpack.c.h.b16 %v543
    %v919 = vunpack.c.l.b16 %v544
    %v920 = vunpack.c.h.b16 %v544
    %v921 = vunpack.c.l.b16 %v545
    %v922 = vunpack.c.h.b16 %v545
    %v923 = vunpack.c.l.b16 %v546
    %v924 = vunpack.c.h.b16 %v546
    %v925 = vunpack.c.l.b16 %v547
    %v926 = vunpack.c.h.b16 %v547
    %v927 = vunpack.c.l.b16 %v548
    %v928 = vunpack.c.h.b16 %v548
    %v929 = vunpack.c.l.b16 %v549
    %v930 = vunpack.c.h.b16 %v549
    %v931 = vunpack.c.l.b16 %v550
    %v932 = vunpack.c.h.b16 %v550
    %v933 = vunpack.c.l.b16 %v551
    %v934 = vunpack.c.h.b16 %v551
    %v935 = vunpack.c.l.b16 %v552
    %v936 = vunpack.c.h.b16 %v552
    %v937 = vpack.c.b16 %v689, %v681
    %v938 = vpack.c.b16 %v690, %v682
    %v939 = vpack.c.b16 %v691, %v683
    %v940 = vpack.c.b16 %v692, %v684
    %v941 = vpack.c.b16 %v693, %v685
    %v942 = vpack.c.b16 %v694, %v686
    %v943 = vpack.c.b16 %v695, %v687
    %v944 = vpack.c.b16 %v696, %v688
    %v945 = vpack.c.b16 %v705, %v697
    %v946 = vpack.c.b16 %v706, %v698
    %v947 = vpack.c.b16 %v707, %v699
    %v948 = vpack.c.b16 %v708, %v700
    %v949 = vpack.c.b16 %v709, %v701
    %v950 = vpack.c.b16 %v710, %v702
    %v951 = vpack.c.b16 %v711, %v703
    %v952 = vpack.c.b16 %v712, %v704
    %v953 = vpack.c.b16 %v721, %v713
    %v954 = vpack.c.b16 %v722, %v714
    %v955 = vpack.c.b16 %v723, %v715
    %v956 = vpack.c.b16 %v724, %v716
    %v957 = vpack.c.b16 %v725, %v717
    %v958 = vpack.c.b16 %v726, %v718
    %v959 = vpack.c.b16 %v727, %v719
    %v960 = vpack.c.b16 %v728, %v720
    %v961 = vpack.c.b16 %v737, %v729
    %v962 = vpack.c.b16 %v738, %v730
    %v963 = vpack.c.b16 %v739, %v731
    %v964 = vpack.c.b16 %v740, %v732
    %v965 = vpack.c.b16 %v741, %v733
    %v966 = vpack.c.b16 %v742, %v734
    %v967 = vpack.c.b16 %v743, %v735
    %v968 = vpack.c.b16 %v744, %v736
    %v969 = vpack.c.b16 %v753, %v745
    %v970 = vpack.c.b16 %v754, %v746
    %v971 = vpack.c.b16 %v755, %v747
    %v972 = vpack.c.b16 %v756, %v748
    %v973 = vpack.c.b16 %v757, %v749
    %v974 = vpack.c.b16 %v758, %v750
    %v975 = vpack.c.b16 %v759, %v751
    %v976 = vpack.c.b16 %v760, %v752
    %v977 = vpack.c.b16 %v769, %v761
    %v978 = vpack.c.b16 %v770, %v762
    %v979 = vpack.c.b16 %v771, %v763
    %v980 = vpack.c.b16 %v772, %v764
    %v981 = vpack.c.b16 %v773, %v765
    %v982 = vpack.c.b16 %v774, %v766
    %v983 = vpack.c.b16 %v775, %v767
    %v984 = vpack.c.b16 %v776, %v768
    %v985 = vpack.c.b16 %v785, %v777
    %v986 = vpack.c.b16 %v786, %v778
    %v987 = vpack.c.b16 %v787, %v779
    %v988 = vpack.c.b16 %v788, %v780
    %v989 = vpack.c.b16 %v789, %v781
    %v990 = vpack.c.b16 %v790, %v782
    %v991 = vpack.c.b16 %v791, %v783
    %v992 = vpack.c.b16 %v792, %v784
    %v993 = vpack.c.b16 %v801, %v793
    %v994 = vpack.c.b16 %v802, %v794
    %v995 = vpack.c.b16 %v803, %v795
    %v996 = vpack.c.b16 %v804, %v796
    %v997 = vpack.c.b16 %v805, %v797
    %v998 = vpack.c.b16 %v806, %v798
    %v999 = vpack.c.b16 %v807, %v799
    %v1000 = vpack.c.b16 %v808, %v800
    %v1001 = vpack.c.b16 %v817, %v809
    %v1002 = vpack.c.b16 %v818, %v810
    %v1003 = vpack.c.b16 %v819, %v811
    %v1004 = vpack.c.b16 %v820, %v812
    %v1005 = vpack.c.b16 %v821, %v813
    %v1006 = vpack.c.b16 %v822, %v814
    %v1007 = vpack.c.b16 %v823, %v815
    %v1008 = vpack.c.b16 %v824, %v816
    %v1009 = vpack.c.b16 %v833, %v825
    %v1010 = vpack.c.b16 %v834, %v826
    %v1011 = vpack.c.b16 %v835, %v827
    %v1012 = vpack.c.b16 %v836, %v828
    %v1013 = vpack.c.b16 %v837, %v829
    %v1014 = vpack.c.b16 %v838, %v830
    %v1015 = vpack.c.b16 %v839, %v831
    %v1016 = vpack.c.b16 %v840, %v832
    %v1017 = vpack.c.b16 %v849, %v841
    %v1018 = vpack.c.b16 %v850, %v842
    %v1019 = vpack.c.b16 %v851, %v843
    %v1020 = vpack.c.b16 %v852, %v844
    %v1021 = vpack.c.b16 %v853, %v845
    %v1022 = vpack.c.b16 %v854, %v846
    %v1023 = vpack.c.b16 %v855, %v847
    %v1024 = vpack.c.b16 %v856, %v848
    %v1025 = vpack.c.b16 %v865, %v857
    %v1026 = vpack.c.b16 %v866, %v858
    %v1027 = vpack.c.b16 %v867, %v859
    %v1028 = vpack.c.b16 %v868, %v860
    %v1029 = vpack.c.b16 %v869, %v861
    %v1030 = vpack.c.b16 %v870, %v862
    %v1031 = vpack.c.b16 %v871, %v863
    %v1032 = vpack.c.b16 %v872, %v864
    %v1033 = vpack.c.b16 %v881, %v873
    %v1034 = vpack.c.b16 %v882, %v874
    %v1035 = vpack.c.b16 %v883, %v875
    %v1036 = vpack.c.b16 %v884, %v876
    %v1037 = vpack.c.b16 %v885, %v877
    %v1038 = vpack.c.b16 %v886, %v878
    %v1039 = vpack.c.b16 %v887, %v879
    %v1040 = vpack.c.b16 %v888, %v880
    %v1041 = vpack.c.b16 %v897, %v889
    %v1042 = vpack.c.b16 %v898, %v890
    %v1043 = vpack.c.b16 %v899, %v891
    %v1044 = vpack.c.b16 %v900, %v892
    %v1045 = vpack.c.b16 %v901, %v893
    %v1046 = vpack.c.b16 %v902, %v894
    %v1047 = vpack.c.b16 %v903, %v895
    %v1048 = vpack.c.b16 %v904, %v896
    %v1049 = vpack.c.b16 %v913, %v905
    %v1050 = vpack.c.b16 %v914, %v906
    %v1051 = vpack.c.b16 %v915, %v907
    %v1052 = vpack.c.b16 %v916, %v908
    %v1053 = vpack.c.b16 %v917, %v909
    %v1054 = vpack.c.b16 %v918, %v910
    %v1055 = vpack.c.b16 %v919, %v911
    %v1056 = vpack.c.b16 %v920, %v912
    %v1057 = vpack.c.b16 %v929, %v921
    %v1058 = vpack.c.b16 %v930, %v922
    %v1059 = vpack.c.b16 %v931, %v923
    %v1060 = vpack.c.b16 %v932, %v924
    %v1061 = vpack.c.b16 %v933, %v925
    %v1062 = vpack.c.b16 %v934, %v926
    %v1063 = vpack.c.b16 %v935, %v927
    %v1064 = vpack.c.b16 %v936, %v928
    %1193 = vmatprep.subr.bf16.mxu0 %v938
    %1194 = vmatpush1.bf16.msra.mxu0 %v937
    %1195 = vmatprep.subr.bf16.mxu0 %v946
    %1196 = vmatpush1.bf16.msra.mxu0 %v945
    %1197 = vmatprep.subr.bf16.mxu0 %v954
    %1198 = vmatpush1.bf16.msra.mxu0 %v953
    %1199 = vmatprep.subr.bf16.mxu0 %v962
    %1200 = vmatpush1.bf16.msra.mxu0 %v961
    %1201 = vmatprep.subr.bf16.mxu0 %v970
    %1202 = vmatpush1.bf16.msra.mxu0 %v969
    %1203 = vmatprep.subr.bf16.mxu0 %v978
    %1204 = vmatpush1.bf16.msra.mxu0 %v977
    %1205 = vmatprep.subr.bf16.mxu0 %v986
    %1206 = vmatpush1.bf16.msra.mxu0 %v985
    %1207 = vmatprep.subr.bf16.mxu0 %v994
    %1208 = vmatpush1.bf16.msra.mxu0 %v993
    %1209 = vmatprep.subr.bf16.mxu0 %v1002
    %1210 = vmatpush1.bf16.msra.mxu0 %v1001
    %1211 = vmatprep.subr.bf16.mxu0 %v1010
    %1212 = vmatpush1.bf16.msra.mxu0 %v1009
    %1213 = vmatprep.subr.bf16.mxu0 %v1018
    %1214 = vmatpush1.bf16.msra.mxu0 %v1017
    %1215 = vmatprep.subr.bf16.mxu0 %v1026
    %1216 = vmatpush1.bf16.msra.mxu0 %v1025
    %1217 = vmatprep.subr.bf16.mxu0 %v1034
    %1218 = vmatpush1.bf16.msra.mxu0 %v1033
    %1219 = vmatprep.subr.bf16.mxu0 %v1042
    %1220 = vmatpush1.bf16.msra.mxu0 %v1041
    %1221 = vmatprep.subr.bf16.mxu0 %v1050
    %1222 = vmatpush1.bf16.msra.mxu0 %v1049
    %1223 = vmatprep.subr.bf16.mxu0 %v1058
    %1224 = vmatpush1.bf16.msra.mxu0 %v1057
    %1225 = vmatprep.mubr.bf16.mxu0 0
    %1226 = vmatmul.mubr.bf16.gmra.mrb[0].mxu0 0
    %v1227 = vpop.f32.mrb[0].mxu0
    %v1228 = vadd.f32 0.0, %v1227
    %v1229 = vpop.f32.mrb[0].mxu0
    %v1230 = vadd.f32 0.0, %v1229
    %v1231 = vpop.f32.mrb[0].mxu0
    %v1232 = vpop.f32.mrb[0].mxu0
    %1233 = vdwg.mxu0
    %1234 = vmatprep.subr.bf16.mxu0 %v940
    %1235 = vmatpush1.bf16.msra.mxu0 %v939
    %1236 = vmatprep.subr.bf16.mxu0 %v948
    %1237 = vmatpush1.bf16.msra.mxu0 %v947
    %1238 = vmatprep.subr.bf16.mxu0 %v956
    %1239 = vmatpush1.bf16.msra.mxu0 %v955
    %1240 = vmatprep.subr.bf16.mxu0 %v964
    %1241 = vmatpush1.bf16.msra.mxu0 %v963
    %1242 = vmatprep.subr.bf16.mxu0 %v972
    %1243 = vmatpush1.bf16.msra.mxu0 %v971
    %1244 = vmatprep.subr.bf16.mxu0 %v980
    %1245 = vmatpush1.bf16.msra.mxu0 %v979
    %1246 = vmatprep.subr.bf16.mxu0 %v988
    %1247 = vmatpush1.bf16.msra.mxu0 %v987
    %1248 = vmatprep.subr.bf16.mxu0 %v996
    %1249 = vmatpush1.bf16.msra.mxu0 %v995
    %1250 = vmatprep.subr.bf16.mxu0 %v1004
    %1251 = vmatpush1.bf16.msra.mxu0 %v1003
    %1252 = vmatprep.subr.bf16.mxu0 %v1012
    %1253 = vmatpush1.bf16.msra.mxu0 %v1011
    %1254 = vmatprep.subr.bf16.mxu0 %v1020
    %1255 = vmatpush1.bf16.msra.mxu0 %v1019
    %1256 = vmatprep.subr.bf16.mxu0 %v1028
    %1257 = vmatpush1.bf16.msra.mxu0 %v1027
    %1258 = vmatprep.subr.bf16.mxu0 %v1036
    %1259 = vmatpush1.bf16.msra.mxu0 %v1035
    %1260 = vmatprep.subr.bf16.mxu0 %v1044
    %1261 = vmatpush1.bf16.msra.mxu0 %v1043
    %1262 = vmatprep.subr.bf16.mxu0 %v1052
    %1263 = vmatpush1.bf16.msra.mxu0 %v1051
    %1264 = vmatprep.subr.bf16.mxu0 %v1060
    %1265 = vmatpush1.bf16.msra.mxu0 %v1059
    %1266 = vmatprep.mubr.bf16.mxu0 0
    %1267 = vmatmul.mubr.bf16.gmra.mrb[0].mxu0 0
    %v1268 = vpop.f32.mrb[0].mxu0
    %v1269 = vadd.f32 0.0, %v1268
    %v1270 = vpop.f32.mrb[0].mxu0
    %v1271 = vadd.f32 0.0, %v1270
    %v1272 = vpop.f32.mrb[0].mxu0
    %v1273 = vpop.f32.mrb[0].mxu0
    %1274 = vdwg.mxu0
    %1275 = vmatprep.subr.bf16.mxu0 %v942
    %1276 = vmatpush1.bf16.msra.mxu0 %v941
    %1277 = vmatprep.subr.bf16.mxu0 %v950
    %1278 = vmatpush1.bf16.msra.mxu0 %v949
    %1279 = vmatprep.subr.bf16.mxu0 %v958
    %1280 = vmatpush1.bf16.msra.mxu0 %v957
    %1281 = vmatprep.subr.bf16.mxu0 %v966
    %1282 = vmatpush1.bf16.msra.mxu0 %v965
    %1283 = vmatprep.subr.bf16.mxu0 %v974
    %1284 = vmatpush1.bf16.msra.mxu0 %v973
    %1285 = vmatprep.subr.bf16.mxu0 %v982
    %1286 = vmatpush1.bf16.msra.mxu0 %v981
    %1287 = vmatprep.subr.bf16.mxu0 %v990
    %1288 = vmatpush1.bf16.msra.mxu0 %v989
    %1289 = vmatprep.subr.bf16.mxu0 %v998
    %1290 = vmatpush1.bf16.msra.mxu0 %v997
    %1291 = vmatprep.subr.bf16.mxu0 %v1006
    %1292 = vmatpush1.bf16.msra.mxu0 %v1005
    %1293 = vmatprep.subr.bf16.mxu0 %v1014
    %1294 = vmatpush1.bf16.msra.mxu0 %v1013
    %1295 = vmatprep.subr.bf16.mxu0 %v1022
    %1296 = vmatpush1.bf16.msra.mxu0 %v1021
    %1297 = vmatprep.subr.bf16.mxu0 %v1030
    %1298 = vmatpush1.bf16.msra.mxu0 %v1029
    %1299 = vmatprep.subr.bf16.mxu0 %v1038
    %1300 = vmatpush1.bf16.msra.mxu0 %v1037
    %1301 = vmatprep.subr.bf16.mxu0 %v1046
    %1302 = vmatpush1.bf16.msra.mxu0 %v1045
    %1303 = vmatprep.subr.bf16.mxu0 %v1054
    %1304 = vmatpush1.bf16.msra.mxu0 %v1053
    %1305 = vmatprep.subr.bf16.mxu0 %v1062
    %1306 = vmatpush1.bf16.msra.mxu0 %v1061
    %1307 = vmatprep.mubr.bf16.mxu0 0
    %1308 = vmatmul.mubr.bf16.gmra.mrb[0].mxu0 0
    %v1309 = vpop.f32.mrb[0].mxu0
    %v1310 = vadd.f32 0.0, %v1309
    %v1311 = vpop.f32.mrb[0].mxu0
    %v1312 = vadd.f32 0.0, %v1311
    %v1313 = vpop.f32.mrb[0].mxu0
    %v1314 = vpop.f32.mrb[0].mxu0
    %1315 = vdwg.mxu0
    %1316 = vmatprep.subr.bf16.mxu0 %v944
    %1317 = vmatpush1.bf16.msra.mxu0 %v943
    %1318 = vmatprep.subr.bf16.mxu0 %v952
    %1319 = vmatpush1.bf16.msra.mxu0 %v951
    %1320 = vmatprep.subr.bf16.mxu0 %v960
    %1321 = vmatpush1.bf16.msra.mxu0 %v959
    %1322 = vmatprep.subr.bf16.mxu0 %v968
    %1323 = vmatpush1.bf16.msra.mxu0 %v967
    %1324 = vmatprep.subr.bf16.mxu0 %v976
    %1325 = vmatpush1.bf16.msra.mxu0 %v975
    %1326 = vmatprep.subr.bf16.mxu0 %v984
    %1327 = vmatpush1.bf16.msra.mxu0 %v983
    %1328 = vmatprep.subr.bf16.mxu0 %v992
    %1329 = vmatpush1.bf16.msra.mxu0 %v991
    %1330 = vmatprep.subr.bf16.mxu0 %v1000
    %1331 = vmatpush1.bf16.msra.mxu0 %v999
    %1332 = vmatprep.subr.bf16.mxu0 %v1008
    %1333 = vmatpush1.bf16.msra.mxu0 %v1007
    %1334 = vmatprep.subr.bf16.mxu0 %v1016
    %1335 = vmatpush1.bf16.msra.mxu0 %v1015
    %1336 = vmatprep.subr.bf16.mxu0 %v1024
    %1337 = vmatpush1.bf16.msra.mxu0 %v1023
    %1338 = vmatprep.subr.bf16.mxu0 %v1032
    %1339 = vmatpush1.bf16.msra.mxu0 %v1031
    %1340 = vmatprep.subr.bf16.mxu0 %v1040
    %1341 = vmatpush1.bf16.msra.mxu0 %v1039
    %1342 = vmatprep.subr.bf16.mxu0 %v1048
    %1343 = vmatpush1.bf16.msra.mxu0 %v1047
    %1344 = vmatprep.subr.bf16.mxu0 %v1056
    %1345 = vmatpush1.bf16.msra.mxu0 %v1055
    %1346 = vmatprep.subr.bf16.mxu0 %v1064
    %1347 = vmatpush1.bf16.msra.mxu0 %v1063
    %1348 = vmatprep.mubr.bf16.mxu0 0
    %1349 = vmatmul.mubr.bf16.gmra.mrb[0].mxu0 0
    %v1350 = vpop.f32.mrb[0].mxu0
    %v1351 = vadd.f32 0.0, %v1350
    %v1352 = vpop.f32.mrb[0].mxu0
    %v1353 = vadd.f32 0.0, %v1352
    %v1354 = vpop.f32.mrb[0].mxu0
    %v1355 = vpop.f32.mrb[0].mxu0
    %1356 = vdwg.mxu0
    %v1357 = vadd.f32 %v184, %v1228
    %v1358 = vadd.f32 %v186, %v1230
    %v1359 = vadd.f32 %v261, %v1269
    %v1360 = vadd.f32 %v263, %v1271
    %v1361 = vadd.f32 %v338, %v1310
    %v1362 = vadd.f32 %v340, %v1312
    %v1363 = vadd.f32 %v415, %v1351
    %v1364 = vadd.f32 %v417, %v1353
    %v1365 = vxor.u32 %v1357, 2147483648
    %v1366 = vxor.u32 %v1358, 2147483648
    %v1367 = vxor.u32 %v1359, 2147483648
    %v1368 = vxor.u32 %v1360, 2147483648
    %v1369 = vxor.u32 %v1361, 2147483648
    %v1370 = vxor.u32 %v1362, 2147483648
    %v1371 = vmul.f32 %v1365, 1.442695
    %v1372 = vpow.pop %v1371
    %v1373 = vmul.f32 %v1366, 1.442695
    %v1374 = vpow.pop %v1373
    %v1375 = vmul.f32 %v1367, 1.442695
    %v1376 = vpow.pop %v1375
    %v1377 = vmul.f32 %v1368, 1.442695
    %v1378 = vpow.pop %v1377
    %v1379 = vmul.f32 %v1369, 1.442695
    %v1380 = vpow.pop %v1379
    %v1381 = vmul.f32 %v1370, 1.442695
    %v1382 = vpow.pop %v1381
    %v1383 = vadd.f32 %v1372, 1.0
    %v1384 = vadd.f32 %v1374, 1.0
    %v1385 = vadd.f32 %v1376, 1.0
    %v1386 = vadd.f32 %v1378, 1.0
    %v1387 = vadd.f32 %v1380, 1.0
    %v1388 = vadd.f32 %v1382, 1.0
    %v1389 = vrcp.pop %v1383
    %v1390 = vmul.f32 1.0, %v1389
    %v1391 = vrcp.pop %v1384
    %v1392 = vmul.f32 1.0, %v1391
    %v1393 = vrcp.pop %v1385
    %v1394 = vmul.f32 1.0, %v1393
    %v1395 = vrcp.pop %v1386
    %v1396 = vmul.f32 1.0, %v1395
    %v1397 = vrcp.pop %v1387
    %v1398 = vmul.f32 1.0, %v1397
    %v1399 = vrcp.pop %v1388
    %v1400 = vmul.f32 1.0, %v1399
    %v1401 = vtanh.pop %v1363
    %v1402 = vtanh.pop %v1364
    %v1403 = vmul.f32 %v1394, 0.0
    %v1404 = vmul.f32 %v1396, 0.0
    %v1405 = vmul.f32 %v1390, %v1401
    %v1406 = vmul.f32 %v1392, %v1402
    %v1407 = vadd.f32 %v1403, %v1405
    %v1408 = vadd.f32 %v1404, %v1406
    %v1409 = vtanh.pop %v1407
    %v1410 = vtanh.pop %v1408
    %v1411 = vmul.f32 %v1398, %v1409
    %v1412 = vmul.f32 %v1400, %v1410
    %v1413 = vpack.c.bf16 %v1411, %v1411
    %v1414 = vpack.c.bf16 %v1412, %v1412
    %1415 = vmatprep.subr.bf16.mxu0 %v938
    %1416 = vmatpush1.bf16.msra.mxu0 %v937
    %1417 = vmatprep.subr.bf16.mxu0 %v946
    %1418 = vmatpush1.bf16.msra.mxu0 %v945
    %1419 = vmatprep.subr.bf16.mxu0 %v954
    %1420 = vmatpush1.bf16.msra.mxu0 %v953
    %1421 = vmatprep.subr.bf16.mxu0 %v962
    %1422 = vmatpush1.bf16.msra.mxu0 %v961
    %1423 = vmatprep.subr.bf16.mxu0 %v970
    %1424 = vmatpush1.bf16.msra.mxu0 %v969
    %1425 = vmatprep.subr.bf16.mxu0 %v978
    %1426 = vmatpush1.bf16.msra.mxu0 %v977
    %1427 = vmatprep.subr.bf16.mxu0 %v986
    %1428 = vmatpush1.bf16.msra.mxu0 %v985
    %1429 = vmatprep.subr.bf16.mxu0 %v994
    %1430 = vmatpush1.bf16.msra.mxu0 %v993
    %1431 = vmatprep.subr.bf16.mxu0 %v1002
    %1432 = vmatpush1.bf16.msra.mxu0 %v1001
    %1433 = vmatprep.subr.bf16.mxu0 %v1010
    %1434 = vmatpush1.bf16.msra.mxu0 %v1009
    %1435 = vmatprep.subr.bf16.mxu0 %v1018
    %1436 = vmatpush1.bf16.msra.mxu0 %v1017
    %1437 = vmatprep.subr.bf16.mxu0 %v1026
    %1438 = vmatpush1.bf16.msra.mxu0 %v1025
    %1439 = vmatprep.subr.bf16.mxu0 %v1034
    %1440 = vmatpush1.bf16.msra.mxu0 %v1033
    %1441 = vmatprep.subr.bf16.mxu0 %v1042
    %1442 = vmatpush1.bf16.msra.mxu0 %v1041
    %1443 = vmatprep.subr.bf16.mxu0 %v1050
    %1444 = vmatpush1.bf16.msra.mxu0 %v1049
    %1445 = vmatprep.subr.bf16.mxu0 %v1058
    %1446 = vmatpush1.bf16.msra.mxu0 %v1057
    %1447 = vmatprep.mubr.bf16.mxu0 %v1414
    %1448 = vmatmul.mubr.bf16.gmra.mrb[0].mxu0 %v1413
    %v1449 = vpop.f32.mrb[0].mxu0
    %v1450 = vadd.f32 0.0, %v1449
    %v1451 = vpop.f32.mrb[0].mxu0
    %v1452 = vadd.f32 0.0, %v1451
    %v1453 = vpop.f32.mrb[0].mxu0
    %v1454 = vpop.f32.mrb[0].mxu0
    %1455 = vdwg.mxu0
    %1456 = vmatprep.subr.bf16.mxu0 %v940
    %1457 = vmatpush1.bf16.msra.mxu0 %v939
    %1458 = vmatprep.subr.bf16.mxu0 %v948
    %1459 = vmatpush1.bf16.msra.mxu0 %v947
    %1460 = vmatprep.subr.bf16.mxu0 %v956
    %1461 = vmatpush1.bf16.msra.mxu0 %v955
    %1462 = vmatprep.subr.bf16.mxu0 %v964
    %1463 = vmatpush1.bf16.msra.mxu0 %v963
    %1464 = vmatprep.subr.bf16.mxu0 %v972
    %1465 = vmatpush1.bf16.msra.mxu0 %v971
    %1466 = vmatprep.subr.bf16.mxu0 %v980
    %1467 = vmatpush1.bf16.msra.mxu0 %v979
    %1468 = vmatprep.subr.bf16.mxu0 %v988
    %1469 = vmatpush1.bf16.msra.mxu0 %v987
    %1470 = vmatprep.subr.bf16.mxu0 %v996
    %1471 = vmatpush1.bf16.msra.mxu0 %v995
    %1472 = vmatprep.subr.bf16.mxu0 %v1004
    %1473 = vmatpush1.bf16.msra.mxu0 %v1003
    %1474 = vmatprep.subr.bf16.mxu0 %v1012
    %1475 = vmatpush1.bf16.msra.mxu0 %v1011
    %1476 = vmatprep.subr.bf16.mxu0 %v1020
    %1477 = vmatpush1.bf16.msra.mxu0 %v1019
    %1478 = vmatprep.subr.bf16.mxu0 %v1028
    %1479 = vmatpush1.bf16.msra.mxu0 %v1027
    %1480 = vmatprep.subr.bf16.mxu0 %v1036
    %1481 = vmatpush1.bf16.msra.mxu0 %v1035
    %1482 = vmatprep.subr.bf16.mxu0 %v1044
    %1483 = vmatpush1.bf16.msra.mxu0 %v1043
    %1484 = vmatprep.subr.bf16.mxu0 %v1052
    %1485 = vmatpush1.bf16.msra.mxu0 %v1051
    %1486 = vmatprep.subr.bf16.mxu0 %v1060
    %1487 = vmatpush1.bf16.msra.mxu0 %v1059
    %1488 = vmatprep.mubr.bf16.mxu0 %v1414
    %1489 = vmatmul.mubr.bf16.gmra.mrb[0].mxu0 %v1413
    %v1490 = vpop.f32.mrb[0].mxu0
    %v1491 = vadd.f32 0.0, %v1490
    %v1492 = vpop.f32.mrb[0].mxu0
    %v1493 = vadd.f32 0.0, %v1492
    %v1494 = vpop.f32.mrb[0].mxu0
    %v1495 = vpop.f32.mrb[0].mxu0
    %1496 = vdwg.mxu0
    %1497 = vmatprep.subr.bf16.mxu0 %v942
    %1498 = vmatpush1.bf16.msra.mxu0 %v941
    %1499 = vmatprep.subr.bf16.mxu0 %v950
    %1500 = vmatpush1.bf16.msra.mxu0 %v949
    %1501 = vmatprep.subr.bf16.mxu0 %v958
    %1502 = vmatpush1.bf16.msra.mxu0 %v957
    %1503 = vmatprep.subr.bf16.mxu0 %v966
    %1504 = vmatpush1.bf16.msra.mxu0 %v965
    %1505 = vmatprep.subr.bf16.mxu0 %v974
    %1506 = vmatpush1.bf16.msra.mxu0 %v973
    %1507 = vmatprep.subr.bf16.mxu0 %v982
    %1508 = vmatpush1.bf16.msra.mxu0 %v981
    %1509 = vmatprep.subr.bf16.mxu0 %v990
    %1510 = vmatpush1.bf16.msra.mxu0 %v989
    %1511 = vmatprep.subr.bf16.mxu0 %v998
    %1512 = vmatpush1.bf16.msra.mxu0 %v997
    %1513 = vmatprep.subr.bf16.mxu0 %v1006
    %1514 = vmatpush1.bf16.msra.mxu0 %v1005
    %1515 = vmatprep.subr.bf16.mxu0 %v1014
    %1516 = vmatpush1.bf16.msra.mxu0 %v1013
    %1517 = vmatprep.subr.bf16.mxu0 %v1022
    %1518 = vmatpush1.bf16.msra.mxu0 %v1021
    %1519 = vmatprep.subr.bf16.mxu0 %v1030
    %1520 = vmatpush1.bf16.msra.mxu0 %v1029
    %1521 = vmatprep.subr.bf16.mxu0 %v1038
    %1522 = vmatpush1.bf16.msra.mxu0 %v1037
    %1523 = vmatprep.subr.bf16.mxu0 %v1046
    %1524 = vmatpush1.bf16.msra.mxu0 %v1045
    %1525 = vmatprep.subr.bf16.mxu0 %v1054
    %1526 = vmatpush1.bf16.msra.mxu0 %v1053
    %1527 = vmatprep.subr.bf16.mxu0 %v1062
    %1528 = vmatpush1.bf16.msra.mxu0 %v1061
    %1529 = vmatprep.mubr.bf16.mxu0 %v1414
    %1530 = vmatmul.mubr.bf16.gmra.mrb[0].mxu0 %v1413
    %v1531 = vpop.f32.mrb[0].mxu0
    %v1532 = vadd.f32 0.0, %v1531
    %v1533 = vpop.f32.mrb[0].mxu0
    %v1534 = vadd.f32 0.0, %v1533
    %v1535 = vpop.f32.mrb[0].mxu0
    %v1536 = vpop.f32.mrb[0].mxu0
    %1537 = vdwg.mxu0
    %1538 = vmatprep.subr.bf16.mxu0 %v944
    %1539 = vmatpush1.bf16.msra.mxu0 %v943
    %1540 = vmatprep.subr.bf16.mxu0 %v952
    %1541 = vmatpush1.bf16.msra.mxu0 %v951
    %1542 = vmatprep.subr.bf16.mxu0 %v960
    %1543 = vmatpush1.bf16.msra.mxu0 %v959
    %1544 = vmatprep.subr.bf16.mxu0 %v968
    %1545 = vmatpush1.bf16.msra.mxu0 %v967
    %1546 = vmatprep.subr.bf16.mxu0 %v976
    %1547 = vmatpush1.bf16.msra.mxu0 %v975
    %1548 = vmatprep.subr.bf16.mxu0 %v984
    %1549 = vmatpush1.bf16.msra.mxu0 %v983
    %1550 = vmatprep.subr.bf16.mxu0 %v992
    %1551 = vmatpush1.bf16.msra.mxu0 %v991
    %1552 = vmatprep.subr.bf16.mxu0 %v1000
    %1553 = vmatpush1.bf16.msra.mxu0 %v999
    %1554 = vmatprep.subr.bf16.mxu0 %v1008
    %1555 = vmatpush1.bf16.msra.mxu0 %v1007
    %1556 = vmatprep.subr.bf16.mxu0 %v1016
    %1557 = vmatpush1.bf16.msra.mxu0 %v1015
    %1558 = vmatprep.subr.bf16.mxu0 %v1024
    %1559 = vmatpush1.bf16.msra.mxu0 %v1023
    %1560 = vmatprep.subr.bf16.mxu0 %v1032
    %1561 = vmatpush1.bf16.msra.mxu0 %v1031
    %1562 = vmatprep.subr.bf16.mxu0 %v1040
    %1563 = vmatpush1.bf16.msra.mxu0 %v1039
    %1564 = vmatprep.subr.bf16.mxu0 %v1048
    %1565 = vmatpush1.bf16.msra.mxu0 %v1047
    %1566 = vmatprep.subr.bf16.mxu0 %v1056
    %1567 = vmatpush1.bf16.msra.mxu0 %v1055
    %1568 = vmatprep.subr.bf16.mxu0 %v1064
    %1569 = vmatpush1.bf16.msra.mxu0 %v1063
    %1570 = vmatprep.mubr.bf16.mxu0 %v1414
    %1571 = vmatmul.mubr.bf16.gmra.mrb[0].mxu0 %v1413
    %v1572 = vpop.f32.mrb[0].mxu0
    %v1573 = vadd.f32 0.0, %v1572
    %v1574 = vpop.f32.mrb[0].mxu0
    %v1575 = vadd.f32 0.0, %v1574
    %v1576 = vpop.f32.mrb[0].mxu0
    %v1577 = vpop.f32.mrb[0].mxu0
    %1578 = vdwg.mxu0
    %v1587 = vrot.slane %v1450, 6
    %v1588 = vrot.slane %v1452, 6
    %v1589 = vrot.slane %v1491, 6
    %v1590 = vrot.slane %v1493, 6
    %v1591 = vrot.slane %v1532, 6
    %v1592 = vrot.slane %v1534, 6
    %v1593 = vrot.slane %v1573, 6
    %v1594 = vrot.slane %v1575, 6
    %v1603 = vadd.f32 %v184, %v1587
    %v1604 = vadd.f32 %v186, %v1588
    %v1605 = vadd.f32 %v261, %v1589
    %v1606 = vadd.f32 %v263, %v1590
    %v1607 = vadd.f32 %v338, %v1591
    %v1608 = vadd.f32 %v340, %v1592
    %v1609 = vadd.f32 %v415, %v1593
    %v1610 = vadd.f32 %v417, %v1594
    %v1611 = vxor.u32 %v1603, 2147483648
    %v1612 = vxor.u32 %v1604, 2147483648
    %v1613 = vxor.u32 %v1605, 2147483648
    %v1614 = vxor.u32 %v1606, 2147483648
    %v1615 = vxor.u32 %v1607, 2147483648
    %v1616 = vxor.u32 %v1608, 2147483648
    %v1617 = vmul.f32 %v1611, 1.442695
    %v1618 = vpow.pop %v1617
    %v1619 = vmul.f32 %v1612, 1.442695
    %v1620 = vpow.pop %v1619
    %v1621 = vmul.f32 %v1613, 1.442695
    %v1622 = vpow.pop %v1621
    %v1623 = vmul.f32 %v1614, 1.442695
    %v1624 = vpow.pop %v1623
    %v1625 = vmul.f32 %v1615, 1.442695
    %v1626 = vpow.pop %v1625
    %v1627 = vmul.f32 %v1616, 1.442695
    %v1628 = vpow.pop %v1627
    %v1629 = vadd.f32 %v1618, 1.0
    %v1630 = vadd.f32 %v1620, 1.0
    %v1631 = vadd.f32 %v1622, 1.0
    %v1632 = vadd.f32 %v1624, 1.0
    %v1633 = vadd.f32 %v1626, 1.0
    %v1634 = vadd.f32 %v1628, 1.0
    %v1635 = vrcp.pop %v1629
    %v1636 = vmul.f32 1.0, %v1635
    %v1637 = vrcp.pop %v1630
    %v1638 = vmul.f32 1.0, %v1637
    %v1639 = vrcp.pop %v1631
    %v1640 = vmul.f32 1.0, %v1639
    %v1641 = vrcp.pop %v1632
    %v1642 = vmul.f32 1.0, %v1641
    %v1643 = vrcp.pop %v1633
    %v1644 = vmul.f32 1.0, %v1643
    %v1645 = vrcp.pop %v1634
    %v1646 = vmul.f32 1.0, %v1645
    %v1647 = vtanh.pop %v1609
    %v1648 = vtanh.pop %v1610
    %v1651 = vrot.slane %v1407, 6
    %v1652 = vrot.slane %v1408, 6
    %v1655 = vmul.f32 %v1640, %v1651
    %v1656 = vmul.f32 %v1642, %v1652
    %v1657 = vmul.f32 %v1636, %v1647
    %v1658 = vmul.f32 %v1638, %v1648
    %v1659 = vadd.f32 %v1655, %v1657
    %v1660 = vadd.f32 %v1656, %v1658
    %v1661 = vtanh.pop %v1659
    %v1662 = vtanh.pop %v1660
    %v1663 = vmul.f32 %v1644, %v1661
    %v1664 = vmul.f32 %v1646, %v1662
    %v1665 = vpack.c.bf16 %v1663, %v1663
    %v1666 = vpack.c.bf16 %v1664, %v1664
    %v1669 = vrot.slane %v1665, 1
    %v1670 = vrot.slane %v1666, 1
    %1673 = vmatprep.subr.bf16.mxu0 %v938
    %1674 = vmatpush1.bf16.msra.mxu0 %v937
    %1675 = vmatprep.subr.bf16.mxu0 %v946
    %1676 = vmatpush1.bf16.msra.mxu0 %v945
    %1677 = vmatprep.subr.bf16.mxu0 %v954
    %1678 = vmatpush1.bf16.msra.mxu0 %v953
    %1679 = vmatprep.subr.bf16.mxu0 %v962
    %1680 = vmatpush1.bf16.msra.mxu0 %v961
    %1681 = vmatprep.subr.bf16.mxu0 %v970
    %1682 = vmatpush1.bf16.msra.mxu0 %v969
    %1683 = vmatprep.subr.bf16.mxu0 %v978
    %1684 = vmatpush1.bf16.msra.mxu0 %v977
    %1685 = vmatprep.subr.bf16.mxu0 %v986
    %1686 = vmatpush1.bf16.msra.mxu0 %v985
    %1687 = vmatprep.subr.bf16.mxu0 %v994
    %1688 = vmatpush1.bf16.msra.mxu0 %v993
    %1689 = vmatprep.subr.bf16.mxu0 %v1002
    %1690 = vmatpush1.bf16.msra.mxu0 %v1001
    %1691 = vmatprep.subr.bf16.mxu0 %v1010
    %1692 = vmatpush1.bf16.msra.mxu0 %v1009
    %1693 = vmatprep.subr.bf16.mxu0 %v1018
    %1694 = vmatpush1.bf16.msra.mxu0 %v1017
    %1695 = vmatprep.subr.bf16.mxu0 %v1026
    %1696 = vmatpush1.bf16.msra.mxu0 %v1025
    %1697 = vmatprep.subr.bf16.mxu0 %v1034
    %1698 = vmatpush1.bf16.msra.mxu0 %v1033
    %1699 = vmatprep.subr.bf16.mxu0 %v1042
    %1700 = vmatpush1.bf16.msra.mxu0 %v1041
    %1701 = vmatprep.subr.bf16.mxu0 %v1050
    %1702 = vmatpush1.bf16.msra.mxu0 %v1049
    %1703 = vmatprep.subr.bf16.mxu0 %v1058
    %1704 = vmatpush1.bf16.msra.mxu0 %v1057
    %1705 = vmatprep.mubr.bf16.mxu0 %v1670
    %1706 = vmatmul.mubr.bf16.gmra.mrb[0].mxu0 %v1669
    %v1707 = vpop.f32.mrb[0].mxu0
    %v1708 = vadd.f32 0.0, %v1707
    %v1709 = vpop.f32.mrb[0].mxu0
    %v1710 = vadd.f32 0.0, %v1709
    %v1711 = vpop.f32.mrb[0].mxu0
    %v1712 = vpop.f32.mrb[0].mxu0
    %1713 = vdwg.mxu0
    %1714 = vmatprep.subr.bf16.mxu0 %v940
    %1715 = vmatpush1.bf16.msra.mxu0 %v939
    %1716 = vmatprep.subr.bf16.mxu0 %v948
    %1717 = vmatpush1.bf16.msra.mxu0 %v947
    %1718 = vmatprep.subr.bf16.mxu0 %v956
    %1719 = vmatpush1.bf16.msra.mxu0 %v955
    %1720 = vmatprep.subr.bf16.mxu0 %v964
    %1721 = vmatpush1.bf16.msra.mxu0 %v963
    %1722 = vmatprep.subr.bf16.mxu0 %v972
    %1723 = vmatpush1.bf16.msra.mxu0 %v971
    %1724 = vmatprep.subr.bf16.mxu0 %v980
    %1725 = vmatpush1.bf16.msra.mxu0 %v979
    %1726 = vmatprep.subr.bf16.mxu0 %v988
    %1727 = vmatpush1.bf16.msra.mxu0 %v987
    %1728 = vmatprep.subr.bf16.mxu0 %v996
    %1729 = vmatpush1.bf16.msra.mxu0 %v995
    %1730 = vmatprep.subr.bf16.mxu0 %v1004
    %1731 = vmatpush1.bf16.msra.mxu0 %v1003
    %1732 = vmatprep.subr.bf16.mxu0 %v1012
    %1733 = vmatpush1.bf16.msra.mxu0 %v1011
    %1734 = vmatprep.subr.bf16.mxu0 %v1020
    %1735 = vmatpush1.bf16.msra.mxu0 %v1019
    %1736 = vmatprep.subr.bf16.mxu0 %v1028
    %1737 = vmatpush1.bf16.msra.mxu0 %v1027
    %1738 = vmatprep.subr.bf16.mxu0 %v1036
    %1739 = vmatpush1.bf16.msra.mxu0 %v1035
    %1740 = vmatprep.subr.bf16.mxu0 %v1044
    %1741 = vmatpush1.bf16.msra.mxu0 %v1043
    %1742 = vmatprep.subr.bf16.mxu0 %v1052
    %1743 = vmatpush1.bf16.msra.mxu0 %v1051
    %1744 = vmatprep.subr.bf16.mxu0 %v1060
    %1745 = vmatpush1.bf16.msra.mxu0 %v1059
    %1746 = vmatprep.mubr.bf16.mxu0 %v1670
    %1747 = vmatmul.mubr.bf16.gmra.mrb[0].mxu0 %v1669
    %v1748 = vpop.f32.mrb[0].mxu0
    %v1749 = vadd.f32 0.0, %v1748
    %v1750 = vpop.f32.mrb[0].mxu0
    %v1751 = vadd.f32 0.0, %v1750
    %v1752 = vpop.f32.mrb[0].mxu0
    %v1753 = vpop.f32.mrb[0].mxu0
    %1754 = vdwg.mxu0
    %1755 = vmatprep.subr.bf16.mxu0 %v942
    %1756 = vmatpush1.bf16.msra.mxu0 %v941
    %1757 = vmatprep.subr.bf16.mxu0 %v950
    %1758 = vmatpush1.bf16.msra.mxu0 %v949
    %1759 = vmatprep.subr.bf16.mxu0 %v958
    %1760 = vmatpush1.bf16.msra.mxu0 %v957
    %1761 = vmatprep.subr.bf16.mxu0 %v966
    %1762 = vmatpush1.bf16.msra.mxu0 %v965
    %1763 = vmatprep.subr.bf16.mxu0 %v974
    %1764 = vmatpush1.bf16.msra.mxu0 %v973
    %1765 = vmatprep.subr.bf16.mxu0 %v982
    %1766 = vmatpush1.bf16.msra.mxu0 %v981
    %1767 = vmatprep.subr.bf16.mxu0 %v990
    %1768 = vmatpush1.bf16.msra.mxu0 %v989
    %1769 = vmatprep.subr.bf16.mxu0 %v998
    %1770 = vmatpush1.bf16.msra.mxu0 %v997
    %1771 = vmatprep.subr.bf16.mxu0 %v1006
    %1772 = vmatpush1.bf16.msra.mxu0 %v1005
    %1773 = vmatprep.subr.bf16.mxu0 %v1014
    %1774 = vmatpush1.bf16.msra.mxu0 %v1013
    %1775 = vmatprep.subr.bf16.mxu0 %v1022
    %1776 = vmatpush1.bf16.msra.mxu0 %v1021
    %1777 = vmatprep.subr.bf16.mxu0 %v1030
    %1778 = vmatpush1.bf16.msra.mxu0 %v1029
    %1779 = vmatprep.subr.bf16.mxu0 %v1038
    %1780 = vmatpush1.bf16.msra.mxu0 %v1037
    %1781 = vmatprep.subr.bf16.mxu0 %v1046
    %1782 = vmatpush1.bf16.msra.mxu0 %v1045
    %1783 = vmatprep.subr.bf16.mxu0 %v1054
    %1784 = vmatpush1.bf16.msra.mxu0 %v1053
    %1785 = vmatprep.subr.bf16.mxu0 %v1062
    %1786 = vmatpush1.bf16.msra.mxu0 %v1061
    %1787 = vmatprep.mubr.bf16.mxu0 %v1670
    %1788 = vmatmul.mubr.bf16.gmra.mrb[0].mxu0 %v1669
    %v1789 = vpop.f32.mrb[0].mxu0
    %v1790 = vadd.f32 0.0, %v1789
    %v1791 = vpop.f32.mrb[0].mxu0
    %v1792 = vadd.f32 0.0, %v1791
    %v1793 = vpop.f32.mrb[0].mxu0
    %v1794 = vpop.f32.mrb[0].mxu0
    %1795 = vdwg.mxu0
    %1796 = vmatprep.subr.bf16.mxu0 %v944
    %1797 = vmatpush1.bf16.msra.mxu0 %v943
    %1798 = vmatprep.subr.bf16.mxu0 %v952
    %1799 = vmatpush1.bf16.msra.mxu0 %v951
    %1800 = vmatprep.subr.bf16.mxu0 %v960
    %1801 = vmatpush1.bf16.msra.mxu0 %v959
    %1802 = vmatprep.subr.bf16.mxu0 %v968
    %1803 = vmatpush1.bf16.msra.mxu0 %v967
    %1804 = vmatprep.subr.bf16.mxu0 %v976
    %1805 = vmatpush1.bf16.msra.mxu0 %v975
    %1806 = vmatprep.subr.bf16.mxu0 %v984
    %1807 = vmatpush1.bf16.msra.mxu0 %v983
    %1808 = vmatprep.subr.bf16.mxu0 %v992
    %1809 = vmatpush1.bf16.msra.mxu0 %v991
    %1810 = vmatprep.subr.bf16.mxu0 %v1000
    %1811 = vmatpush1.bf16.msra.mxu0 %v999
    %1812 = vmatprep.subr.bf16.mxu0 %v1008
    %1813 = vmatpush1.bf16.msra.mxu0 %v1007
    %1814 = vmatprep.subr.bf16.mxu0 %v1016
    %1815 = vmatpush1.bf16.msra.mxu0 %v1015
    %1816 = vmatprep.subr.bf16.mxu0 %v1024
    %1817 = vmatpush1.bf16.msra.mxu0 %v1023
    %1818 = vmatprep.subr.bf16.mxu0 %v1032
    %1819 = vmatpush1.bf16.msra.mxu0 %v1031
    %1820 = vmatprep.subr.bf16.mxu0 %v1040
    %1821 = vmatpush1.bf16.msra.mxu0 %v1039
    %1822 = vmatprep.subr.bf16.mxu0 %v1048
    %1823 = vmatpush1.bf16.msra.mxu0 %v1047
    %1824 = vmatprep.subr.bf16.mxu0 %v1056
    %1825 = vmatpush1.bf16.msra.mxu0 %v1055
    %1826 = vmatprep.subr.bf16.mxu0 %v1064
    %1827 = vmatpush1.bf16.msra.mxu0 %v1063
    %1828 = vmatprep.mubr.bf16.mxu0 %v1670
    %1829 = vmatmul.mubr.bf16.gmra.mrb[0].mxu0 %v1669
    %v1830 = vpop.f32.mrb[0].mxu0
    %v1831 = vadd.f32 0.0, %v1830
    %v1832 = vpop.f32.mrb[0].mxu0
    %v1833 = vadd.f32 0.0, %v1832
    %v1834 = vpop.f32.mrb[0].mxu0
    %v1835 = vpop.f32.mrb[0].mxu0
    %1836 = vdwg.mxu0
    %v1845 = vrot.slane %v1708, 4
    %v1846 = vrot.slane %v1710, 4
    %v1847 = vrot.slane %v1749, 4
    %v1848 = vrot.slane %v1751, 4
    %v1849 = vrot.slane %v1790, 4
    %v1850 = vrot.slane %v1792, 4
    %v1851 = vrot.slane %v1831, 4
    %v1852 = vrot.slane %v1833, 4
    %v1861 = vadd.f32 %v184, %v1845
    %v1862 = vadd.f32 %v186, %v1846
    %v1863 = vadd.f32 %v261, %v1847
    %v1864 = vadd.f32 %v263, %v1848
    %v1865 = vadd.f32 %v338, %v1849
    %v1866 = vadd.f32 %v340, %v1850
    %v1867 = vadd.f32 %v415, %v1851
    %v1868 = vadd.f32 %v417, %v1852
    %v1869 = vxor.u32 %v1861, 2147483648
    %v1870 = vxor.u32 %v1862, 2147483648
    %v1871 = vxor.u32 %v1863, 2147483648
    %v1872 = vxor.u32 %v1864, 2147483648
    %v1873 = vxor.u32 %v1865, 2147483648
    %v1874 = vxor.u32 %v1866, 2147483648
    %v1875 = vmul.f32 %v1869, 1.442695
    %v1876 = vpow.pop %v1875
    %v1877 = vmul.f32 %v1870, 1.442695
    %v1878 = vpow.pop %v1877
    %v1879 = vmul.f32 %v1871, 1.442695
    %v1880 = vpow.pop %v1879
    %v1881 = vmul.f32 %v1872, 1.442695
    %v1882 = vpow.pop %v1881
    %v1883 = vmul.f32 %v1873, 1.442695
    %v1884 = vpow.pop %v1883
    %v1885 = vmul.f32 %v1874, 1.442695
    %v1886 = vpow.pop %v1885
    %v1887 = vadd.f32 %v1876, 1.0
    %v1888 = vadd.f32 %v1878, 1.0
    %v1889 = vadd.f32 %v1880, 1.0
    %v1890 = vadd.f32 %v1882, 1.0
    %v1891 = vadd.f32 %v1884, 1.0
    %v1892 = vadd.f32 %v1886, 1.0
    %v1893 = vrcp.pop %v1887
    %v1894 = vmul.f32 1.0, %v1893
    %v1895 = vrcp.pop %v1888
    %v1896 = vmul.f32 1.0, %v1895
    %v1897 = vrcp.pop %v1889
    %v1898 = vmul.f32 1.0, %v1897
    %v1899 = vrcp.pop %v1890
    %v1900 = vmul.f32 1.0, %v1899
    %v1901 = vrcp.pop %v1891
    %v1902 = vmul.f32 1.0, %v1901
    %v1903 = vrcp.pop %v1892
    %v1904 = vmul.f32 1.0, %v1903
    %v1905 = vtanh.pop %v1867
    %v1906 = vtanh.pop %v1868
    %v1909 = vrot.slane %v1659, 6
    %v1910 = vrot.slane %v1660, 6
    %v1913 = vmul.f32 %v1898, %v1909
    %v1914 = vmul.f32 %v1900, %v1910
    %v1915 = vmul.f32 %v1894, %v1905
    %v1916 = vmul.f32 %v1896, %v1906
    %v1917 = vadd.f32 %v1913, %v1915
    %v1918 = vadd.f32 %v1914, %v1916
    %v1919 = vtanh.pop %v1917
    %v1920 = vtanh.pop %v1918
    %v1921 = vmul.f32 %v1902, %v1919
    %v1922 = vmul.f32 %v1904, %v1920
    %v1923 = vpack.c.bf16 %v1921, %v1921
    %v1924 = vpack.c.bf16 %v1922, %v1922
    %v1927 = vrot.slane %v1923, 2
    %v1928 = vrot.slane %v1924, 2
    %1931 = vmatprep.subr.bf16.mxu0 %v938
    %1932 = vmatpush1.bf16.msra.mxu0 %v937
    %1933 = vmatprep.subr.bf16.mxu0 %v946
    %1934 = vmatpush1.bf16.msra.mxu0 %v945
    %1935 = vmatprep.subr.bf16.mxu0 %v954
    %1936 = vmatpush1.bf16.msra.mxu0 %v953
    %1937 = vmatprep.subr.bf16.mxu0 %v962
    %1938 = vmatpush1.bf16.msra.mxu0 %v961
    %1939 = vmatprep.subr.bf16.mxu0 %v970
    %1940 = vmatpush1.bf16.msra.mxu0 %v969
    %1941 = vmatprep.subr.bf16.mxu0 %v978
    %1942 = vmatpush1.bf16.msra.mxu0 %v977
    %1943 = vmatprep.subr.bf16.mxu0 %v986
    %1944 = vmatpush1.bf16.msra.mxu0 %v985
    %1945 = vmatprep.subr.bf16.mxu0 %v994
    %1946 = vmatpush1.bf16.msra.mxu0 %v993
    %1947 = vmatprep.subr.bf16.mxu0 %v1002
    %1948 = vmatpush1.bf16.msra.mxu0 %v1001
    %1949 = vmatprep.subr.bf16.mxu0 %v1010
    %1950 = vmatpush1.bf16.msra.mxu0 %v1009
    %1951 = vmatprep.subr.bf16.mxu0 %v1018
    %1952 = vmatpush1.bf16.msra.mxu0 %v1017
    %1953 = vmatprep.subr.bf16.mxu0 %v1026
    %1954 = vmatpush1.bf16.msra.mxu0 %v1025
    %1955 = vmatprep.subr.bf16.mxu0 %v1034
    %1956 = vmatpush1.bf16.msra.mxu0 %v1033
    %1957 = vmatprep.subr.bf16.mxu0 %v1042
    %1958 = vmatpush1.bf16.msra.mxu0 %v1041
    %1959 = vmatprep.subr.bf16.mxu0 %v1050
    %1960 = vmatpush1.bf16.msra.mxu0 %v1049
    %1961 = vmatprep.subr.bf16.mxu0 %v1058
    %1962 = vmatpush1.bf16.msra.mxu0 %v1057
    %1963 = vmatprep.mubr.bf16.mxu0 %v1928
    %1964 = vmatmul.mubr.bf16.gmra.mrb[0].mxu0 %v1927
    %v1965 = vpop.f32.mrb[0].mxu0
    %v1966 = vadd.f32 0.0, %v1965
    %v1967 = vpop.f32.mrb[0].mxu0
    %v1968 = vadd.f32 0.0, %v1967
    %v1969 = vpop.f32.mrb[0].mxu0
    %v1970 = vpop.f32.mrb[0].mxu0
    %1971 = vdwg.mxu0
    %1972 = vmatprep.subr.bf16.mxu0 %v940
    %1973 = vmatpush1.bf16.msra.mxu0 %v939
    %1974 = vmatprep.subr.bf16.mxu0 %v948
    %1975 = vmatpush1.bf16.msra.mxu0 %v947
    %1976 = vmatprep.subr.bf16.mxu0 %v956
    %1977 = vmatpush1.bf16.msra.mxu0 %v955
    %1978 = vmatprep.subr.bf16.mxu0 %v964
    %1979 = vmatpush1.bf16.msra.mxu0 %v963
    %1980 = vmatprep.subr.bf16.mxu0 %v972
    %1981 = vmatpush1.bf16.msra.mxu0 %v971
    %1982 = vmatprep.subr.bf16.mxu0 %v980
    %1983 = vmatpush1.bf16.msra.mxu0 %v979
    %1984 = vmatprep.subr.bf16.mxu0 %v988
    %1985 = vmatpush1.bf16.msra.mxu0 %v987
    %1986 = vmatprep.subr.bf16.mxu0 %v996
    %1987 = vmatpush1.bf16.msra.mxu0 %v995
    %1988 = vmatprep.subr.bf16.mxu0 %v1004
    %1989 = vmatpush1.bf16.msra.mxu0 %v1003
    %1990 = vmatprep.subr.bf16.mxu0 %v1012
    %1991 = vmatpush1.bf16.msra.mxu0 %v1011
    %1992 = vmatprep.subr.bf16.mxu0 %v1020
    %1993 = vmatpush1.bf16.msra.mxu0 %v1019
    %1994 = vmatprep.subr.bf16.mxu0 %v1028
    %1995 = vmatpush1.bf16.msra.mxu0 %v1027
    %1996 = vmatprep.subr.bf16.mxu0 %v1036
    %1997 = vmatpush1.bf16.msra.mxu0 %v1035
    %1998 = vmatprep.subr.bf16.mxu0 %v1044
    %1999 = vmatpush1.bf16.msra.mxu0 %v1043
    %2000 = vmatprep.subr.bf16.mxu0 %v1052
    %2001 = vmatpush1.bf16.msra.mxu0 %v1051
    %2002 = vmatprep.subr.bf16.mxu0 %v1060
    %2003 = vmatpush1.bf16.msra.mxu0 %v1059
    %2004 = vmatprep.mubr.bf16.mxu0 %v1928
    %2005 = vmatmul.mubr.bf16.gmra.mrb[0].mxu0 %v1927
    %v2006 = vpop.f32.mrb[0].mxu0
    %v2007 = vadd.f32 0.0, %v2006
    %v2008 = vpop.f32.mrb[0].mxu0
    %v2009 = vadd.f32 0.0, %v2008
    %v2010 = vpop.f32.mrb[0].mxu0
    %v2011 = vpop.f32.mrb[0].mxu0
    %2012 = vdwg.mxu0
    %2013 = vmatprep.subr.bf16.mxu0 %v942
    %2014 = vmatpush1.bf16.msra.mxu0 %v941
    %2015 = vmatprep.subr.bf16.mxu0 %v950
    %2016 = vmatpush1.bf16.msra.mxu0 %v949
    %2017 = vmatprep.subr.bf16.mxu0 %v958
    %2018 = vmatpush1.bf16.msra.mxu0 %v957
    %2019 = vmatprep.subr.bf16.mxu0 %v966
    %2020 = vmatpush1.bf16.msra.mxu0 %v965
    %2021 = vmatprep.subr.bf16.mxu0 %v974
    %2022 = vmatpush1.bf16.msra.mxu0 %v973
    %2023 = vmatprep.subr.bf16.mxu0 %v982
    %2024 = vmatpush1.bf16.msra.mxu0 %v981
    %2025 = vmatprep.subr.bf16.mxu0 %v990
    %2026 = vmatpush1.bf16.msra.mxu0 %v989
    %2027 = vmatprep.subr.bf16.mxu0 %v998
    %2028 = vmatpush1.bf16.msra.mxu0 %v997
    %2029 = vmatprep.subr.bf16.mxu0 %v1006
    %2030 = vmatpush1.bf16.msra.mxu0 %v1005
    %2031 = vmatprep.subr.bf16.mxu0 %v1014
    %2032 = vmatpush1.bf16.msra.mxu0 %v1013
    %2033 = vmatprep.subr.bf16.mxu0 %v1022
    %2034 = vmatpush1.bf16.msra.mxu0 %v1021
    %2035 = vmatprep.subr.bf16.mxu0 %v1030
    %2036 = vmatpush1.bf16.msra.mxu0 %v1029
    %2037 = vmatprep.subr.bf16.mxu0 %v1038
    %2038 = vmatpush1.bf16.msra.mxu0 %v1037
    %2039 = vmatprep.subr.bf16.mxu0 %v1046
    %2040 = vmatpush1.bf16.msra.mxu0 %v1045
    %2041 = vmatprep.subr.bf16.mxu0 %v1054
    %2042 = vmatpush1.bf16.msra.mxu0 %v1053
    %2043 = vmatprep.subr.bf16.mxu0 %v1062
    %2044 = vmatpush1.bf16.msra.mxu0 %v1061
    %2045 = vmatprep.mubr.bf16.mxu0 %v1928
    %2046 = vmatmul.mubr.bf16.gmra.mrb[0].mxu0 %v1927
    %v2047 = vpop.f32.mrb[0].mxu0
    %v2048 = vadd.f32 0.0, %v2047
    %v2049 = vpop.f32.mrb[0].mxu0
    %v2050 = vadd.f32 0.0, %v2049
    %v2051 = vpop.f32.mrb[0].mxu0
    %v2052 = vpop.f32.mrb[0].mxu0
    %2053 = vdwg.mxu0
    %2054 = vmatprep.subr.bf16.mxu0 %v944
    %2055 = vmatpush1.bf16.msra.mxu0 %v943
    %2056 = vmatprep.subr.bf16.mxu0 %v952
    %2057 = vmatpush1.bf16.msra.mxu0 %v951
    %2058 = vmatprep.subr.bf16.mxu0 %v960
    %2059 = vmatpush1.bf16.msra.mxu0 %v959
    %2060 = vmatprep.subr.bf16.mxu0 %v968
    %2061 = vmatpush1.bf16.msra.mxu0 %v967
    %2062 = vmatprep.subr.bf16.mxu0 %v976
    %2063 = vmatpush1.bf16.msra.mxu0 %v975
    %2064 = vmatprep.subr.bf16.mxu0 %v984
    %2065 = vmatpush1.bf16.msra.mxu0 %v983
    %2066 = vmatprep.subr.bf16.mxu0 %v992
    %2067 = vmatpush1.bf16.msra.mxu0 %v991
    %2068 = vmatprep.subr.bf16.mxu0 %v1000
    %2069 = vmatpush1.bf16.msra.mxu0 %v999
    %2070 = vmatprep.subr.bf16.mxu0 %v1008
    %2071 = vmatpush1.bf16.msra.mxu0 %v1007
    %2072 = vmatprep.subr.bf16.mxu0 %v1016
    %2073 = vmatpush1.bf16.msra.mxu0 %v1015
    %2074 = vmatprep.subr.bf16.mxu0 %v1024
    %2075 = vmatpush1.bf16.msra.mxu0 %v1023
    %2076 = vmatprep.subr.bf16.mxu0 %v1032
    %2077 = vmatpush1.bf16.msra.mxu0 %v1031
    %2078 = vmatprep.subr.bf16.mxu0 %v1040
    %2079 = vmatpush1.bf16.msra.mxu0 %v1039
    %2080 = vmatprep.subr.bf16.mxu0 %v1048
    %2081 = vmatpush1.bf16.msra.mxu0 %v1047
    %2082 = vmatprep.subr.bf16.mxu0 %v1056
    %2083 = vmatpush1.bf16.msra.mxu0 %v1055
    %2084 = vmatprep.subr.bf16.mxu0 %v1064
    %2085 = vmatpush1.bf16.msra.mxu0 %v1063
    %2086 = vmatprep.mubr.bf16.mxu0 %v1928
    %2087 = vmatmul.mubr.bf16.gmra.mrb[0].mxu0 %v1927
    %v2088 = vpop.f32.mrb[0].mxu0
    %v2089 = vadd.f32 0.0, %v2088
    %v2090 = vpop.f32.mrb[0].mxu0
    %v2091 = vadd.f32 0.0, %v2090
    %v2092 = vpop.f32.mrb[0].mxu0
    %v2093 = vpop.f32.mrb[0].mxu0
    %2094 = vdwg.mxu0
    %v2103 = vrot.slane %v1966, 2
    %v2104 = vrot.slane %v1968, 2
    %v2105 = vrot.slane %v2007, 2
    %v2106 = vrot.slane %v2009, 2
    %v2107 = vrot.slane %v2048, 2
    %v2108 = vrot.slane %v2050, 2
    %v2109 = vrot.slane %v2089, 2
    %v2110 = vrot.slane %v2091, 2
    %v2119 = vadd.f32 %v184, %v2103
    %v2120 = vadd.f32 %v186, %v2104
    %v2121 = vadd.f32 %v261, %v2105
    %v2122 = vadd.f32 %v263, %v2106
    %v2123 = vadd.f32 %v338, %v2107
    %v2124 = vadd.f32 %v340, %v2108
    %v2125 = vadd.f32 %v415, %v2109
    %v2126 = vadd.f32 %v417, %v2110
    %v2127 = vxor.u32 %v2119, 2147483648
    %v2128 = vxor.u32 %v2120, 2147483648
    %v2129 = vxor.u32 %v2121, 2147483648
    %v2130 = vxor.u32 %v2122, 2147483648
    %v2131 = vxor.u32 %v2123, 2147483648
    %v2132 = vxor.u32 %v2124, 2147483648
    %v2133 = vmul.f32 %v2127, 1.442695
    %v2134 = vpow.pop %v2133
    %v2135 = vmul.f32 %v2128, 1.442695
    %v2136 = vpow.pop %v2135
    %v2137 = vmul.f32 %v2129, 1.442695
    %v2138 = vpow.pop %v2137
    %v2139 = vmul.f32 %v2130, 1.442695
    %v2140 = vpow.pop %v2139
    %v2141 = vmul.f32 %v2131, 1.442695
    %v2142 = vpow.pop %v2141
    %v2143 = vmul.f32 %v2132, 1.442695
    %v2144 = vpow.pop %v2143
    %v2145 = vadd.f32 %v2134, 1.0
    %v2146 = vadd.f32 %v2136, 1.0
    %v2147 = vadd.f32 %v2138, 1.0
    %v2148 = vadd.f32 %v2140, 1.0
    %v2149 = vadd.f32 %v2142, 1.0
    %v2150 = vadd.f32 %v2144, 1.0
    %v2151 = vrcp.pop %v2145
    %v2152 = vmul.f32 1.0, %v2151
    %v2153 = vrcp.pop %v2146
    %v2154 = vmul.f32 1.0, %v2153
    %v2155 = vrcp.pop %v2147
    %v2156 = vmul.f32 1.0, %v2155
    %v2157 = vrcp.pop %v2148
    %v2158 = vmul.f32 1.0, %v2157
    %v2159 = vrcp.pop %v2149
    %v2160 = vmul.f32 1.0, %v2159
    %v2161 = vrcp.pop %v2150
    %v2162 = vmul.f32 1.0, %v2161
    %v2163 = vtanh.pop %v2125
    %v2164 = vtanh.pop %v2126
    %v2167 = vrot.slane %v1917, 6
    %v2168 = vrot.slane %v1918, 6
    %v2171 = vmul.f32 %v2156, %v2167
    %v2172 = vmul.f32 %v2158, %v2168
    %v2173 = vmul.f32 %v2152, %v2163
    %v2174 = vmul.f32 %v2154, %v2164
    %v2175 = vadd.f32 %v2171, %v2173
    %v2176 = vadd.f32 %v2172, %v2174
    %v2177 = vtanh.pop %v2175
    %v2178 = vtanh.pop %v2176
    %v2179 = vmul.f32 %v2160, %v2177
    %v2180 = vmul.f32 %v2162, %v2178
    %v2181 = vpack.c.bf16 %v2179, %v2179
    %v2182 = vpack.c.bf16 %v2180, %v2180
    %v2185 = vrot.slane %v2181, 3
    %v2186 = vrot.slane %v2182, 3
    %2189 = vmatprep.subr.bf16.mxu0 %v938
    %2190 = vmatpush1.bf16.msra.mxu0 %v937
    %2191 = vmatprep.subr.bf16.mxu0 %v946
    %2192 = vmatpush1.bf16.msra.mxu0 %v945
    %2193 = vmatprep.subr.bf16.mxu0 %v954
    %2194 = vmatpush1.bf16.msra.mxu0 %v953
    %2195 = vmatprep.subr.bf16.mxu0 %v962
    %2196 = vmatpush1.bf16.msra.mxu0 %v961
    %2197 = vmatprep.subr.bf16.mxu0 %v970
    %2198 = vmatpush1.bf16.msra.mxu0 %v969
    %2199 = vmatprep.subr.bf16.mxu0 %v978
    %2200 = vmatpush1.bf16.msra.mxu0 %v977
    %2201 = vmatprep.subr.bf16.mxu0 %v986
    %2202 = vmatpush1.bf16.msra.mxu0 %v985
    %2203 = vmatprep.subr.bf16.mxu0 %v994
    %2204 = vmatpush1.bf16.msra.mxu0 %v993
    %2205 = vmatprep.subr.bf16.mxu0 %v1002
    %2206 = vmatpush1.bf16.msra.mxu0 %v1001
    %2207 = vmatprep.subr.bf16.mxu0 %v1010
    %2208 = vmatpush1.bf16.msra.mxu0 %v1009
    %2209 = vmatprep.subr.bf16.mxu0 %v1018
    %2210 = vmatpush1.bf16.msra.mxu0 %v1017
    %2211 = vmatprep.subr.bf16.mxu0 %v1026
    %2212 = vmatpush1.bf16.msra.mxu0 %v1025
    %2213 = vmatprep.subr.bf16.mxu0 %v1034
    %2214 = vmatpush1.bf16.msra.mxu0 %v1033
    %2215 = vmatprep.subr.bf16.mxu0 %v1042
    %2216 = vmatpush1.bf16.msra.mxu0 %v1041
    %2217 = vmatprep.subr.bf16.mxu0 %v1050
    %2218 = vmatpush1.bf16.msra.mxu0 %v1049
    %2219 = vmatprep.subr.bf16.mxu0 %v1058
    %2220 = vmatpush1.bf16.msra.mxu0 %v1057
    %2221 = vmatprep.mubr.bf16.mxu0 %v2186
    %2222 = vmatmul.mubr.bf16.gmra.mrb[0].mxu0 %v2185
    %v2223 = vpop.f32.mrb[0].mxu0
    %v2224 = vadd.f32 0.0, %v2223
    %v2225 = vpop.f32.mrb[0].mxu0
    %v2226 = vadd.f32 0.0, %v2225
    %v2227 = vpop.f32.mrb[0].mxu0
    %v2228 = vpop.f32.mrb[0].mxu0
    %2229 = vdwg.mxu0
    %2230 = vmatprep.subr.bf16.mxu0 %v940
    %2231 = vmatpush1.bf16.msra.mxu0 %v939
    %2232 = vmatprep.subr.bf16.mxu0 %v948
    %2233 = vmatpush1.bf16.msra.mxu0 %v947
    %2234 = vmatprep.subr.bf16.mxu0 %v956
    %2235 = vmatpush1.bf16.msra.mxu0 %v955
    %2236 = vmatprep.subr.bf16.mxu0 %v964
    %2237 = vmatpush1.bf16.msra.mxu0 %v963
    %2238 = vmatprep.subr.bf16.mxu0 %v972
    %2239 = vmatpush1.bf16.msra.mxu0 %v971
    %2240 = vmatprep.subr.bf16.mxu0 %v980
    %2241 = vmatpush1.bf16.msra.mxu0 %v979
    %2242 = vmatprep.subr.bf16.mxu0 %v988
    %2243 = vmatpush1.bf16.msra.mxu0 %v987
    %2244 = vmatprep.subr.bf16.mxu0 %v996
    %2245 = vmatpush1.bf16.msra.mxu0 %v995
    %2246 = vmatprep.subr.bf16.mxu0 %v1004
    %2247 = vmatpush1.bf16.msra.mxu0 %v1003
    %2248 = vmatprep.subr.bf16.mxu0 %v1012
    %2249 = vmatpush1.bf16.msra.mxu0 %v1011
    %2250 = vmatprep.subr.bf16.mxu0 %v1020
    %2251 = vmatpush1.bf16.msra.mxu0 %v1019
    %2252 = vmatprep.subr.bf16.mxu0 %v1028
    %2253 = vmatpush1.bf16.msra.mxu0 %v1027
    %2254 = vmatprep.subr.bf16.mxu0 %v1036
    %2255 = vmatpush1.bf16.msra.mxu0 %v1035
    %2256 = vmatprep.subr.bf16.mxu0 %v1044
    %2257 = vmatpush1.bf16.msra.mxu0 %v1043
    %2258 = vmatprep.subr.bf16.mxu0 %v1052
    %2259 = vmatpush1.bf16.msra.mxu0 %v1051
    %2260 = vmatprep.subr.bf16.mxu0 %v1060
    %2261 = vmatpush1.bf16.msra.mxu0 %v1059
    %2262 = vmatprep.mubr.bf16.mxu0 %v2186
    %2263 = vmatmul.mubr.bf16.gmra.mrb[0].mxu0 %v2185
    %v2264 = vpop.f32.mrb[0].mxu0
    %v2265 = vadd.f32 0.0, %v2264
    %v2266 = vpop.f32.mrb[0].mxu0
    %v2267 = vadd.f32 0.0, %v2266
    %v2268 = vpop.f32.mrb[0].mxu0
    %v2269 = vpop.f32.mrb[0].mxu0
    %2270 = vdwg.mxu0
    %2271 = vmatprep.subr.bf16.mxu0 %v942
    %2272 = vmatpush1.bf16.msra.mxu0 %v941
    %2273 = vmatprep.subr.bf16.mxu0 %v950
    %2274 = vmatpush1.bf16.msra.mxu0 %v949
    %2275 = vmatprep.subr.bf16.mxu0 %v958
    %2276 = vmatpush1.bf16.msra.mxu0 %v957
    %2277 = vmatprep.subr.bf16.mxu0 %v966
    %2278 = vmatpush1.bf16.msra.mxu0 %v965
    %2279 = vmatprep.subr.bf16.mxu0 %v974
    %2280 = vmatpush1.bf16.msra.mxu0 %v973
    %2281 = vmatprep.subr.bf16.mxu0 %v982
    %2282 = vmatpush1.bf16.msra.mxu0 %v981
    %2283 = vmatprep.subr.bf16.mxu0 %v990
    %2284 = vmatpush1.bf16.msra.mxu0 %v989
    %2285 = vmatprep.subr.bf16.mxu0 %v998
    %2286 = vmatpush1.bf16.msra.mxu0 %v997
    %2287 = vmatprep.subr.bf16.mxu0 %v1006
    %2288 = vmatpush1.bf16.msra.mxu0 %v1005
    %2289 = vmatprep.subr.bf16.mxu0 %v1014
    %2290 = vmatpush1.bf16.msra.mxu0 %v1013
    %2291 = vmatprep.subr.bf16.mxu0 %v1022
    %2292 = vmatpush1.bf16.msra.mxu0 %v1021
    %2293 = vmatprep.subr.bf16.mxu0 %v1030
    %2294 = vmatpush1.bf16.msra.mxu0 %v1029
    %2295 = vmatprep.subr.bf16.mxu0 %v1038
    %2296 = vmatpush1.bf16.msra.mxu0 %v1037
    %2297 = vmatprep.subr.bf16.mxu0 %v1046
    %2298 = vmatpush1.bf16.msra.mxu0 %v1045
    %2299 = vmatprep.subr.bf16.mxu0 %v1054
    %2300 = vmatpush1.bf16.msra.mxu0 %v1053
    %2301 = vmatprep.subr.bf16.mxu0 %v1062
    %2302 = vmatpush1.bf16.msra.mxu0 %v1061
    %2303 = vmatprep.mubr.bf16.mxu0 %v2186
    %2304 = vmatmul.mubr.bf16.gmra.mrb[0].mxu0 %v2185
    %v2305 = vpop.f32.mrb[0].mxu0
    %v2306 = vadd.f32 0.0, %v2305
    %v2307 = vpop.f32.mrb[0].mxu0
    %v2308 = vadd.f32 0.0, %v2307
    %v2309 = vpop.f32.mrb[0].mxu0
    %v2310 = vpop.f32.mrb[0].mxu0
    %2311 = vdwg.mxu0
    %2312 = vmatprep.subr.bf16.mxu0 %v944
    %2313 = vmatpush1.bf16.msra.mxu0 %v943
    %2314 = vmatprep.subr.bf16.mxu0 %v952
    %2315 = vmatpush1.bf16.msra.mxu0 %v951
    %2316 = vmatprep.subr.bf16.mxu0 %v960
    %2317 = vmatpush1.bf16.msra.mxu0 %v959
    %2318 = vmatprep.subr.bf16.mxu0 %v968
    %2319 = vmatpush1.bf16.msra.mxu0 %v967
    %2320 = vmatprep.subr.bf16.mxu0 %v976
    %2321 = vmatpush1.bf16.msra.mxu0 %v975
    %2322 = vmatprep.subr.bf16.mxu0 %v984
    %2323 = vmatpush1.bf16.msra.mxu0 %v983
    %2324 = vmatprep.subr.bf16.mxu0 %v992
    %2325 = vmatpush1.bf16.msra.mxu0 %v991
    %2326 = vmatprep.subr.bf16.mxu0 %v1000
    %2327 = vmatpush1.bf16.msra.mxu0 %v999
    %2328 = vmatprep.subr.bf16.mxu0 %v1008
    %2329 = vmatpush1.bf16.msra.mxu0 %v1007
    %2330 = vmatprep.subr.bf16.mxu0 %v1016
    %2331 = vmatpush1.bf16.msra.mxu0 %v1015
    %2332 = vmatprep.subr.bf16.mxu0 %v1024
    %2333 = vmatpush1.bf16.msra.mxu0 %v1023
    %2334 = vmatprep.subr.bf16.mxu0 %v1032
    %2335 = vmatpush1.bf16.msra.mxu0 %v1031
    %2336 = vmatprep.subr.bf16.mxu0 %v1040
    %2337 = vmatpush1.bf16.msra.mxu0 %v1039
    %2338 = vmatprep.subr.bf16.mxu0 %v1048
    %2339 = vmatpush1.bf16.msra.mxu0 %v1047
    %2340 = vmatprep.subr.bf16.mxu0 %v1056
    %2341 = vmatpush1.bf16.msra.mxu0 %v1055
    %2342 = vmatprep.subr.bf16.mxu0 %v1064
    %2343 = vmatpush1.bf16.msra.mxu0 %v1063
    %2344 = vmatprep.mubr.bf16.mxu0 %v2186
    %2345 = vmatmul.mubr.bf16.gmra.mrb[0].mxu0 %v2185
    %v2346 = vpop.f32.mrb[0].mxu0
    %v2347 = vadd.f32 0.0, %v2346
    %v2348 = vpop.f32.mrb[0].mxu0
    %v2349 = vadd.f32 0.0, %v2348
    %v2350 = vpop.f32.mrb[0].mxu0
    %v2351 = vpop.f32.mrb[0].mxu0
    %2352 = vdwg.mxu0
    %v2353 = vadd.f32 %v190, %v2224
    %v2354 = vadd.f32 %v192, %v2226
    %v2355 = vadd.f32 %v267, %v2265
    %v2356 = vadd.f32 %v269, %v2267
    %v2357 = vadd.f32 %v344, %v2306
    %v2358 = vadd.f32 %v346, %v2308
    %v2359 = vadd.f32 %v421, %v2347
    %v2360 = vadd.f32 %v423, %v2349
    %v2361 = vxor.u32 %v2353, 2147483648
    %v2362 = vxor.u32 %v2354, 2147483648
    %v2363 = vxor.u32 %v2355, 2147483648
    %v2364 = vxor.u32 %v2356, 2147483648
    %v2365 = vxor.u32 %v2357, 2147483648
    %v2366 = vxor.u32 %v2358, 2147483648
    %v2367 = vmul.f32 %v2361, 1.442695
    %v2368 = vpow.pop %v2367
    %v2369 = vmul.f32 %v2362, 1.442695
    %v2370 = vpow.pop %v2369
    %v2371 = vmul.f32 %v2363, 1.442695
    %v2372 = vpow.pop %v2371
    %v2373 = vmul.f32 %v2364, 1.442695
    %v2374 = vpow.pop %v2373
    %v2375 = vmul.f32 %v2365, 1.442695
    %v2376 = vpow.pop %v2375
    %v2377 = vmul.f32 %v2366, 1.442695
    %v2378 = vpow.pop %v2377
    %v2379 = vadd.f32 %v2368, 1.0
    %v2380 = vadd.f32 %v2370, 1.0
    %v2381 = vadd.f32 %v2372, 1.0
    %v2382 = vadd.f32 %v2374, 1.0
    %v2383 = vadd.f32 %v2376, 1.0
    %v2384 = vadd.f32 %v2378, 1.0
    %v2385 = vrcp.pop %v2379
    %v2386 = vmul.f32 1.0, %v2385
    %v2387 = vrcp.pop %v2380
    %v2388 = vmul.f32 1.0, %v2387
    %v2389 = vrcp.pop %v2381
    %v2390 = vmul.f32 1.0, %v2389
    %v2391 = vrcp.pop %v2382
    %v2392 = vmul.f32 1.0, %v2391
    %v2393 = vrcp.pop %v2383
    %v2394 = vmul.f32 1.0, %v2393
    %v2395 = vrcp.pop %v2384
    %v2396 = vmul.f32 1.0, %v2395
    %v2397 = vtanh.pop %v2359
    %v2398 = vtanh.pop %v2360
    %v2401 = vrot.slane %v2175, 6
    %v2402 = vrot.slane %v2176, 6
    %v2405 = vmul.f32 %v2390, %v2401
    %v2406 = vmul.f32 %v2392, %v2402
    %v2407 = vmul.f32 %v2386, %v2397
    %v2408 = vmul.f32 %v2388, %v2398
    %v2409 = vadd.f32 %v2405, %v2407
    %v2410 = vadd.f32 %v2406, %v2408
    %v2411 = vtanh.pop %v2409
    %v2412 = vtanh.pop %v2410
    %v2413 = vmul.f32 %v2394, %v2411
    %v2414 = vmul.f32 %v2396, %v2412
    %v2415 = vpack.c.bf16 %v2413, %v2413
    %v2416 = vpack.c.bf16 %v2414, %v2414
    %2417 = vmatprep.subr.bf16.mxu0 %v938
    %2418 = vmatpush1.bf16.msra.mxu0 %v937
    %2419 = vmatprep.subr.bf16.mxu0 %v946
    %2420 = vmatpush1.bf16.msra.mxu0 %v945
    %2421 = vmatprep.subr.bf16.mxu0 %v954
    %2422 = vmatpush1.bf16.msra.mxu0 %v953
    %2423 = vmatprep.subr.bf16.mxu0 %v962
    %2424 = vmatpush1.bf16.msra.mxu0 %v961
    %2425 = vmatprep.subr.bf16.mxu0 %v970
    %2426 = vmatpush1.bf16.msra.mxu0 %v969
    %2427 = vmatprep.subr.bf16.mxu0 %v978
    %2428 = vmatpush1.bf16.msra.mxu0 %v977
    %2429 = vmatprep.subr.bf16.mxu0 %v986
    %2430 = vmatpush1.bf16.msra.mxu0 %v985
    %2431 = vmatprep.subr.bf16.mxu0 %v994
    %2432 = vmatpush1.bf16.msra.mxu0 %v993
    %2433 = vmatprep.subr.bf16.mxu0 %v1002
    %2434 = vmatpush1.bf16.msra.mxu0 %v1001
    %2435 = vmatprep.subr.bf16.mxu0 %v1010
    %2436 = vmatpush1.bf16.msra.mxu0 %v1009
    %2437 = vmatprep.subr.bf16.mxu0 %v1018
    %2438 = vmatpush1.bf16.msra.mxu0 %v1017
    %2439 = vmatprep.subr.bf16.mxu0 %v1026
    %2440 = vmatpush1.bf16.msra.mxu0 %v1025
    %2441 = vmatprep.subr.bf16.mxu0 %v1034
    %2442 = vmatpush1.bf16.msra.mxu0 %v1033
    %2443 = vmatprep.subr.bf16.mxu0 %v1042
    %2444 = vmatpush1.bf16.msra.mxu0 %v1041
    %2445 = vmatprep.subr.bf16.mxu0 %v1050
    %2446 = vmatpush1.bf16.msra.mxu0 %v1049
    %2447 = vmatprep.subr.bf16.mxu0 %v1058
    %2448 = vmatpush1.bf16.msra.mxu0 %v1057
    %2449 = vmatprep.mubr.bf16.mxu0 %v2416
    %2450 = vmatmul.mubr.bf16.gmra.mrb[0].mxu0 %v2415
    %v2451 = vpop.f32.mrb[0].mxu0
    %v2452 = vadd.f32 0.0, %v2451
    %v2453 = vpop.f32.mrb[0].mxu0
    %v2454 = vadd.f32 0.0, %v2453
    %v2455 = vpop.f32.mrb[0].mxu0
    %v2456 = vpop.f32.mrb[0].mxu0
    %2457 = vdwg.mxu0
    %2458 = vmatprep.subr.bf16.mxu0 %v940
    %2459 = vmatpush1.bf16.msra.mxu0 %v939
    %2460 = vmatprep.subr.bf16.mxu0 %v948
    %2461 = vmatpush1.bf16.msra.mxu0 %v947
    %2462 = vmatprep.subr.bf16.mxu0 %v956
    %2463 = vmatpush1.bf16.msra.mxu0 %v955
    %2464 = vmatprep.subr.bf16.mxu0 %v964
    %2465 = vmatpush1.bf16.msra.mxu0 %v963
    %2466 = vmatprep.subr.bf16.mxu0 %v972
    %2467 = vmatpush1.bf16.msra.mxu0 %v971
    %2468 = vmatprep.subr.bf16.mxu0 %v980
    %2469 = vmatpush1.bf16.msra.mxu0 %v979
    %2470 = vmatprep.subr.bf16.mxu0 %v988
    %2471 = vmatpush1.bf16.msra.mxu0 %v987
    %2472 = vmatprep.subr.bf16.mxu0 %v996
    %2473 = vmatpush1.bf16.msra.mxu0 %v995
    %2474 = vmatprep.subr.bf16.mxu0 %v1004
    %2475 = vmatpush1.bf16.msra.mxu0 %v1003
    %2476 = vmatprep.subr.bf16.mxu0 %v1012
    %2477 = vmatpush1.bf16.msra.mxu0 %v1011
    %2478 = vmatprep.subr.bf16.mxu0 %v1020
    %2479 = vmatpush1.bf16.msra.mxu0 %v1019
    %2480 = vmatprep.subr.bf16.mxu0 %v1028
    %2481 = vmatpush1.bf16.msra.mxu0 %v1027
    %2482 = vmatprep.subr.bf16.mxu0 %v1036
    %2483 = vmatpush1.bf16.msra.mxu0 %v1035
    %2484 = vmatprep.subr.bf16.mxu0 %v1044
    %2485 = vmatpush1.bf16.msra.mxu0 %v1043
    %2486 = vmatprep.subr.bf16.mxu0 %v1052
    %2487 = vmatpush1.bf16.msra.mxu0 %v1051
    %2488 = vmatprep.subr.bf16.mxu0 %v1060
    %2489 = vmatpush1.bf16.msra.mxu0 %v1059
    %2490 = vmatprep.mubr.bf16.mxu0 %v2416
    %2491 = vmatmul.mubr.bf16.gmra.mrb[0].mxu0 %v2415
    %v2492 = vpop.f32.mrb[0].mxu0
    %v2493 = vadd.f32 0.0, %v2492
    %v2494 = vpop.f32.mrb[0].mxu0
    %v2495 = vadd.f32 0.0, %v2494
    %v2496 = vpop.f32.mrb[0].mxu0
    %v2497 = vpop.f32.mrb[0].mxu0
    %2498 = vdwg.mxu0
    %2499 = vmatprep.subr.bf16.mxu0 %v942
    %2500 = vmatpush1.bf16.msra.mxu0 %v941
    %2501 = vmatprep.subr.bf16.mxu0 %v950
    %2502 = vmatpush1.bf16.msra.mxu0 %v949
    %2503 = vmatprep.subr.bf16.mxu0 %v958
    %2504 = vmatpush1.bf16.msra.mxu0 %v957
    %2505 = vmatprep.subr.bf16.mxu0 %v966
    %2506 = vmatpush1.bf16.msra.mxu0 %v965
    %2507 = vmatprep.subr.bf16.mxu0 %v974
    %2508 = vmatpush1.bf16.msra.mxu0 %v973
    %2509 = vmatprep.subr.bf16.mxu0 %v982
    %2510 = vmatpush1.bf16.msra.mxu0 %v981
    %2511 = vmatprep.subr.bf16.mxu0 %v990
    %2512 = vmatpush1.bf16.msra.mxu0 %v989
    %2513 = vmatprep.subr.bf16.mxu0 %v998
    %2514 = vmatpush1.bf16.msra.mxu0 %v997
    %2515 = vmatprep.subr.bf16.mxu0 %v1006
    %2516 = vmatpush1.bf16.msra.mxu0 %v1005
    %2517 = vmatprep.subr.bf16.mxu0 %v1014
    %2518 = vmatpush1.bf16.msra.mxu0 %v1013
    %2519 = vmatprep.subr.bf16.mxu0 %v1022
    %2520 = vmatpush1.bf16.msra.mxu0 %v1021
    %2521 = vmatprep.subr.bf16.mxu0 %v1030
    %2522 = vmatpush1.bf16.msra.mxu0 %v1029
    %2523 = vmatprep.subr.bf16.mxu0 %v1038
    %2524 = vmatpush1.bf16.msra.mxu0 %v1037
    %2525 = vmatprep.subr.bf16.mxu0 %v1046
    %2526 = vmatpush1.bf16.msra.mxu0 %v1045
    %2527 = vmatprep.subr.bf16.mxu0 %v1054
    %2528 = vmatpush1.bf16.msra.mxu0 %v1053
    %2529 = vmatprep.subr.bf16.mxu0 %v1062
    %2530 = vmatpush1.bf16.msra.mxu0 %v1061
    %2531 = vmatprep.mubr.bf16.mxu0 %v2416
    %2532 = vmatmul.mubr.bf16.gmra.mrb[0].mxu0 %v2415
    %v2533 = vpop.f32.mrb[0].mxu0
    %v2534 = vadd.f32 0.0, %v2533
    %v2535 = vpop.f32.mrb[0].mxu0
    %v2536 = vadd.f32 0.0, %v2535
    %v2537 = vpop.f32.mrb[0].mxu0
    %v2538 = vpop.f32.mrb[0].mxu0
    %2539 = vdwg.mxu0
    %2540 = vmatprep.subr.bf16.mxu0 %v944
    %2541 = vmatpush1.bf16.msra.mxu0 %v943
    %2542 = vmatprep.subr.bf16.mxu0 %v952
    %2543 = vmatpush1.bf16.msra.mxu0 %v951
    %2544 = vmatprep.subr.bf16.mxu0 %v960
    %2545 = vmatpush1.bf16.msra.mxu0 %v959
    %2546 = vmatprep.subr.bf16.mxu0 %v968
    %2547 = vmatpush1.bf16.msra.mxu0 %v967
    %2548 = vmatprep.subr.bf16.mxu0 %v976
    %2549 = vmatpush1.bf16.msra.mxu0 %v975
    %2550 = vmatprep.subr.bf16.mxu0 %v984
    %2551 = vmatpush1.bf16.msra.mxu0 %v983
    %2552 = vmatprep.subr.bf16.mxu0 %v992
    %2553 = vmatpush1.bf16.msra.mxu0 %v991
    %2554 = vmatprep.subr.bf16.mxu0 %v1000
    %2555 = vmatpush1.bf16.msra.mxu0 %v999
    %2556 = vmatprep.subr.bf16.mxu0 %v1008
    %2557 = vmatpush1.bf16.msra.mxu0 %v1007
    %2558 = vmatprep.subr.bf16.mxu0 %v1016
    %2559 = vmatpush1.bf16.msra.mxu0 %v1015
    %2560 = vmatprep.subr.bf16.mxu0 %v1024
    %2561 = vmatpush1.bf16.msra.mxu0 %v1023
    %2562 = vmatprep.subr.bf16.mxu0 %v1032
    %2563 = vmatpush1.bf16.msra.mxu0 %v1031
    %2564 = vmatprep.subr.bf16.mxu0 %v1040
    %2565 = vmatpush1.bf16.msra.mxu0 %v1039
    %2566 = vmatprep.subr.bf16.mxu0 %v1048
    %2567 = vmatpush1.bf16.msra.mxu0 %v1047
    %2568 = vmatprep.subr.bf16.mxu0 %v1056
    %2569 = vmatpush1.bf16.msra.mxu0 %v1055
    %2570 = vmatprep.subr.bf16.mxu0 %v1064
    %2571 = vmatpush1.bf16.msra.mxu0 %v1063
    %2572 = vmatprep.mubr.bf16.mxu0 %v2416
    %2573 = vmatmul.mubr.bf16.gmra.mrb[0].mxu0 %v2415
    %v2574 = vpop.f32.mrb[0].mxu0
    %v2575 = vadd.f32 0.0, %v2574
    %v2576 = vpop.f32.mrb[0].mxu0
    %v2577 = vadd.f32 0.0, %v2576
    %v2578 = vpop.f32.mrb[0].mxu0
    %v2579 = vpop.f32.mrb[0].mxu0
    %2580 = vdwg.mxu0
    %v2589 = vrot.slane %v2452, 6
    %v2590 = vrot.slane %v2454, 6
    %v2591 = vrot.slane %v2493, 6
    %v2592 = vrot.slane %v2495, 6
    %v2593 = vrot.slane %v2534, 6
    %v2594 = vrot.slane %v2536, 6
    %v2595 = vrot.slane %v2575, 6
    %v2596 = vrot.slane %v2577, 6
    %v2605 = vadd.f32 %v190, %v2589
    %v2606 = vadd.f32 %v192, %v2590
    %v2607 = vadd.f32 %v267, %v2591
    %v2608 = vadd.f32 %v269, %v2592
    %v2609 = vadd.f32 %v344, %v2593
    %v2610 = vadd.f32 %v346, %v2594
    %v2611 = vadd.f32 %v421, %v2595
    %v2612 = vadd.f32 %v423, %v2596
    %v2613 = vxor.u32 %v2605, 2147483648
    %v2614 = vxor.u32 %v2606, 2147483648
    %v2615 = vxor.u32 %v2607, 2147483648
    %v2616 = vxor.u32 %v2608, 2147483648
    %v2617 = vxor.u32 %v2609, 2147483648
    %v2618 = vxor.u32 %v2610, 2147483648
    %v2619 = vmul.f32 %v2613, 1.442695
    %v2620 = vpow.pop %v2619
    %v2621 = vmul.f32 %v2614, 1.442695
    %v2622 = vpow.pop %v2621
    %v2623 = vmul.f32 %v2615, 1.442695
    %v2624 = vpow.pop %v2623
    %v2625 = vmul.f32 %v2616, 1.442695
    %v2626 = vpow.pop %v2625
    %v2627 = vmul.f32 %v2617, 1.442695
    %v2628 = vpow.pop %v2627
    %v2629 = vmul.f32 %v2618, 1.442695
    %v2630 = vpow.pop %v2629
    %v2631 = vadd.f32 %v2620, 1.0
    %v2632 = vadd.f32 %v2622, 1.0
    %v2633 = vadd.f32 %v2624, 1.0
    %v2634 = vadd.f32 %v2626, 1.0
    %v2635 = vadd.f32 %v2628, 1.0
    %v2636 = vadd.f32 %v2630, 1.0
    %v2637 = vrcp.pop %v2631
    %v2638 = vmul.f32 1.0, %v2637
    %v2639 = vrcp.pop %v2632
    %v2640 = vmul.f32 1.0, %v2639
    %v2641 = vrcp.pop %v2633
    %v2642 = vmul.f32 1.0, %v2641
    %v2643 = vrcp.pop %v2634
    %v2644 = vmul.f32 1.0, %v2643
    %v2645 = vrcp.pop %v2635
    %v2646 = vmul.f32 1.0, %v2645
    %v2647 = vrcp.pop %v2636
    %v2648 = vmul.f32 1.0, %v2647
    %v2649 = vtanh.pop %v2611
    %v2650 = vtanh.pop %v2612
    %v2653 = vrot.slane %v2409, 6
    %v2654 = vrot.slane %v2410, 6
    %v2657 = vmul.f32 %v2642, %v2653
    %v2658 = vmul.f32 %v2644, %v2654
    %v2659 = vmul.f32 %v2638, %v2649
    %v2660 = vmul.f32 %v2640, %v2650
    %v2661 = vadd.f32 %v2657, %v2659
    %v2662 = vadd.f32 %v2658, %v2660
    %v2663 = vtanh.pop %v2661
    %v2664 = vtanh.pop %v2662
    %v2665 = vmul.f32 %v2646, %v2663
    %v2666 = vmul.f32 %v2648, %v2664
    %v2667 = vpack.c.bf16 %v2665, %v2665
    %v2668 = vpack.c.bf16 %v2666, %v2666
    %v2671 = vrot.slane %v2667, 1
    %v2672 = vrot.slane %v2668, 1
    %2675 = vmatprep.subr.bf16.mxu0 %v938
    %2676 = vmatpush1.bf16.msra.mxu0 %v937
    %2677 = vmatprep.subr.bf16.mxu0 %v946
    %2678 = vmatpush1.bf16.msra.mxu0 %v945
    %2679 = vmatprep.subr.bf16.mxu0 %v954
    %2680 = vmatpush1.bf16.msra.mxu0 %v953
    %2681 = vmatprep.subr.bf16.mxu0 %v962
    %2682 = vmatpush1.bf16.msra.mxu0 %v961
    %2683 = vmatprep.subr.bf16.mxu0 %v970
    %2684 = vmatpush1.bf16.msra.mxu0 %v969
    %2685 = vmatprep.subr.bf16.mxu0 %v978
    %2686 = vmatpush1.bf16.msra.mxu0 %v977
    %2687 = vmatprep.subr.bf16.mxu0 %v986
    %2688 = vmatpush1.bf16.msra.mxu0 %v985
    %2689 = vmatprep.subr.bf16.mxu0 %v994
    %2690 = vmatpush1.bf16.msra.mxu0 %v993
    %2691 = vmatprep.subr.bf16.mxu0 %v1002
    %2692 = vmatpush1.bf16.msra.mxu0 %v1001
    %2693 = vmatprep.subr.bf16.mxu0 %v1010
    %2694 = vmatpush1.bf16.msra.mxu0 %v1009
    %2695 = vmatprep.subr.bf16.mxu0 %v1018
    %2696 = vmatpush1.bf16.msra.mxu0 %v1017
    %2697 = vmatprep.subr.bf16.mxu0 %v1026
    %2698 = vmatpush1.bf16.msra.mxu0 %v1025
    %2699 = vmatprep.subr.bf16.mxu0 %v1034
    %2700 = vmatpush1.bf16.msra.mxu0 %v1033
    %2701 = vmatprep.subr.bf16.mxu0 %v1042
    %2702 = vmatpush1.bf16.msra.mxu0 %v1041
    %2703 = vmatprep.subr.bf16.mxu0 %v1050
    %2704 = vmatpush1.bf16.msra.mxu0 %v1049
    %2705 = vmatprep.subr.bf16.mxu0 %v1058
    %2706 = vmatpush1.bf16.msra.mxu0 %v1057
    %2707 = vmatprep.mubr.bf16.mxu0 %v2672
    %2708 = vmatmul.mubr.bf16.gmra.mrb[0].mxu0 %v2671
    %v2709 = vpop.f32.mrb[0].mxu0
    %v2710 = vadd.f32 0.0, %v2709
    %v2711 = vpop.f32.mrb[0].mxu0
    %v2712 = vadd.f32 0.0, %v2711
    %v2713 = vpop.f32.mrb[0].mxu0
    %v2714 = vpop.f32.mrb[0].mxu0
    %2715 = vdwg.mxu0
    %2716 = vmatprep.subr.bf16.mxu0 %v940
    %2717 = vmatpush1.bf16.msra.mxu0 %v939
    %2718 = vmatprep.subr.bf16.mxu0 %v948
    %2719 = vmatpush1.bf16.msra.mxu0 %v947
    %2720 = vmatprep.subr.bf16.mxu0 %v956
    %2721 = vmatpush1.bf16.msra.mxu0 %v955
    %2722 = vmatprep.subr.bf16.mxu0 %v964
    %2723 = vmatpush1.bf16.msra.mxu0 %v963
    %2724 = vmatprep.subr.bf16.mxu0 %v972
    %2725 = vmatpush1.bf16.msra.mxu0 %v971
    %2726 = vmatprep.subr.bf16.mxu0 %v980
    %2727 = vmatpush1.bf16.msra.mxu0 %v979
    %2728 = vmatprep.subr.bf16.mxu0 %v988
    %2729 = vmatpush1.bf16.msra.mxu0 %v987
    %2730 = vmatprep.subr.bf16.mxu0 %v996
    %2731 = vmatpush1.bf16.msra.mxu0 %v995
    %2732 = vmatprep.subr.bf16.mxu0 %v1004
    %2733 = vmatpush1.bf16.msra.mxu0 %v1003
    %2734 = vmatprep.subr.bf16.mxu0 %v1012
    %2735 = vmatpush1.bf16.msra.mxu0 %v1011
    %2736 = vmatprep.subr.bf16.mxu0 %v1020
    %2737 = vmatpush1.bf16.msra.mxu0 %v1019
    %2738 = vmatprep.subr.bf16.mxu0 %v1028
    %2739 = vmatpush1.bf16.msra.mxu0 %v1027
    %2740 = vmatprep.subr.bf16.mxu0 %v1036
    %2741 = vmatpush1.bf16.msra.mxu0 %v1035
    %2742 = vmatprep.subr.bf16.mxu0 %v1044
    %2743 = vmatpush1.bf16.msra.mxu0 %v1043
    %2744 = vmatprep.subr.bf16.mxu0 %v1052
    %2745 = vmatpush1.bf16.msra.mxu0 %v1051
    %2746 = vmatprep.subr.bf16.mxu0 %v1060
    %2747 = vmatpush1.bf16.msra.mxu0 %v1059
    %2748 = vmatprep.mubr.bf16.mxu0 %v2672
    %2749 = vmatmul.mubr.bf16.gmra.mrb[0].mxu0 %v2671
    %v2750 = vpop.f32.mrb[0].mxu0
    %v2751 = vadd.f32 0.0, %v2750
    %v2752 = vpop.f32.mrb[0].mxu0
    %v2753 = vadd.f32 0.0, %v2752
    %v2754 = vpop.f32.mrb[0].mxu0
    %v2755 = vpop.f32.mrb[0].mxu0
    %2756 = vdwg.mxu0
    %2757 = vmatprep.subr.bf16.mxu0 %v942
    %2758 = vmatpush1.bf16.msra.mxu0 %v941
    %2759 = vmatprep.subr.bf16.mxu0 %v950
    %2760 = vmatpush1.bf16.msra.mxu0 %v949
    %2761 = vmatprep.subr.bf16.mxu0 %v958
    %2762 = vmatpush1.bf16.msra.mxu0 %v957
    %2763 = vmatprep.subr.bf16.mxu0 %v966
    %2764 = vmatpush1.bf16.msra.mxu0 %v965
    %2765 = vmatprep.subr.bf16.mxu0 %v974
    %2766 = vmatpush1.bf16.msra.mxu0 %v973
    %2767 = vmatprep.subr.bf16.mxu0 %v982
    %2768 = vmatpush1.bf16.msra.mxu0 %v981
    %2769 = vmatprep.subr.bf16.mxu0 %v990
    %2770 = vmatpush1.bf16.msra.mxu0 %v989
    %2771 = vmatprep.subr.bf16.mxu0 %v998
    %2772 = vmatpush1.bf16.msra.mxu0 %v997
    %2773 = vmatprep.subr.bf16.mxu0 %v1006
    %2774 = vmatpush1.bf16.msra.mxu0 %v1005
    %2775 = vmatprep.subr.bf16.mxu0 %v1014
    %2776 = vmatpush1.bf16.msra.mxu0 %v1013
    %2777 = vmatprep.subr.bf16.mxu0 %v1022
    %2778 = vmatpush1.bf16.msra.mxu0 %v1021
    %2779 = vmatprep.subr.bf16.mxu0 %v1030
    %2780 = vmatpush1.bf16.msra.mxu0 %v1029
    %2781 = vmatprep.subr.bf16.mxu0 %v1038
    %2782 = vmatpush1.bf16.msra.mxu0 %v1037
    %2783 = vmatprep.subr.bf16.mxu0 %v1046
    %2784 = vmatpush1.bf16.msra.mxu0 %v1045
    %2785 = vmatprep.subr.bf16.mxu0 %v1054
    %2786 = vmatpush1.bf16.msra.mxu0 %v1053
    %2787 = vmatprep.subr.bf16.mxu0 %v1062
    %2788 = vmatpush1.bf16.msra.mxu0 %v1061
    %2789 = vmatprep.mubr.bf16.mxu0 %v2672
    %2790 = vmatmul.mubr.bf16.gmra.mrb[0].mxu0 %v2671
    %v2791 = vpop.f32.mrb[0].mxu0
    %v2792 = vadd.f32 0.0, %v2791
    %v2793 = vpop.f32.mrb[0].mxu0
    %v2794 = vadd.f32 0.0, %v2793
    %v2795 = vpop.f32.mrb[0].mxu0
    %v2796 = vpop.f32.mrb[0].mxu0
    %2797 = vdwg.mxu0
    %2798 = vmatprep.subr.bf16.mxu0 %v944
    %2799 = vmatpush1.bf16.msra.mxu0 %v943
    %2800 = vmatprep.subr.bf16.mxu0 %v952
    %2801 = vmatpush1.bf16.msra.mxu0 %v951
    %2802 = vmatprep.subr.bf16.mxu0 %v960
    %2803 = vmatpush1.bf16.msra.mxu0 %v959
    %2804 = vmatprep.subr.bf16.mxu0 %v968
    %2805 = vmatpush1.bf16.msra.mxu0 %v967
    %2806 = vmatprep.subr.bf16.mxu0 %v976
    %2807 = vmatpush1.bf16.msra.mxu0 %v975
    %2808 = vmatprep.subr.bf16.mxu0 %v984
    %2809 = vmatpush1.bf16.msra.mxu0 %v983
    %2810 = vmatprep.subr.bf16.mxu0 %v992
    %2811 = vmatpush1.bf16.msra.mxu0 %v991
    %2812 = vmatprep.subr.bf16.mxu0 %v1000
    %2813 = vmatpush1.bf16.msra.mxu0 %v999
    %2814 = vmatprep.subr.bf16.mxu0 %v1008
    %2815 = vmatpush1.bf16.msra.mxu0 %v1007
    %2816 = vmatprep.subr.bf16.mxu0 %v1016
    %2817 = vmatpush1.bf16.msra.mxu0 %v1015
    %2818 = vmatprep.subr.bf16.mxu0 %v1024
    %2819 = vmatpush1.bf16.msra.mxu0 %v1023
    %2820 = vmatprep.subr.bf16.mxu0 %v1032
    %2821 = vmatpush1.bf16.msra.mxu0 %v1031
    %2822 = vmatprep.subr.bf16.mxu0 %v1040
    %2823 = vmatpush1.bf16.msra.mxu0 %v1039
    %2824 = vmatprep.subr.bf16.mxu0 %v1048
    %2825 = vmatpush1.bf16.msra.mxu0 %v1047
    %2826 = vmatprep.subr.bf16.mxu0 %v1056
    %2827 = vmatpush1.bf16.msra.mxu0 %v1055
    %2828 = vmatprep.subr.bf16.mxu0 %v1064
    %2829 = vmatpush1.bf16.msra.mxu0 %v1063
    %2830 = vmatprep.mubr.bf16.mxu0 %v2672
    %2831 = vmatmul.mubr.bf16.gmra.mrb[0].mxu0 %v2671
    %v2832 = vpop.f32.mrb[0].mxu0
    %v2833 = vadd.f32 0.0, %v2832
    %v2834 = vpop.f32.mrb[0].mxu0
    %v2835 = vadd.f32 0.0, %v2834
    %v2836 = vpop.f32.mrb[0].mxu0
    %v2837 = vpop.f32.mrb[0].mxu0
    %2838 = vdwg.mxu0
    %v2847 = vrot.slane %v2710, 4
    %v2848 = vrot.slane %v2712, 4
    %v2849 = vrot.slane %v2751, 4
    %v2850 = vrot.slane %v2753, 4
    %v2851 = vrot.slane %v2792, 4
    %v2852 = vrot.slane %v2794, 4
    %v2853 = vrot.slane %v2833, 4
    %v2854 = vrot.slane %v2835, 4
    %v2863 = vadd.f32 %v190, %v2847
    %v2864 = vadd.f32 %v192, %v2848
    %v2865 = vadd.f32 %v267, %v2849
    %v2866 = vadd.f32 %v269, %v2850
    %v2867 = vadd.f32 %v344, %v2851
    %v2868 = vadd.f32 %v346, %v2852
    %v2869 = vadd.f32 %v421, %v2853
    %v2870 = vadd.f32 %v423, %v2854
    %v2871 = vxor.u32 %v2863, 2147483648
    %v2872 = vxor.u32 %v2864, 2147483648
    %v2873 = vxor.u32 %v2865, 2147483648
    %v2874 = vxor.u32 %v2866, 2147483648
    %v2875 = vxor.u32 %v2867, 2147483648
    %v2876 = vxor.u32 %v2868, 2147483648
    %v2877 = vmul.f32 %v2871, 1.442695
    %v2878 = vpow.pop %v2877
    %v2879 = vmul.f32 %v2872, 1.442695
    %v2880 = vpow.pop %v2879
    %v2881 = vmul.f32 %v2873, 1.442695
    %v2882 = vpow.pop %v2881
    %v2883 = vmul.f32 %v2874, 1.442695
    %v2884 = vpow.pop %v2883
    %v2885 = vmul.f32 %v2875, 1.442695
    %v2886 = vpow.pop %v2885
    %v2887 = vmul.f32 %v2876, 1.442695
    %v2888 = vpow.pop %v2887
    %v2889 = vadd.f32 %v2878, 1.0
    %v2890 = vadd.f32 %v2880, 1.0
    %v2891 = vadd.f32 %v2882, 1.0
    %v2892 = vadd.f32 %v2884, 1.0
    %v2893 = vadd.f32 %v2886, 1.0
    %v2894 = vadd.f32 %v2888, 1.0
    %v2895 = vrcp.pop %v2889
    %v2896 = vmul.f32 1.0, %v2895
    %v2897 = vrcp.pop %v2890
    %v2898 = vmul.f32 1.0, %v2897
    %v2899 = vrcp.pop %v2891
    %v2900 = vmul.f32 1.0, %v2899
    %v2901 = vrcp.pop %v2892
    %v2902 = vmul.f32 1.0, %v2901
    %v2903 = vrcp.pop %v2893
    %v2904 = vmul.f32 1.0, %v2903
    %v2905 = vrcp.pop %v2894
    %v2906 = vmul.f32 1.0, %v2905
    %v2907 = vtanh.pop %v2869
    %v2908 = vtanh.pop %v2870
    %v2911 = vrot.slane %v2661, 6
    %v2912 = vrot.slane %v2662, 6
    %v2915 = vmul.f32 %v2900, %v2911
    %v2916 = vmul.f32 %v2902, %v2912
    %v2917 = vmul.f32 %v2896, %v2907
    %v2918 = vmul.f32 %v2898, %v2908
    %v2919 = vadd.f32 %v2915, %v2917
    %v2920 = vadd.f32 %v2916, %v2918
    %v2921 = vtanh.pop %v2919
    %v2922 = vtanh.pop %v2920
    %v2923 = vmul.f32 %v2904, %v2921
    %v2924 = vmul.f32 %v2906, %v2922
    %v2925 = vpack.c.bf16 %v2923, %v2923
    %v2926 = vpack.c.bf16 %v2924, %v2924
    %v2929 = vrot.slane %v2925, 2
    %v2930 = vrot.slane %v2926, 2
    %2933 = vmatprep.subr.bf16.mxu0 %v938
    %2934 = vmatpush1.bf16.msra.mxu0 %v937
    %2935 = vmatprep.subr.bf16.mxu0 %v946
    %2936 = vmatpush1.bf16.msra.mxu0 %v945
    %2937 = vmatprep.subr.bf16.mxu0 %v954
    %2938 = vmatpush1.bf16.msra.mxu0 %v953
    %2939 = vmatprep.subr.bf16.mxu0 %v962
    %2940 = vmatpush1.bf16.msra.mxu0 %v961
    %2941 = vmatprep.subr.bf16.mxu0 %v970
    %2942 = vmatpush1.bf16.msra.mxu0 %v969
    %2943 = vmatprep.subr.bf16.mxu0 %v978
    %2944 = vmatpush1.bf16.msra.mxu0 %v977
    %2945 = vmatprep.subr.bf16.mxu0 %v986
    %2946 = vmatpush1.bf16.msra.mxu0 %v985
    %2947 = vmatprep.subr.bf16.mxu0 %v994
    %2948 = vmatpush1.bf16.msra.mxu0 %v993
    %2949 = vmatprep.subr.bf16.mxu0 %v1002
    %2950 = vmatpush1.bf16.msra.mxu0 %v1001
    %2951 = vmatprep.subr.bf16.mxu0 %v1010
    %2952 = vmatpush1.bf16.msra.mxu0 %v1009
    %2953 = vmatprep.subr.bf16.mxu0 %v1018
    %2954 = vmatpush1.bf16.msra.mxu0 %v1017
    %2955 = vmatprep.subr.bf16.mxu0 %v1026
    %2956 = vmatpush1.bf16.msra.mxu0 %v1025
    %2957 = vmatprep.subr.bf16.mxu0 %v1034
    %2958 = vmatpush1.bf16.msra.mxu0 %v1033
    %2959 = vmatprep.subr.bf16.mxu0 %v1042
    %2960 = vmatpush1.bf16.msra.mxu0 %v1041
    %2961 = vmatprep.subr.bf16.mxu0 %v1050
    %2962 = vmatpush1.bf16.msra.mxu0 %v1049
    %2963 = vmatprep.subr.bf16.mxu0 %v1058
    %2964 = vmatpush1.bf16.msra.mxu0 %v1057
    %2965 = vmatprep.mubr.bf16.mxu0 %v2930
    %2966 = vmatmul.mubr.bf16.gmra.mrb[0].mxu0 %v2929
    %v2967 = vpop.f32.mrb[0].mxu0
    %v2968 = vadd.f32 0.0, %v2967
    %v2969 = vpop.f32.mrb[0].mxu0
    %v2970 = vadd.f32 0.0, %v2969
    %v2971 = vpop.f32.mrb[0].mxu0
    %v2972 = vpop.f32.mrb[0].mxu0
    %2973 = vdwg.mxu0
    %2974 = vmatprep.subr.bf16.mxu0 %v940
    %2975 = vmatpush1.bf16.msra.mxu0 %v939
    %2976 = vmatprep.subr.bf16.mxu0 %v948
    %2977 = vmatpush1.bf16.msra.mxu0 %v947
    %2978 = vmatprep.subr.bf16.mxu0 %v956
    %2979 = vmatpush1.bf16.msra.mxu0 %v955
    %2980 = vmatprep.subr.bf16.mxu0 %v964
    %2981 = vmatpush1.bf16.msra.mxu0 %v963
    %2982 = vmatprep.subr.bf16.mxu0 %v972
    %2983 = vmatpush1.bf16.msra.mxu0 %v971
    %2984 = vmatprep.subr.bf16.mxu0 %v980
    %2985 = vmatpush1.bf16.msra.mxu0 %v979
    %2986 = vmatprep.subr.bf16.mxu0 %v988
    %2987 = vmatpush1.bf16.msra.mxu0 %v987
    %2988 = vmatprep.subr.bf16.mxu0 %v996
    %2989 = vmatpush1.bf16.msra.mxu0 %v995
    %2990 = vmatprep.subr.bf16.mxu0 %v1004
    %2991 = vmatpush1.bf16.msra.mxu0 %v1003
    %2992 = vmatprep.subr.bf16.mxu0 %v1012
    %2993 = vmatpush1.bf16.msra.mxu0 %v1011
    %2994 = vmatprep.subr.bf16.mxu0 %v1020
    %2995 = vmatpush1.bf16.msra.mxu0 %v1019
    %2996 = vmatprep.subr.bf16.mxu0 %v1028
    %2997 = vmatpush1.bf16.msra.mxu0 %v1027
    %2998 = vmatprep.subr.bf16.mxu0 %v1036
    %2999 = vmatpush1.bf16.msra.mxu0 %v1035
    %3000 = vmatprep.subr.bf16.mxu0 %v1044
    %3001 = vmatpush1.bf16.msra.mxu0 %v1043
    %3002 = vmatprep.subr.bf16.mxu0 %v1052
    %3003 = vmatpush1.bf16.msra.mxu0 %v1051
    %3004 = vmatprep.subr.bf16.mxu0 %v1060
    %3005 = vmatpush1.bf16.msra.mxu0 %v1059
    %3006 = vmatprep.mubr.bf16.mxu0 %v2930
    %3007 = vmatmul.mubr.bf16.gmra.mrb[0].mxu0 %v2929
    %v3008 = vpop.f32.mrb[0].mxu0
    %v3009 = vadd.f32 0.0, %v3008
    %v3010 = vpop.f32.mrb[0].mxu0
    %v3011 = vadd.f32 0.0, %v3010
    %v3012 = vpop.f32.mrb[0].mxu0
    %v3013 = vpop.f32.mrb[0].mxu0
    %3014 = vdwg.mxu0
    %3015 = vmatprep.subr.bf16.mxu0 %v942
    %3016 = vmatpush1.bf16.msra.mxu0 %v941
    %3017 = vmatprep.subr.bf16.mxu0 %v950
    %3018 = vmatpush1.bf16.msra.mxu0 %v949
    %3019 = vmatprep.subr.bf16.mxu0 %v958
    %3020 = vmatpush1.bf16.msra.mxu0 %v957
    %3021 = vmatprep.subr.bf16.mxu0 %v966
    %3022 = vmatpush1.bf16.msra.mxu0 %v965
    %3023 = vmatprep.subr.bf16.mxu0 %v974
    %3024 = vmatpush1.bf16.msra.mxu0 %v973
    %3025 = vmatprep.subr.bf16.mxu0 %v982
    %3026 = vmatpush1.bf16.msra.mxu0 %v981
    %3027 = vmatprep.subr.bf16.mxu0 %v990
    %3028 = vmatpush1.bf16.msra.mxu0 %v989
    %3029 = vmatprep.subr.bf16.mxu0 %v998
    %3030 = vmatpush1.bf16.msra.mxu0 %v997
    %3031 = vmatprep.subr.bf16.mxu0 %v1006
    %3032 = vmatpush1.bf16.msra.mxu0 %v1005
    %3033 = vmatprep.subr.bf16.mxu0 %v1014
    %3034 = vmatpush1.bf16.msra.mxu0 %v1013
    %3035 = vmatprep.subr.bf16.mxu0 %v1022
    %3036 = vmatpush1.bf16.msra.mxu0 %v1021
    %3037 = vmatprep.subr.bf16.mxu0 %v1030
    %3038 = vmatpush1.bf16.msra.mxu0 %v1029
    %3039 = vmatprep.subr.bf16.mxu0 %v1038
    %3040 = vmatpush1.bf16.msra.mxu0 %v1037
    %3041 = vmatprep.subr.bf16.mxu0 %v1046
    %3042 = vmatpush1.bf16.msra.mxu0 %v1045
    %3043 = vmatprep.subr.bf16.mxu0 %v1054
    %3044 = vmatpush1.bf16.msra.mxu0 %v1053
    %3045 = vmatprep.subr.bf16.mxu0 %v1062
    %3046 = vmatpush1.bf16.msra.mxu0 %v1061
    %3047 = vmatprep.mubr.bf16.mxu0 %v2930
    %3048 = vmatmul.mubr.bf16.gmra.mrb[0].mxu0 %v2929
    %v3049 = vpop.f32.mrb[0].mxu0
    %v3050 = vadd.f32 0.0, %v3049
    %v3051 = vpop.f32.mrb[0].mxu0
    %v3052 = vadd.f32 0.0, %v3051
    %v3053 = vpop.f32.mrb[0].mxu0
    %v3054 = vpop.f32.mrb[0].mxu0
    %3055 = vdwg.mxu0
    %3056 = vmatprep.subr.bf16.mxu0 %v944
    %3057 = vmatpush1.bf16.msra.mxu0 %v943
    %3058 = vmatprep.subr.bf16.mxu0 %v952
    %3059 = vmatpush1.bf16.msra.mxu0 %v951
    %3060 = vmatprep.subr.bf16.mxu0 %v960
    %3061 = vmatpush1.bf16.msra.mxu0 %v959
    %3062 = vmatprep.subr.bf16.mxu0 %v968
    %3063 = vmatpush1.bf16.msra.mxu0 %v967
    %3064 = vmatprep.subr.bf16.mxu0 %v976
    %3065 = vmatpush1.bf16.msra.mxu0 %v975
    %3066 = vmatprep.subr.bf16.mxu0 %v984
    %3067 = vmatpush1.bf16.msra.mxu0 %v983
    %3068 = vmatprep.subr.bf16.mxu0 %v992
    %3069 = vmatpush1.bf16.msra.mxu0 %v991
    %3070 = vmatprep.subr.bf16.mxu0 %v1000
    %3071 = vmatpush1.bf16.msra.mxu0 %v999
    %3072 = vmatprep.subr.bf16.mxu0 %v1008
    %3073 = vmatpush1.bf16.msra.mxu0 %v1007
    %3074 = vmatprep.subr.bf16.mxu0 %v1016
    %3075 = vmatpush1.bf16.msra.mxu0 %v1015
    %3076 = vmatprep.subr.bf16.mxu0 %v1024
    %3077 = vmatpush1.bf16.msra.mxu0 %v1023
    %3078 = vmatprep.subr.bf16.mxu0 %v1032
    %3079 = vmatpush1.bf16.msra.mxu0 %v1031
    %3080 = vmatprep.subr.bf16.mxu0 %v1040
    %3081 = vmatpush1.bf16.msra.mxu0 %v1039
    %3082 = vmatprep.subr.bf16.mxu0 %v1048
    %3083 = vmatpush1.bf16.msra.mxu0 %v1047
    %3084 = vmatprep.subr.bf16.mxu0 %v1056
    %3085 = vmatpush1.bf16.msra.mxu0 %v1055
    %3086 = vmatprep.subr.bf16.mxu0 %v1064
    %3087 = vmatpush1.bf16.msra.mxu0 %v1063
    %3088 = vmatprep.mubr.bf16.mxu0 %v2930
    %3089 = vmatmul.mubr.bf16.gmra.mrb[0].mxu0 %v2929
    %v3090 = vpop.f32.mrb[0].mxu0
    %v3091 = vadd.f32 0.0, %v3090
    %v3092 = vpop.f32.mrb[0].mxu0
    %v3093 = vadd.f32 0.0, %v3092
    %v3094 = vpop.f32.mrb[0].mxu0
    %v3095 = vpop.f32.mrb[0].mxu0
    %3096 = vdwg.mxu0
    %v3105 = vrot.slane %v2968, 2
    %v3106 = vrot.slane %v2970, 2
    %v3107 = vrot.slane %v3009, 2
    %v3108 = vrot.slane %v3011, 2
    %v3109 = vrot.slane %v3050, 2
    %v3110 = vrot.slane %v3052, 2
    %v3111 = vrot.slane %v3091, 2
    %v3112 = vrot.slane %v3093, 2
    %v3121 = vadd.f32 %v190, %v3105
    %v3122 = vadd.f32 %v192, %v3106
    %v3123 = vadd.f32 %v267, %v3107
    %v3124 = vadd.f32 %v269, %v3108
    %v3125 = vadd.f32 %v344, %v3109
    %v3126 = vadd.f32 %v346, %v3110
    %v3127 = vadd.f32 %v421, %v3111
    %v3128 = vadd.f32 %v423, %v3112
    %v3129 = vxor.u32 %v3121, 2147483648
    %v3130 = vxor.u32 %v3122, 2147483648
    %v3131 = vxor.u32 %v3123, 2147483648
    %v3132 = vxor.u32 %v3124, 2147483648
    %v3133 = vxor.u32 %v3125, 2147483648
    %v3134 = vxor.u32 %v3126, 2147483648
    %v3135 = vmul.f32 %v3129, 1.442695
    %v3136 = vpow.pop %v3135
    %v3137 = vmul.f32 %v3130, 1.442695
    %v3138 = vpow.pop %v3137
    %v3139 = vmul.f32 %v3131, 1.442695
    %v3140 = vpow.pop %v3139
    %v3141 = vmul.f32 %v3132, 1.442695
    %v3142 = vpow.pop %v3141
    %v3143 = vmul.f32 %v3133, 1.442695
    %v3144 = vpow.pop %v3143
    %v3145 = vmul.f32 %v3134, 1.442695
    %v3146 = vpow.pop %v3145
    %v3147 = vadd.f32 %v3136, 1.0
    %v3148 = vadd.f32 %v3138, 1.0
    %v3149 = vadd.f32 %v3140, 1.0
    %v3150 = vadd.f32 %v3142, 1.0
    %v3151 = vadd.f32 %v3144, 1.0
    %v3152 = vadd.f32 %v3146, 1.0
    %v3153 = vrcp.pop %v3147
    %v3154 = vmul.f32 1.0, %v3153
    %v3155 = vrcp.pop %v3148
    %v3156 = vmul.f32 1.0, %v3155
    %v3157 = vrcp.pop %v3149
    %v3158 = vmul.f32 1.0, %v3157
    %v3159 = vrcp.pop %v3150
    %v3160 = vmul.f32 1.0, %v3159
    %v3161 = vrcp.pop %v3151
    %v3162 = vmul.f32 1.0, %v3161
    %v3163 = vrcp.pop %v3152
    %v3164 = vmul.f32 1.0, %v3163
    %v3165 = vtanh.pop %v3127
    %v3166 = vtanh.pop %v3128
    %v3169 = vrot.slane %v2919, 6
    %v3170 = vrot.slane %v2920, 6
    %v3173 = vmul.f32 %v3158, %v3169
    %v3174 = vmul.f32 %v3160, %v3170
    %v3175 = vmul.f32 %v3154, %v3165
    %v3176 = vmul.f32 %v3156, %v3166
    %v3177 = vadd.f32 %v3173, %v3175
    %v3178 = vadd.f32 %v3174, %v3176
    %v3179 = vtanh.pop %v3177
    %v3180 = vtanh.pop %v3178
    %v3181 = vmul.f32 %v3162, %v3179
    %v3182 = vmul.f32 %v3164, %v3180
    %v3183 = vld [vmem:[%s4] sm:$0xff]
    %v3184 = vld [vmem:[%s4 + $0x8] sm:$0xff]
    %v3185 = vld [vmem:[%s4 + $0x10] sm:$0xff]
    %v3186 = vld [vmem:[%s4 + $0x18] sm:$0xff]
    %v3187 = vld [vmem:[%s4 + $0x20] sm:$0xff]
    %v3188 = vld [vmem:[%s4 + $0x28] sm:$0xff]
    %v3189 = vld [vmem:[%s4 + $0x30] sm:$0xff]
    %v3190 = vld [vmem:[%s4 + $0x38] sm:$0xff]
    %v3191 = vld [vmem:[%s4 + $0x40] sm:$0xff]
    %v3192 = vld [vmem:[%s4 + $0x48] sm:$0xff]
    %v3193 = vld [vmem:[%s4 + $0x50] sm:$0xff]
    %v3194 = vld [vmem:[%s4 + $0x58] sm:$0xff]
    %v3195 = vld [vmem:[%s4 + $0x60] sm:$0xff]
    %v3196 = vld [vmem:[%s4 + $0x68] sm:$0xff]
    %v3197 = vld [vmem:[%s4 + $0x70] sm:$0xff]
    %v3198 = vld [vmem:[%s4 + $0x78] sm:$0xff]
    %v3199 = vld [vmem:[%s4 + $0x80] sm:$0xff]
    %v3200 = vld [vmem:[%s4 + $0x88] sm:$0xff]
    %v3201 = vld [vmem:[%s4 + $0x90] sm:$0xff]
    %v3202 = vld [vmem:[%s4 + $0x98] sm:$0xff]
    %v3203 = vld [vmem:[%s4 + $0xa0] sm:$0xff]
    %v3204 = vld [vmem:[%s4 + $0xa8] sm:$0xff]
    %v3205 = vld [vmem:[%s4 + $0xb0] sm:$0xff]
    %v3206 = vld [vmem:[%s4 + $0xb8] sm:$0xff]
    %v3207 = vld [vmem:[%s4 + $0xc0] sm:$0xff]
    %v3208 = vld [vmem:[%s4 + $0xc8] sm:$0xff]
    %v3209 = vld [vmem:[%s4 + $0xd0] sm:$0xff]
    %v3210 = vld [vmem:[%s4 + $0xd8] sm:$0xff]
    %v3211 = vld [vmem:[%s4 + $0xe0] sm:$0xff]
    %v3212 = vld [vmem:[%s4 + $0xe8] sm:$0xff]
    %v3213 = vld [vmem:[%s4 + $0xf0] sm:$0xff]
    %v3214 = vld [vmem:[%s4 + $0xf8] sm:$0xff]
    %v3215 = vld [vmem:[%s5] sm:$0x1]
    %v3217 = vlaneseq
    %v3218 = vshrl.u32 %v3217, 7
    %v3219 = vsub.s32 0, %v3218
    %v3220 = vrot.slane %v3215, %v3219
    %v3224 = vrot.slane %v3181, 6
    %v3225 = vrot.slane %v3182, 6
    %3228 = vmatprep.subr.mxu0 0.0
    %3229 = vmatpush1.msra.mxu0 %v3183
    %3230 = vmatprep.subr.mxu0 0.0
    %3231 = vmatpush1.msra.mxu0 %v3184
    %3232 = vmatprep.subr.mxu0 0.0
    %3233 = vmatpush1.msra.mxu0 %v3185
    %3234 = vmatprep.subr.mxu0 0.0
    %3235 = vmatpush1.msra.mxu0 %v3186
    %3236 = vmatprep.subr.mxu0 0.0
    %3237 = vmatpush1.msra.mxu0 %v3187
    %3238 = vmatprep.subr.mxu0 0.0
    %3239 = vmatpush1.msra.mxu0 %v3188
    %3240 = vmatprep.subr.mxu0 0.0
    %3241 = vmatpush1.msra.mxu0 %v3189
    %3242 = vmatprep.subr.mxu0 0.0
    %3243 = vmatpush1.msra.mxu0 %v3190
    %3244 = vmatprep.subr.mxu0 0.0
    %3245 = vmatpush1.msra.mxu0 %v3191
    %3246 = vmatprep.subr.mxu0 0.0
    %3247 = vmatpush1.msra.mxu0 %v3192
    %3248 = vmatprep.subr.mxu0 0.0
    %3249 = vmatpush1.msra.mxu0 %v3193
    %3250 = vmatprep.subr.mxu0 0.0
    %3251 = vmatpush1.msra.mxu0 %v3194
    %3252 = vmatprep.subr.mxu0 0.0
    %3253 = vmatpush1.msra.mxu0 %v3195
    %3254 = vmatprep.subr.mxu0 0.0
    %3255 = vmatpush1.msra.mxu0 %v3196
    %3256 = vmatprep.subr.mxu0 0.0
    %3257 = vmatpush1.msra.mxu0 %v3197
    %3258 = vmatprep.subr.mxu0 0.0
    %3259 = vmatpush1.msra.mxu0 %v3198
    %3260 = vmatprep.subr.mxu0 0.0
    %3261 = vmatpush1.msra.mxu0 %v3199
    %3262 = vmatprep.subr.mxu0 0.0
    %3263 = vmatpush1.msra.mxu0 %v3200
    %3264 = vmatprep.subr.mxu0 0.0
    %3265 = vmatpush1.msra.mxu0 %v3201
    %3266 = vmatprep.subr.mxu0 0.0
    %3267 = vmatpush1.msra.mxu0 %v3202
    %3268 = vmatprep.subr.mxu0 0.0
    %3269 = vmatpush1.msra.mxu0 %v3203
    %3270 = vmatprep.subr.mxu0 0.0
    %3271 = vmatpush1.msra.mxu0 %v3204
    %3272 = vmatprep.subr.mxu0 0.0
    %3273 = vmatpush1.msra.mxu0 %v3205
    %3274 = vmatprep.subr.mxu0 0.0
    %3275 = vmatpush1.msra.mxu0 %v3206
    %3276 = vmatprep.subr.mxu0 0.0
    %3277 = vmatpush1.msra.mxu0 %v3207
    %3278 = vmatprep.subr.mxu0 0.0
    %3279 = vmatpush1.msra.mxu0 %v3208
    %3280 = vmatprep.subr.mxu0 0.0
    %3281 = vmatpush1.msra.mxu0 %v3209
    %3282 = vmatprep.subr.mxu0 0.0
    %3283 = vmatpush1.msra.mxu0 %v3210
    %3284 = vmatprep.subr.mxu0 0.0
    %3285 = vmatpush1.msra.mxu0 %v3211
    %3286 = vmatprep.subr.mxu0 0.0
    %3287 = vmatpush1.msra.mxu0 %v3212
    %3288 = vmatprep.subr.mxu0 0.0
    %3289 = vmatpush1.msra.mxu0 %v3213
    %3290 = vmatprep.subr.mxu0 0.0
    %3291 = vmatpush1.msra.mxu0 %v3214
    %3292 = vmatprep.mubr.f32.mxu0 %v3225
    %3293 = vmatmul.mubr.f32.gmra.mrb[0].mxu0 %v3224
    %v3294 = vpop.f32.mrb[0].mxu0
    %v3295 = vadd.f32 %v3220, %v3294
    %v3296 = vpop.f32.mrb[0].mxu0
    %3297 = vdwg.mxu0
    %vm3298 = vcmask 33792
    %3299 = vst.msk [vmem:[#allocation2] sm:$0x3] %vm3298, %v3295
    // Predicated region
    $region26: #{lstm_forward.1} parent=1 // pred_check
      _
    $region27: #{lstm_forward.1} parent=1 // pred_check_branch
      %3301 = sbr.rel (0) target = $region29
    $region28: #{lstm_forward.1} parent=1 // pred_region
      %s3303 = ssub.s32 32, 32
      %3304 = vsyncadd [#allocation3], %s3303
      %s3306 = sshll.u32 [#allocation2], 4
      %s3307 = int_to_ptr.vmem [resolvable:$true] %s3306
      %3309 = dma.vmem_to_hbm [thread:$0]  %s3307, 32, %s6, [#allocation3]
    $region29: #{lstm_forward.1} parent=1 // pred_fallthru
      _
    // Predicated region
    $region30: #{lstm_forward.1} parent=1 // pred_check
      _
    $region31: #{lstm_forward.1} parent=1 // pred_check_branch
      %3311 = sbr.rel (0) target = $region33
    $region32: #{lstm_forward.1} parent=1 // pred_region
      %3312 = dma.done [#allocation3], 32
    $region33: #{lstm_forward.1} parent=1 // pred_fallthru
      _
    %3313 = vsyncpa [#allocation3], 1

</llo_original>
